<compile_context>
chip_gen: v6e
topology: v6e:2x2x1
jax: 0.10.0
libtpu: 0.0.40
codegen_flags: <defaults>
</compile_context>

<pallas_src>
import jax
import jax.numpy as jnp
from jax import lax
from jax.experimental import pallas as pl
from jax.experimental.pallas import tpu as pltpu

# ----- static configuration -----
B = 4          # total batch
NBLK = 2       # grid blocks (>=2 so v7x's 2nd TensorCore is used)
BB = B // NBLK  # samples per grid step
POS_NUM = 2    # number of body positions
T = 8          # time steps (conv "height")
GROUP_W = 30   # spectral width per sensor group (conv pipeline ends at width 1)
NSENS = 2      # grav, gyro  (input_channel // POS_NUM == 6 case)
S = POS_NUM * NSENS          # 4 sensor groups
FC = 8         # feature_channel
HID = 32       # hidden_size
NCLS = 6       # num_class
K1, STR1 = 18, 6             # conv1 kernel / stride along width
NW = 3                       # conv1 output width
C1 = S * NW * FC             # 96  : fused conv1 output width
C2 = S * FC                  # 32  : fused conv2 / conv3 output width
PK_RAW = S * NW * K1         # 216 : lane-dense im2col width
PK = 256                     # padded to 2 full 128-lane vregs
RB = T * BB                  # rows per grid block (time-major: row = t*BB + b)
LANE = 128


# -------------------- weight-slab layout (static, 8-row aligned) --------------------
def _layout(defs):
    off, r = {}, 0
    for name, h in defs:
        off[name] = r
        r += ((h + 7) // 8) * 8
    return off, r


# Slab 1: conv pipeline + sensor attention + GRU layer-0 input projection.
SLAB1_DEF = [("w1", PK), ("b1", 1), ("w2", LANE), ("b2", 1), ("w3", LANE), ("b3", 1),
             ("wsa", LANE), ("bsa", 1), ("sel_e", LANE), ("wih0", LANE), ("bih0", 1)]
# Slab 2: GRU recurrence + time attention + fused output head.
SLAB2_DEF = [("whh0", HID), ("bhh0", 1), ("w1cat", 2 * HID), ("b1cat", 1),
             ("wt1", HID), ("bt1", 1), ("wt2", LANE), ("bt2", 1),
             ("ppool", BB), ("wout", HID), ("bout", 1)]
O1, SLAB1_ROWS = _layout(SLAB1_DEF)
O2, SLAB2_ROWS = _layout(SLAB2_DEF)


# -------------------- Pallas kernel --------------------
def attnsense_kernel(patches_ref, s1_ref, s2_ref, out_ref):
    f32 = jnp.float32

    def ld1(name, rows):
        a = O1[name]
        return s1_ref[a:a + rows, :]

    def ld2(name, rows):
        a = O2[name]
        return s2_ref[a:a + rows, :]

    # ---- fused per-group conv pipeline (block-diagonal matmuls, BN folded) ----
    x = patches_ref[0]                                                     # (RB, 256)
    h1 = jnp.maximum(jnp.dot(x, ld1("w1", PK), preferred_element_type=f32)
                     + ld1("b1", 1), 0.0)                                  # lanes 0:96
    h2 = jnp.maximum(jnp.dot(h1, ld1("w2", LANE), preferred_element_type=f32)
                     + ld1("b2", 1), 0.0)                                  # lanes 0:32
    h3 = jnp.maximum(jnp.dot(h2, ld1("w3", LANE), preferred_element_type=f32)
                     + ld1("b3", 1), 0.0)                                  # lanes 0:32

    # ---- sensor attention: softmax over the S groups ----
    # tanh output is bounded in [-1,1] so max-subtraction is unnecessary.
    e = jnp.tanh(jnp.dot(h3, ld1("wsa", LANE), preferred_element_type=f32)
                 + ld1("bsa", 1))                                          # lanes 0:S valid
    exp_e = jnp.exp(e)
    smask = (lax.broadcasted_iota(jnp.int32, (1, LANE), 1) < S).astype(f32)
    denom = jnp.sum(exp_e * smask, axis=-1, keepdims=True)
    p = exp_e / denom                      # exact reciprocal (correctness feedback)
    p_lanes = jnp.dot(p, ld1("sel_e", LANE), preferred_element_type=f32)   # lanes 0:32
    xw = h3 * p_lanes                                                      # weighted feats

    # GRU layer-0 input projection hoisted out of the recurrence
    # (group-sum sel_r pre-folded into wih0).  Columns: [r | z | n].
    gi0 = jnp.dot(xw, ld1("wih0", LANE), preferred_element_type=f32) + ld1("bih0", 1)

    # ---- 2-layer GRU (PyTorch gate order r, z, n), zero initial hidden ----
    # Loop-invariant weights loaded once (hoisted out of the static unroll).
    whh0 = ld2("whh0", HID)         # (32,128) cols [r | z | n]
    bhh0 = ld2("bhh0", 1)
    w1cat = ld2("w1cat", 2 * HID)   # (64,128) cols [r(i+h) | z(i+h) | n_i | n_h]
    b1cat = ld2("b1cat", 1)

    h0 = jnp.zeros((BB, HID), f32)
    h1s = jnp.zeros((BB, HID), f32)
    outs = []
    for t in range(T):                                      # static unroll (T = 8)
        gi_t = gi0[t * BB:(t + 1) * BB, :]                  # time-major rows
        gh0 = jnp.dot(h0, whh0, preferred_element_type=f32) + bhh0
        r0 = jax.nn.sigmoid(gi_t[:, 0:HID] + gh0[:, 0:HID])
        z0 = jax.nn.sigmoid(gi_t[:, HID:2 * HID] + gh0[:, HID:2 * HID])
        n0 = jnp.tanh(gi_t[:, 2 * HID:3 * HID] + r0 * gh0[:, 2 * HID:3 * HID])
        h0 = (1.0 - z0) * n0 + z0 * h0

        g1 = jnp.dot(jnp.concatenate([h0, h1s], axis=-1), w1cat,
                     preferred_element_type=f32) + b1cat    # one matmul = whole cell
        r1 = jax.nn.sigmoid(g1[:, 0:HID])
        z1 = jax.nn.sigmoid(g1[:, HID:2 * HID])
        n1 = jnp.tanh(g1[:, 2 * HID:3 * HID] + r1 * g1[:, 3 * HID:4 * HID])
        h1s = (1.0 - z1) * n1 + z1 * h1s
        outs.append(h1s)

    out = jnp.concatenate(outs, axis=0)                     # (RB, HID), rows t*BB + b

    # ---- time attention + pooled features + logits (packed, lane-dense) ----
    a1 = jnp.tanh(jnp.dot(out, ld2("wt1", HID), preferred_element_type=f32)
                  + ld2("bt1", 1))                          # lanes 0:64
    e2 = jnp.tanh(jnp.dot(a1, ld2("wt2", LANE), preferred_element_type=f32)
                  + ld2("bt2", 1))                          # lane 0 valid, tanh-bounded
    wexp = jnp.exp(e2[:, 0:1])                              # (RB, 1)
    wexp_b = jnp.broadcast_to(wexp, (RB, HID))
    P = ld2("ppool", BB)[:, 0:RB]                           # (BB, RB) time->sample select
    num = jnp.dot(P, out * wexp_b, preferred_element_type=f32)   # (BB, HID)
    den = jnp.dot(P, wexp_b, preferred_element_type=f32)         # (BB, HID), lanes equal
    pooled = num * pl.reciprocal(den, approx=True)
    # Single fused matmul emits logits (lanes 0:NCLS) and a pooled copy
    # (lanes 2H:3H); one unmasked 128-lane store per block.
    packed = jnp.dot(pooled, ld2("wout", HID), preferred_element_type=f32) + ld2("bout", 1)
    out_ref[0] = packed


# -------------------- wrapper --------------------
@jax.jit
def attnsense_forward(patches_blocks, slab1, slab2):
    grid_spec = pltpu.PrefetchScalarGridSpec(
        num_scalar_prefetch=0,
        grid=(NBLK,),
        in_specs=[pl.BlockSpec((1, RB, PK), lambda nb: (nb, 0, 0)),
                  pl.BlockSpec((SLAB1_ROWS, LANE), lambda nb: (0, 0)),
                  pl.BlockSpec((SLAB2_ROWS, LANE), lambda nb: (0, 0))],
        out_specs=pl.BlockSpec((1, BB, LANE), lambda nb: (nb, 0, 0)),
    )
    packed = pl.pallas_call(
        attnsense_kernel,
        out_shape=jax.ShapeDtypeStruct((NBLK, BB, LANE), jnp.float32),
        grid_spec=grid_spec,
        compiler_params=pltpu.CompilerParams(dimension_semantics=("parallel",)),
    )(patches_blocks, slab1, slab2)
    flat = packed.reshape(B, LANE)
    return flat[:, :NCLS], flat[:, 2 * HID:3 * HID]


# -------------------- parameter init (deterministic, synthetic) --------------------
def _fold_bn(W, b, gamma, beta, mean, var, eps=1e-5):
    scale = gamma / jnp.sqrt(var + eps)
    W_eff = W * scale.reshape((-1,) + (1,) * (W.ndim - 1))
    b_eff = (b - mean) * scale + beta
    return W_eff, b_eff


def init_params(key):
    keys = iter(jax.random.split(key, 128))

    def nrm(shape, scale=0.2):
        return scale * jax.random.normal(next(keys), shape, dtype=jnp.float32)

    def bn(n):
        return (1.0 + nrm((n,), 0.1), nrm((n,), 0.1), nrm((n,), 0.1),
                1.0 + jnp.abs(nrm((n,), 0.1)))

    w1l, b1l, w2l, b2l, w3l, b3l = [], [], [], [], [], []
    for _ in range(S):   # independent Individial_Pos_Convs per (position, sensor)
        W1, bb1 = nrm((FC, K1)), nrm((FC,))
        W1e, b1e = _fold_bn(W1, bb1, *bn(FC))
        w1l.append(W1e.T)                       # (K1, FC)
        b1l.append(b1e.reshape(1, FC))

        W2, bb2 = nrm((FC, FC, 3)), nrm((FC,))  # (out, in, k)
        W2e, b2e = _fold_bn(W2, bb2, *bn(FC))
        # rows ordered window-major (k*FC + c_in), matching the h1 lane layout
        w2l.append(jnp.transpose(W2e, (2, 1, 0)).reshape(NW * FC, FC))
        b2l.append(b2e.reshape(1, FC))

        W3, bb3 = nrm((FC, FC)), nrm((FC,))
        W3e, b3e = _fold_bn(W3, bb3, *bn(FC))
        w3l.append(W3e.T)
        b3l.append(b3e.reshape(1, FC))

    params = {
        'w1': jnp.stack(w1l), 'b1': jnp.stack(b1l),
        'w2': jnp.stack(w2l), 'b2': jnp.stack(b2l),
        'w3': jnp.stack(w3l), 'b3': jnp.stack(b3l),
        'wsa': nrm((1, FC)).T, 'bsa': nrm((1,)).reshape(1, 1),
        'wih0': nrm((3 * HID, FC)).T, 'whh0': nrm((3 * HID, HID)).T,
        'bih0': nrm((3 * HID,)).reshape(1, -1), 'bhh0': nrm((3 * HID,)).reshape(1, -1),
        'wih1': nrm((3 * HID, HID)).T, 'whh1': nrm((3 * HID, HID)).T,
        'bih1': nrm((3 * HID,)).reshape(1, -1), 'bhh1': nrm((3 * HID,)).reshape(1, -1),
        'wt1': nrm((64, HID)).T, 'bt1': nrm((64,)).reshape(1, -1),
        'wt2': nrm((1, 64)).T, 'bt2': nrm((1,)).reshape(1, 1),
        'wl': nrm((NCLS, HID)).T, 'bl': nrm((NCLS,)).reshape(1, -1),
    }
    return params


# -------------------- glue: pack weights into 2 lane-dense slabs --------------------
def pack_params(p):
    s1 = jnp.zeros((SLAB1_ROWS, LANE), jnp.float32)
    s2 = jnp.zeros((SLAB2_ROWS, LANE), jnp.float32)

    def put(slab, off, name, arr):
        arr = jnp.asarray(arr, jnp.float32)
        h, w = arr.shape
        return slab.at[off[name]:off[name] + h, 0:w].set(arr)

    # block-diagonal conv weights (zero padding rows/cols keep padded lanes at 0)
    w1_bd = jnp.zeros((PK, C1), jnp.float32)
    b1_bd = jnp.zeros((1, C1), jnp.float32)
    w2_bd = jnp.zeros((C1, C2), jnp.float32)
    b2_bd = jnp.zeros((1, C2), jnp.float32)
    w3_bd = jnp.zeros((C2, C2), jnp.float32)
    b3_bd = jnp.zeros((1, C2), jnp.float32)
    wsa_bd = jnp.zeros((C2, S), jnp.float32)
    for g in range(S):
        for w in range(NW):
            r0 = (g * NW + w) * K1
            c0 = (g * NW + w) * FC
            w1_bd = w1_bd.at[r0:r0 + K1, c0:c0 + FC].set(p['w1'][g])
            b1_bd = b1_bd.at[:, c0:c0 + FC].set(p['b1'][g])
        w2_bd = w2_bd.at[g * NW * FC:(g + 1) * NW * FC,
                         g * FC:(g + 1) * FC].set(p['w2'][g])
        b2_bd = b2_bd.at[:, g * FC:(g + 1) * FC].set(p['b2'][g])
        w3_bd = w3_bd.at[g * FC:(g + 1) * FC, g * FC:(g + 1) * FC].set(p['w3'][g])
        b3_bd = b3_bd.at[:, g * FC:(g + 1) * FC].set(p['b3'][g])
        wsa_bd = wsa_bd.at[g * FC:(g + 1) * FC, g:g + 1].set(p['wsa'])

    sel_e = jnp.zeros((S, C2), jnp.float32)          # group weight -> per-lane weight
    for g in range(S):
        sel_e = sel_e.at[g, g * FC:(g + 1) * FC].set(1.0)
    sel_r = jnp.concatenate([jnp.eye(FC, dtype=jnp.float32)] * S, axis=0)  # (C2, FC)
    wih0_fused = sel_r @ p['wih0']                   # group-sum folded into wih0

    s1 = put(s1, O1, "w1", w1_bd)
    s1 = put(s1, O1, "b1", b1_bd)
    s1 = put(s1, O1, "w2", w2_bd)
    s1 = put(s1, O1, "b2", b2_bd)
    s1 = put(s1, O1, "w3", w3_bd)
    s1 = put(s1, O1, "b3", b3_bd)
    s1 = put(s1, O1, "wsa", wsa_bd)
    s1 = put(s1, O1, "bsa", jnp.broadcast_to(p['bsa'], (1, S)))
    s1 = put(s1, O1, "sel_e", sel_e)
    s1 = put(s1, O1, "wih0", wih0_fused)
    s1 = put(s1, O1, "bih0", p['bih0'])

    # GRU layer-1 stacked weight: cols [r(i+h) | z(i+h) | n_i | n_h]
    H = HID
    w1cat = jnp.zeros((2 * H, 4 * H), jnp.float32)
    w1cat = w1cat.at[0:H, 0:2 * H].set(p['wih1'][:, 0:2 * H])
    w1cat = w1cat.at[H:2 * H, 0:2 * H].set(p['whh1'][:, 0:2 * H])
    w1cat = w1cat.at[0:H, 2 * H:3 * H].set(p['wih1'][:, 2 * H:3 * H])
    w1cat = w1cat.at[H:2 * H, 3 * H:4 * H].set(p['whh1'][:, 2 * H:3 * H])
    b1cat = jnp.zeros((1, 4 * H), jnp.float32)
    b1cat = b1cat.at[:, 0:2 * H].set(p['bih1'][:, 0:2 * H] + p['bhh1'][:, 0:2 * H])
    b1cat = b1cat.at[:, 2 * H:3 * H].set(p['bih1'][:, 2 * H:3 * H])
    b1cat = b1cat.at[:, 3 * H:4 * H].set(p['bhh1'][:, 2 * H:3 * H])

    # time-pooling selector: row b picks time-major rows {t*BB + b}
    ppool = jnp.zeros((BB, RB), jnp.float32)
    for b in range(BB):
        for t in range(T):
            ppool = ppool.at[b, t * BB + b].set(1.0)

    # fused output head: lanes 0:NCLS = logits, lanes 2H:3H = pooled copy
    wout = jnp.zeros((HID, LANE), jnp.float32)
    wout = wout.at[:, 0:NCLS].set(p['wl'])
    wout = wout.at[:, 2 * HID:3 * HID].set(jnp.eye(HID, dtype=jnp.float32))
    bout = jnp.zeros((1, LANE), jnp.float32)
    bout = bout.at[:, 0:NCLS].set(p['bl'])

    s2 = put(s2, O2, "whh0", p['whh0'])
    s2 = put(s2, O2, "bhh0", p['bhh0'])
    s2 = put(s2, O2, "w1cat", w1cat)
    s2 = put(s2, O2, "b1cat", b1cat)
    s2 = put(s2, O2, "wt1", p['wt1'])
    s2 = put(s2, O2, "bt1", p['bt1'])
    s2 = put(s2, O2, "wt2", p['wt2'])
    s2 = put(s2, O2, "bt2", p['bt2'])
    s2 = put(s2, O2, "ppool", ppool)
    s2 = put(s2, O2, "wout", wout)
    s2 = put(s2, O2, "bout", bout)
    return s1, s2


# -------------------- glue: lane-dense im2col + batch blocking --------------------
def build_patches(x):
    # x: (B, POS_NUM, T, NSENS*GROUP_W); sensor-group order matches the PyTorch
    # concatenation order: per position -> grav, gyro.
    cols = []
    for i in range(POS_NUM):
        x_pos = x[:, i, :, :]                                     # (B, T, NSENS*GROUP_W)
        for s in range(NSENS):
            grp = x_pos[:, :, s * GROUP_W:(s + 1) * GROUP_W]      # (B, T, GROUP_W)
            for w in range(NW):
                cols.append(grp[:, :, w * STR1:w * STR1 + K1])    # (B, T, K1)
    patches = jnp.concatenate(cols, axis=-1)                      # (B, T, 216)
    patches = jnp.pad(patches, ((0, 0), (0, 0), (0, PK - PK_RAW)))  # (B, T, 256)
    # block the batch into NBLK groups of BB samples; time-major rows per block
    pb = patches.reshape(NBLK, BB, T, PK)
    pb = jnp.transpose(pb, (0, 2, 1, 3)).reshape(NBLK, T * BB, PK)
    return pb


# -------------------- pure-JAX reference (for verification) --------------------
def reference_forward(x, p):
    feats = []
    for i in range(POS_NUM):
        x_pos = x[:, i, :, :]
        for s in range(NSENS):
            grp = x_pos[:, :, s * GROUP_W:(s + 1) * GROUP_W]
            g = i * NSENS + s
            h1 = [jax.nn.relu(grp[:, :, w * STR1:w * STR1 + K1] @ p['w1'][g] + p['b1'][g])
                  for w in range(NW)]
            h1 = jnp.concatenate(h1, axis=-1)
            h2 = jax.nn.relu(h1 @ p['w2'][g] + p['b2'][g])
            h3 = jax.nn.relu(h2 @ p['w3'][g] + p['b3'][g])
            feats.append(h3)
    feats = jnp.stack(feats, axis=2)                              # (B, T, S, FC)
    att = jnp.tanh(feats @ p['wsa'] + p['bsa'])[..., 0]
    att = jax.nn.softmax(att, axis=2)
    xg = jnp.sum(feats * att[..., None], axis=2)                  # (B, T, FC)

    def cell(x_t, h, wih, whh, bih, bhh):
        gi = x_t @ wih + bih
        gh = h @ whh + bhh
        r = jax.nn.sigmoid(gi[:, :HID] + gh[:, :HID])
        z = jax.nn.sigmoid(gi[:, HID:2 * HID] + gh[:, HID:2 * HID])
        n = jnp.tanh(gi[:, 2 * HID:] + r * gh[:, 2 * HID:])
        return (1 - z) * n + z * h

    h0 = jnp.zeros((B, HID), jnp.float32)
    h1_ = jnp.zeros((B, HID), jnp.float32)
    outs = []
    for t in range(T):
        h0 = cell(xg[:, t], h0, p['wih0'], p['whh0'], p['bih0'], p['bhh0'])
        h1_ = cell(h0, h1_, p['wih1'], p['whh1'], p['bih1'], p['bhh1'])
        outs.append(h1_)
    out = jnp.stack(outs, axis=1)                                 # (B, T, HID)
    a1 = jnp.tanh(out @ p['wt1'] + p['bt1'])
    e = jnp.tanh(a1 @ p['wt2'] + p['bt2'])[..., 0]
    aw = jax.nn.softmax(e, axis=1)
    pooled = jnp.sum(out * aw[..., None], axis=1)
    logits = pooled @ p['wl'] + p['bl']
    return logits, pooled


if __name__ == "__main__":
    key = jax.random.PRNGKey(0)
    kx, kp = jax.random.split(key)
    # x mirrors the PyTorch input: (batch, POS_NUM, time, per-position spectral width)
    x = jax.random.normal(kx, (B, POS_NUM, T, NSENS * GROUP_W), dtype=jnp.float32)
    raw = init_params(kp)
    slab1, slab2 = pack_params(raw)

    patches_blocks = build_patches(x)
    logits, pooled = attnsense_forward(patches_blocks, slab1, slab2)
    jax.block_until_ready((logits, pooled))

    ref_logits, ref_pooled = reference_forward(x, raw)
    assert logits.shape == (B, NCLS) and pooled.shape == (B, HID)
    assert jnp.allclose(logits, ref_logits, rtol=2e-3, atol=2e-3), (
        float(jnp.max(jnp.abs(logits - ref_logits))))
    assert jnp.allclose(pooled, ref_pooled, rtol=2e-3, atol=2e-3), (
        float(jnp.max(jnp.abs(pooled - ref_pooled))))
    print("KERNEL_OK")
</pallas_src>

<mosaic_0001>
module attributes {stable_mosaic.version = 11 : i64} {
  func.func @attnsense_kernel(%arg0: i32, %arg1: memref<1x16x256xf32, #tpu.memory_space<vmem>>, %arg2: memref<936x128xf32, #tpu.memory_space<vmem>>, %arg3: memref<336x128xf32, #tpu.memory_space<vmem>>, %arg4: memref<1x2x128xf32, #tpu.memory_space<vmem>>) attributes {dimension_semantics = [#tpu.dimension_semantics<parallel>], iteration_bounds = array<i64: 2>, scalar_prefetch = 0 : i64, scratch_operands = 0 : i64, tpu.core_type = #tpu.core_type<tc>, window_params = [{transform_indices = @transform_0, window_bounds = array<i64: 1, 16, 256>}, {pipeline_mode = #tpu.pipeline_mode<synchronous>, transform_indices = @transform_1, window_bounds = array<i64: 936, 128>}, {pipeline_mode = #tpu.pipeline_mode<synchronous>, transform_indices = @transform_2, window_bounds = array<i64: 336, 128>}, {transform_indices = @transform_3, window_bounds = array<i64: 1, 2, 128>}]} {
    %c0 = arith.constant 0 : index
    %c0_0 = arith.constant 0 : index
    %c0_1 = arith.constant 0 : index
    %0 = vector.load %arg1[%c0, %c0_0, %c0_1] : memref<1x16x256xf32, #tpu.memory_space<vmem>>, vector<1x16x256xf32>
    %1 = vector.shape_cast %0 : vector<1x16x256xf32> to vector<16x256xf32>
    %c0_2 = arith.constant 0 : index
    %c0_3 = arith.constant 0 : index
    %2 = vector.load %arg2[%c0_2, %c0_3] : memref<936x128xf32, #tpu.memory_space<vmem>>, vector<256x128xf32>
    %cst = arith.constant dense<0.000000e+00> : vector<16x128xf32>
    %3 = tpu.matmul %1, %2, %cst {dimension_numbers = #tpu.dot_dimension_numbers<[1], [0], [0], [1], [0, 0, 1, 1], [], []>} : vector<16x256xf32>, vector<256x128xf32>, vector<16x128xf32> -> vector<16x128xf32>
    %c256 = arith.constant 256 : index
    %c0_4 = arith.constant 0 : index
    %4 = vector.load %arg2[%c256, %c0_4] : memref<936x128xf32, #tpu.memory_space<vmem>>, vector<1x128xf32>
    %5 = vector.broadcast %4 : vector<1x128xf32> to vector<16x128xf32>
    %6 = arith.addf %3, %5 : vector<16x128xf32>
    %cst_5 = arith.constant 0.000000e+00 : f32
    %7 = vector.broadcast %cst_5 : f32 to vector<16x128xf32>
    %8 = arith.maximumf %6, %7 : vector<16x128xf32>
    %c264 = arith.constant 264 : index
    %c0_6 = arith.constant 0 : index
    %9 = vector.load %arg2[%c264, %c0_6] : memref<936x128xf32, #tpu.memory_space<vmem>>, vector<128x128xf32>
    %cst_7 = arith.constant dense<0.000000e+00> : vector<16x128xf32>
    %10 = tpu.matmul %8, %9, %cst_7 {dimension_numbers = #tpu.dot_dimension_numbers<[1], [0], [0], [1], [0, 0, 1, 1], [], []>} : vector<16x128xf32>, vector<128x128xf32>, vector<16x128xf32> -> vector<16x128xf32>
    %c392 = arith.constant 392 : index
    %c0_8 = arith.constant 0 : index
    %11 = vector.load %arg2[%c392, %c0_8] : memref<936x128xf32, #tpu.memory_space<vmem>>, vector<1x128xf32>
    %12 = vector.broadcast %11 : vector<1x128xf32> to vector<16x128xf32>
    %13 = arith.addf %10, %12 : vector<16x128xf32>
    %cst_9 = arith.constant 0.000000e+00 : f32
    %14 = vector.broadcast %cst_9 : f32 to vector<16x128xf32>
    %15 = arith.maximumf %13, %14 : vector<16x128xf32>
    %c400 = arith.constant 400 : index
    %c0_10 = arith.constant 0 : index
    %16 = vector.load %arg2[%c400, %c0_10] : memref<936x128xf32, #tpu.memory_space<vmem>>, vector<128x128xf32>
    %cst_11 = arith.constant dense<0.000000e+00> : vector<16x128xf32>
    %17 = tpu.matmul %15, %16, %cst_11 {dimension_numbers = #tpu.dot_dimension_numbers<[1], [0], [0], [1], [0, 0, 1, 1], [], []>} : vector<16x128xf32>, vector<128x128xf32>, vector<16x128xf32> -> vector<16x128xf32>
    %c528 = arith.constant 528 : index
    %c0_12 = arith.constant 0 : index
    %18 = vector.load %arg2[%c528, %c0_12] : memref<936x128xf32, #tpu.memory_space<vmem>>, vector<1x128xf32>
    %19 = vector.broadcast %18 : vector<1x128xf32> to vector<16x128xf32>
    %20 = arith.addf %17, %19 : vector<16x128xf32>
    %cst_13 = arith.constant 0.000000e+00 : f32
    %21 = vector.broadcast %cst_13 : f32 to vector<16x128xf32>
    %22 = arith.maximumf %20, %21 : vector<16x128xf32>
    %c536 = arith.constant 536 : index
    %c0_14 = arith.constant 0 : index
    %23 = vector.load %arg2[%c536, %c0_14] : memref<936x128xf32, #tpu.memory_space<vmem>>, vector<128x128xf32>
    %cst_15 = arith.constant dense<0.000000e+00> : vector<16x128xf32>
    %24 = tpu.matmul %22, %23, %cst_15 {dimension_numbers = #tpu.dot_dimension_numbers<[1], [0], [0], [1], [0, 0, 1, 1], [], []>} : vector<16x128xf32>, vector<128x128xf32>, vector<16x128xf32> -> vector<16x128xf32>
    %c664 = arith.constant 664 : index
    %c0_16 = arith.constant 0 : index
    %25 = vector.load %arg2[%c664, %c0_16] : memref<936x128xf32, #tpu.memory_space<vmem>>, vector<1x128xf32>
    %26 = vector.broadcast %25 : vector<1x128xf32> to vector<16x128xf32>
    %27 = arith.addf %24, %26 : vector<16x128xf32>
    %28 = math.tanh %27 : vector<16x128xf32>
    %29 = math.exp %28 : vector<16x128xf32>
    %30 = tpu.iota {dimensions = array<i32: 1>} : vector<1x128xi32>
    %c4_i32 = arith.constant 4 : i32
    %31 = vector.broadcast %c4_i32 : i32 to vector<1x128xi32>
    %32 = arith.cmpi slt, %30, %31 : vector<1x128xi32>
    %33 = arith.extui %32 : vector<1x128xi1> to vector<1x128xi32>
    %34 = arith.sitofp %33 : vector<1x128xi32> to vector<1x128xf32>
    %35 = vector.broadcast %34 : vector<1x128xf32> to vector<16x128xf32>
    %36 = arith.mulf %29, %35 : vector<16x128xf32>
    %cst_17 = arith.constant dense<0.000000e+00> : vector<16xf32>
    %37 = vector.multi_reduction <add>, %36, %cst_17 [1] : vector<16x128xf32> to vector<16xf32>
    %38 = vector.shape_cast %37 : vector<16xf32> to vector<16x1xf32>
    %39 = vector.broadcast %38 : vector<16x1xf32> to vector<16x128xf32>
    %40 = arith.divf %29, %39 : vector<16x128xf32>
    %c672 = arith.constant 672 : index
    %c0_18 = arith.constant 0 : index
    %41 = vector.load %arg2[%c672, %c0_18] : memref<936x128xf32, #tpu.memory_space<vmem>>, vector<128x128xf32>
    %cst_19 = arith.constant dense<0.000000e+00> : vector<16x128xf32>
    %42 = tpu.matmul %40, %41, %cst_19 {dimension_numbers = #tpu.dot_dimension_numbers<[1], [0], [0], [1], [0, 0, 1, 1], [], []>} : vector<16x128xf32>, vector<128x128xf32>, vector<16x128xf32> -> vector<16x128xf32>
    %43 = arith.mulf %22, %42 : vector<16x128xf32>
    %c800 = arith.constant 800 : index
    %c0_20 = arith.constant 0 : index
    %44 = vector.load %arg2[%c800, %c0_20] : memref<936x128xf32, #tpu.memory_space<vmem>>, vector<128x128xf32>
    %cst_21 = arith.constant dense<0.000000e+00> : vector<16x128xf32>
    %45 = tpu.matmul %43, %44, %cst_21 {dimension_numbers = #tpu.dot_dimension_numbers<[1], [0], [0], [1], [0, 0, 1, 1], [], []>} : vector<16x128xf32>, vector<128x128xf32>, vector<16x128xf32> -> vector<16x128xf32>
    %c928 = arith.constant 928 : index
    %c0_22 = arith.constant 0 : index
    %46 = vector.load %arg2[%c928, %c0_22] : memref<936x128xf32, #tpu.memory_space<vmem>>, vector<1x128xf32>
    %47 = vector.broadcast %46 : vector<1x128xf32> to vector<16x128xf32>
    %48 = arith.addf %45, %47 : vector<16x128xf32>
    %c0_23 = arith.constant 0 : index
    %c0_24 = arith.constant 0 : index
    %49 = vector.load %arg3[%c0_23, %c0_24] : memref<336x128xf32, #tpu.memory_space<vmem>>, vector<32x128xf32>
    %c32 = arith.constant 32 : index
    %c0_25 = arith.constant 0 : index
    %50 = vector.load %arg3[%c32, %c0_25] : memref<336x128xf32, #tpu.memory_space<vmem>>, vector<1x128xf32>
    %c40 = arith.constant 40 : index
    %c0_26 = arith.constant 0 : index
    %51 = vector.load %arg3[%c40, %c0_26] : memref<336x128xf32, #tpu.memory_space<vmem>>, vector<64x128xf32>
    %c104 = arith.constant 104 : index
    %c0_27 = arith.constant 0 : index
    %52 = vector.load %arg3[%c104, %c0_27] : memref<336x128xf32, #tpu.memory_space<vmem>>, vector<1x128xf32>
    %cst_28 = arith.constant 0.000000e+00 : f32
    %53 = vector.broadcast %cst_28 : f32 to vector<2x32xf32>
    %cst_29 = arith.constant 0.000000e+00 : f32
    %54 = vector.broadcast %cst_29 : f32 to vector<2x32xf32>
    %55 = vector.extract_strided_slice %48 {offsets = [0, 0], sizes = [2, 128], strides = [1, 1]} : vector<16x128xf32> to vector<2x128xf32>
    %cst_30 = arith.constant dense<0.000000e+00> : vector<2x128xf32>
    %56 = tpu.matmul %53, %49, %cst_30 {dimension_numbers = #tpu.dot_dimension_numbers<[1], [0], [0], [1], [0, 0, 1, 1], [], []>} : vector<2x32xf32>, vector<32x128xf32>, vector<2x128xf32> -> vector<2x128xf32>
    %57 = vector.broadcast %50 : vector<1x128xf32> to vector<2x128xf32>
    %58 = arith.addf %56, %57 : vector<2x128xf32>
    %59 = vector.extract_strided_slice %55 {offsets = [0, 0], sizes = [2, 32], strides = [1, 1]} : vector<2x128xf32> to vector<2x32xf32>
    %60 = vector.extract_strided_slice %58 {offsets = [0, 0], sizes = [2, 32], strides = [1, 1]} : vector<2x128xf32> to vector<2x32xf32>
    %61 = arith.addf %59, %60 : vector<2x32xf32>
    %62 = arith.negf %61 : vector<2x32xf32>
    %63 = math.exp %62 : vector<2x32xf32>
    %cst_31 = arith.constant 1.000000e+00 : f32
    %64 = vector.broadcast %cst_31 : f32 to vector<2x32xf32>
    %65 = arith.addf %64, %63 : vector<2x32xf32>
    %66 = arith.divf %64, %65 : vector<2x32xf32>
    %67 = vector.extract_strided_slice %55 {offsets = [0, 32], sizes = [2, 32], strides = [1, 1]} : vector<2x128xf32> to vector<2x32xf32>
    %68 = vector.extract_strided_slice %58 {offsets = [0, 32], sizes = [2, 32], strides = [1, 1]} : vector<2x128xf32> to vector<2x32xf32>
    %69 = arith.addf %67, %68 : vector<2x32xf32>
    %70 = arith.negf %69 : vector<2x32xf32>
    %71 = math.exp %70 : vector<2x32xf32>
    %cst_32 = arith.constant 1.000000e+00 : f32
    %72 = vector.broadcast %cst_32 : f32 to vector<2x32xf32>
    %73 = arith.addf %72, %71 : vector<2x32xf32>
    %74 = arith.divf %72, %73 : vector<2x32xf32>
    %75 = vector.extract_strided_slice %55 {offsets = [0, 64], sizes = [2, 32], strides = [1, 1]} : vector<2x128xf32> to vector<2x32xf32>
    %76 = vector.extract_strided_slice %58 {offsets = [0, 64], sizes = [2, 32], strides = [1, 1]} : vector<2x128xf32> to vector<2x32xf32>
    %77 = arith.mulf %66, %76 : vector<2x32xf32>
    %78 = arith.addf %75, %77 : vector<2x32xf32>
    %79 = math.tanh %78 : vector<2x32xf32>
    %cst_33 = arith.constant 1.000000e+00 : f32
    %80 = vector.broadcast %cst_33 : f32 to vector<2x32xf32>
    %81 = arith.subf %80, %74 : vector<2x32xf32>
    %82 = arith.mulf %81, %79 : vector<2x32xf32>
    %83 = arith.mulf %74, %53 : vector<2x32xf32>
    %84 = arith.addf %82, %83 : vector<2x32xf32>
    %85 = tpu.concatenate %84, %54 in 1 : vector<2x32xf32>, vector<2x32xf32> -> vector<2x64xf32>
    %cst_34 = arith.constant dense<0.000000e+00> : vector<2x128xf32>
    %86 = tpu.matmul %85, %51, %cst_34 {dimension_numbers = #tpu.dot_dimension_numbers<[1], [0], [0], [1], [0, 0, 1, 1], [], []>} : vector<2x64xf32>, vector<64x128xf32>, vector<2x128xf32> -> vector<2x128xf32>
    %87 = vector.broadcast %52 : vector<1x128xf32> to vector<2x128xf32>
    %88 = arith.addf %86, %87 : vector<2x128xf32>
    %89 = vector.extract_strided_slice %88 {offsets = [0, 0], sizes = [2, 32], strides = [1, 1]} : vector<2x128xf32> to vector<2x32xf32>
    %90 = arith.negf %89 : vector<2x32xf32>
    %91 = math.exp %90 : vector<2x32xf32>
    %cst_35 = arith.constant 1.000000e+00 : f32
    %92 = vector.broadcast %cst_35 : f32 to vector<2x32xf32>
    %93 = arith.addf %92, %91 : vector<2x32xf32>
    %94 = arith.divf %92, %93 : vector<2x32xf32>
    %95 = vector.extract_strided_slice %88 {offsets = [0, 32], sizes = [2, 32], strides = [1, 1]} : vector<2x128xf32> to vector<2x32xf32>
    %96 = arith.negf %95 : vector<2x32xf32>
    %97 = math.exp %96 : vector<2x32xf32>
    %cst_36 = arith.constant 1.000000e+00 : f32
    %98 = vector.broadcast %cst_36 : f32 to vector<2x32xf32>
    %99 = arith.addf %98, %97 : vector<2x32xf32>
    %100 = arith.divf %98, %99 : vector<2x32xf32>
    %101 = vector.extract_strided_slice %88 {offsets = [0, 64], sizes = [2, 32], strides = [1, 1]} : vector<2x128xf32> to vector<2x32xf32>
    %102 = vector.extract_strided_slice %88 {offsets = [0, 96], sizes = [2, 32], strides = [1, 1]} : vector<2x128xf32> to vector<2x32xf32>
    %103 = arith.mulf %94, %102 : vector<2x32xf32>
    %104 = arith.addf %101, %103 : vector<2x32xf32>
    %105 = math.tanh %104 : vector<2x32xf32>
    %cst_37 = arith.constant 1.000000e+00 : f32
    %106 = vector.broadcast %cst_37 : f32 to vector<2x32xf32>
    %107 = arith.subf %106, %100 : vector<2x32xf32>
    %108 = arith.mulf %107, %105 : vector<2x32xf32>
    %109 = arith.mulf %100, %54 : vector<2x32xf32>
    %110 = arith.addf %108, %109 : vector<2x32xf32>
    %111 = vector.extract_strided_slice %48 {offsets = [2, 0], sizes = [2, 128], strides = [1, 1]} : vector<16x128xf32> to vector<2x128xf32>
    %cst_38 = arith.constant dense<0.000000e+00> : vector<2x128xf32>
    %112 = tpu.matmul %84, %49, %cst_38 {dimension_numbers = #tpu.dot_dimension_numbers<[1], [0], [0], [1], [0, 0, 1, 1], [], []>} : vector<2x32xf32>, vector<32x128xf32>, vector<2x128xf32> -> vector<2x128xf32>
    %113 = vector.broadcast %50 : vector<1x128xf32> to vector<2x128xf32>
    %114 = arith.addf %112, %113 : vector<2x128xf32>
    %115 = vector.extract_strided_slice %111 {offsets = [0, 0], sizes = [2, 32], strides = [1, 1]} : vector<2x128xf32> to vector<2x32xf32>
    %116 = vector.extract_strided_slice %114 {offsets = [0, 0], sizes = [2, 32], strides = [1, 1]} : vector<2x128xf32> to vector<2x32xf32>
    %117 = arith.addf %115, %116 : vector<2x32xf32>
    %118 = arith.negf %117 : vector<2x32xf32>
    %119 = math.exp %118 : vector<2x32xf32>
    %cst_39 = arith.constant 1.000000e+00 : f32
    %120 = vector.broadcast %cst_39 : f32 to vector<2x32xf32>
    %121 = arith.addf %120, %119 : vector<2x32xf32>
    %122 = arith.divf %120, %121 : vector<2x32xf32>
    %123 = vector.extract_strided_slice %111 {offsets = [0, 32], sizes = [2, 32], strides = [1, 1]} : vector<2x128xf32> to vector<2x32xf32>
    %124 = vector.extract_strided_slice %114 {offsets = [0, 32], sizes = [2, 32], strides = [1, 1]} : vector<2x128xf32> to vector<2x32xf32>
    %125 = arith.addf %123, %124 : vector<2x32xf32>
    %126 = arith.negf %125 : vector<2x32xf32>
    %127 = math.exp %126 : vector<2x32xf32>
    %cst_40 = arith.constant 1.000000e+00 : f32
    %128 = vector.broadcast %cst_40 : f32 to vector<2x32xf32>
    %129 = arith.addf %128, %127 : vector<2x32xf32>
    %130 = arith.divf %128, %129 : vector<2x32xf32>
    %131 = vector.extract_strided_slice %111 {offsets = [0, 64], sizes = [2, 32], strides = [1, 1]} : vector<2x128xf32> to vector<2x32xf32>
    %132 = vector.extract_strided_slice %114 {offsets = [0, 64], sizes = [2, 32], strides = [1, 1]} : vector<2x128xf32> to vector<2x32xf32>
    %133 = arith.mulf %122, %132 : vector<2x32xf32>
    %134 = arith.addf %131, %133 : vector<2x32xf32>
    %135 = math.tanh %134 : vector<2x32xf32>
    %cst_41 = arith.constant 1.000000e+00 : f32
    %136 = vector.broadcast %cst_41 : f32 to vector<2x32xf32>
    %137 = arith.subf %136, %130 : vector<2x32xf32>
    %138 = arith.mulf %137, %135 : vector<2x32xf32>
    %139 = arith.mulf %130, %84 : vector<2x32xf32>
    %140 = arith.addf %138, %139 : vector<2x32xf32>
    %141 = tpu.concatenate %140, %110 in 1 : vector<2x32xf32>, vector<2x32xf32> -> vector<2x64xf32>
    %cst_42 = arith.constant dense<0.000000e+00> : vector<2x128xf32>
    %142 = tpu.matmul %141, %51, %cst_42 {dimension_numbers = #tpu.dot_dimension_numbers<[1], [0], [0], [1], [0, 0, 1, 1], [], []>} : vector<2x64xf32>, vector<64x128xf32>, vector<2x128xf32> -> vector<2x128xf32>
    %143 = vector.broadcast %52 : vector<1x128xf32> to vector<2x128xf32>
    %144 = arith.addf %142, %143 : vector<2x128xf32>
    %145 = vector.extract_strided_slice %144 {offsets = [0, 0], sizes = [2, 32], strides = [1, 1]} : vector<2x128xf32> to vector<2x32xf32>
    %146 = arith.negf %145 : vector<2x32xf32>
    %147 = math.exp %146 : vector<2x32xf32>
    %cst_43 = arith.constant 1.000000e+00 : f32
    %148 = vector.broadcast %cst_43 : f32 to vector<2x32xf32>
    %149 = arith.addf %148, %147 : vector<2x32xf32>
    %150 = arith.divf %148, %149 : vector<2x32xf32>
    %151 = vector.extract_strided_slice %144 {offsets = [0, 32], sizes = [2, 32], strides = [1, 1]} : vector<2x128xf32> to vector<2x32xf32>
    %152 = arith.negf %151 : vector<2x32xf32>
    %153 = math.exp %152 : vector<2x32xf32>
    %cst_44 = arith.constant 1.000000e+00 : f32
    %154 = vector.broadcast %cst_44 : f32 to vector<2x32xf32>
    %155 = arith.addf %154, %153 : vector<2x32xf32>
    %156 = arith.divf %154, %155 : vector<2x32xf32>
    %157 = vector.extract_strided_slice %144 {offsets = [0, 64], sizes = [2, 32], strides = [1, 1]} : vector<2x128xf32> to vector<2x32xf32>
    %158 = vector.extract_strided_slice %144 {offsets = [0, 96], sizes = [2, 32], strides = [1, 1]} : vector<2x128xf32> to vector<2x32xf32>
    %159 = arith.mulf %150, %158 : vector<2x32xf32>
    %160 = arith.addf %157, %159 : vector<2x32xf32>
    %161 = math.tanh %160 : vector<2x32xf32>
    %cst_45 = arith.constant 1.000000e+00 : f32
    %162 = vector.broadcast %cst_45 : f32 to vector<2x32xf32>
    %163 = arith.subf %162, %156 : vector<2x32xf32>
    %164 = arith.mulf %163, %161 : vector<2x32xf32>
    %165 = arith.mulf %156, %110 : vector<2x32xf32>
    %166 = arith.addf %164, %165 : vector<2x32xf32>
    %167 = vector.extract_strided_slice %48 {offsets = [4, 0], sizes = [2, 128], strides = [1, 1]} : vector<16x128xf32> to vector<2x128xf32>
    %cst_46 = arith.constant dense<0.000000e+00> : vector<2x128xf32>
    %168 = tpu.matmul %140, %49, %cst_46 {dimension_numbers = #tpu.dot_dimension_numbers<[1], [0], [0], [1], [0, 0, 1, 1], [], []>} : vector<2x32xf32>, vector<32x128xf32>, vector<2x128xf32> -> vector<2x128xf32>
    %169 = vector.broadcast %50 : vector<1x128xf32> to vector<2x128xf32>
    %170 = arith.addf %168, %169 : vector<2x128xf32>
    %171 = vector.extract_strided_slice %167 {offsets = [0, 0], sizes = [2, 32], strides = [1, 1]} : vector<2x128xf32> to vector<2x32xf32>
    %172 = vector.extract_strided_slice %170 {offsets = [0, 0], sizes = [2, 32], strides = [1, 1]} : vector<2x128xf32> to vector<2x32xf32>
    %173 = arith.addf %171, %172 : vector<2x32xf32>
    %174 = arith.negf %173 : vector<2x32xf32>
    %175 = math.exp %174 : vector<2x32xf32>
    %cst_47 = arith.constant 1.000000e+00 : f32
    %176 = vector.broadcast %cst_47 : f32 to vector<2x32xf32>
    %177 = arith.addf %176, %175 : vector<2x32xf32>
    %178 = arith.divf %176, %177 : vector<2x32xf32>
    %179 = vector.extract_strided_slice %167 {offsets = [0, 32], sizes = [2, 32], strides = [1, 1]} : vector<2x128xf32> to vector<2x32xf32>
    %180 = vector.extract_strided_slice %170 {offsets = [0, 32], sizes = [2, 32], strides = [1, 1]} : vector<2x128xf32> to vector<2x32xf32>
    %181 = arith.addf %179, %180 : vector<2x32xf32>
    %182 = arith.negf %181 : vector<2x32xf32>
    %183 = math.exp %182 : vector<2x32xf32>
    %cst_48 = arith.constant 1.000000e+00 : f32
    %184 = vector.broadcast %cst_48 : f32 to vector<2x32xf32>
    %185 = arith.addf %184, %183 : vector<2x32xf32>
    %186 = arith.divf %184, %185 : vector<2x32xf32>
    %187 = vector.extract_strided_slice %167 {offsets = [0, 64], sizes = [2, 32], strides = [1, 1]} : vector<2x128xf32> to vector<2x32xf32>
    %188 = vector.extract_strided_slice %170 {offsets = [0, 64], sizes = [2, 32], strides = [1, 1]} : vector<2x128xf32> to vector<2x32xf32>
    %189 = arith.mulf %178, %188 : vector<2x32xf32>
    %190 = arith.addf %187, %189 : vector<2x32xf32>
    %191 = math.tanh %190 : vector<2x32xf32>
    %cst_49 = arith.constant 1.000000e+00 : f32
    %192 = vector.broadcast %cst_49 : f32 to vector<2x32xf32>
    %193 = arith.subf %192, %186 : vector<2x32xf32>
    %194 = arith.mulf %193, %191 : vector<2x32xf32>
    %195 = arith.mulf %186, %140 : vector<2x32xf32>
    %196 = arith.addf %194, %195 : vector<2x32xf32>
    %197 = tpu.concatenate %196, %166 in 1 : vector<2x32xf32>, vector<2x32xf32> -> vector<2x64xf32>
    %cst_50 = arith.constant dense<0.000000e+00> : vector<2x128xf32>
    %198 = tpu.matmul %197, %51, %cst_50 {dimension_numbers = #tpu.dot_dimension_numbers<[1], [0], [0], [1], [0, 0, 1, 1], [], []>} : vector<2x64xf32>, vector<64x128xf32>, vector<2x128xf32> -> vector<2x128xf32>
    %199 = vector.broadcast %52 : vector<1x128xf32> to vector<2x128xf32>
    %200 = arith.addf %198, %199 : vector<2x128xf32>
    %201 = vector.extract_strided_slice %200 {offsets = [0, 0], sizes = [2, 32], strides = [1, 1]} : vector<2x128xf32> to vector<2x32xf32>
    %202 = arith.negf %201 : vector<2x32xf32>
    %203 = math.exp %202 : vector<2x32xf32>
    %cst_51 = arith.constant 1.000000e+00 : f32
    %204 = vector.broadcast %cst_51 : f32 to vector<2x32xf32>
    %205 = arith.addf %204, %203 : vector<2x32xf32>
    %206 = arith.divf %204, %205 : vector<2x32xf32>
    %207 = vector.extract_strided_slice %200 {offsets = [0, 32], sizes = [2, 32], strides = [1, 1]} : vector<2x128xf32> to vector<2x32xf32>
    %208 = arith.negf %207 : vector<2x32xf32>
    %209 = math.exp %208 : vector<2x32xf32>
    %cst_52 = arith.constant 1.000000e+00 : f32
    %210 = vector.broadcast %cst_52 : f32 to vector<2x32xf32>
    %211 = arith.addf %210, %209 : vector<2x32xf32>
    %212 = arith.divf %210, %211 : vector<2x32xf32>
    %213 = vector.extract_strided_slice %200 {offsets = [0, 64], sizes = [2, 32], strides = [1, 1]} : vector<2x128xf32> to vector<2x32xf32>
    %214 = vector.extract_strided_slice %200 {offsets = [0, 96], sizes = [2, 32], strides = [1, 1]} : vector<2x128xf32> to vector<2x32xf32>
    %215 = arith.mulf %206, %214 : vector<2x32xf32>
    %216 = arith.addf %213, %215 : vector<2x32xf32>
    %217 = math.tanh %216 : vector<2x32xf32>
    %cst_53 = arith.constant 1.000000e+00 : f32
    %218 = vector.broadcast %cst_53 : f32 to vector<2x32xf32>
    %219 = arith.subf %218, %212 : vector<2x32xf32>
    %220 = arith.mulf %219, %217 : vector<2x32xf32>
    %221 = arith.mulf %212, %166 : vector<2x32xf32>
    %222 = arith.addf %220, %221 : vector<2x32xf32>
    %223 = vector.extract_strided_slice %48 {offsets = [6, 0], sizes = [2, 128], strides = [1, 1]} : vector<16x128xf32> to vector<2x128xf32>
    %cst_54 = arith.constant dense<0.000000e+00> : vector<2x128xf32>
    %224 = tpu.matmul %196, %49, %cst_54 {dimension_numbers = #tpu.dot_dimension_numbers<[1], [0], [0], [1], [0, 0, 1, 1], [], []>} : vector<2x32xf32>, vector<32x128xf32>, vector<2x128xf32> -> vector<2x128xf32>
    %225 = vector.broadcast %50 : vector<1x128xf32> to vector<2x128xf32>
    %226 = arith.addf %224, %225 : vector<2x128xf32>
    %227 = vector.extract_strided_slice %223 {offsets = [0, 0], sizes = [2, 32], strides = [1, 1]} : vector<2x128xf32> to vector<2x32xf32>
    %228 = vector.extract_strided_slice %226 {offsets = [0, 0], sizes = [2, 32], strides = [1, 1]} : vector<2x128xf32> to vector<2x32xf32>
    %229 = arith.addf %227, %228 : vector<2x32xf32>
    %230 = arith.negf %229 : vector<2x32xf32>
    %231 = math.exp %230 : vector<2x32xf32>
    %cst_55 = arith.constant 1.000000e+00 : f32
    %232 = vector.broadcast %cst_55 : f32 to vector<2x32xf32>
    %233 = arith.addf %232, %231 : vector<2x32xf32>
    %234 = arith.divf %232, %233 : vector<2x32xf32>
    %235 = vector.extract_strided_slice %223 {offsets = [0, 32], sizes = [2, 32], strides = [1, 1]} : vector<2x128xf32> to vector<2x32xf32>
    %236 = vector.extract_strided_slice %226 {offsets = [0, 32], sizes = [2, 32], strides = [1, 1]} : vector<2x128xf32> to vector<2x32xf32>
    %237 = arith.addf %235, %236 : vector<2x32xf32>
    %238 = arith.negf %237 : vector<2x32xf32>
    %239 = math.exp %238 : vector<2x32xf32>
    %cst_56 = arith.constant 1.000000e+00 : f32
    %240 = vector.broadcast %cst_56 : f32 to vector<2x32xf32>
    %241 = arith.addf %240, %239 : vector<2x32xf32>
    %242 = arith.divf %240, %241 : vector<2x32xf32>
    %243 = vector.extract_strided_slice %223 {offsets = [0, 64], sizes = [2, 32], strides = [1, 1]} : vector<2x128xf32> to vector<2x32xf32>
    %244 = vector.extract_strided_slice %226 {offsets = [0, 64], sizes = [2, 32], strides = [1, 1]} : vector<2x128xf32> to vector<2x32xf32>
    %245 = arith.mulf %234, %244 : vector<2x32xf32>
    %246 = arith.addf %243, %245 : vector<2x32xf32>
    %247 = math.tanh %246 : vector<2x32xf32>
    %cst_57 = arith.constant 1.000000e+00 : f32
    %248 = vector.broadcast %cst_57 : f32 to vector<2x32xf32>
    %249 = arith.subf %248, %242 : vector<2x32xf32>
    %250 = arith.mulf %249, %247 : vector<2x32xf32>
    %251 = arith.mulf %242, %196 : vector<2x32xf32>
    %252 = arith.addf %250, %251 : vector<2x32xf32>
    %253 = tpu.concatenate %252, %222 in 1 : vector<2x32xf32>, vector<2x32xf32> -> vector<2x64xf32>
    %cst_58 = arith.constant dense<0.000000e+00> : vector<2x128xf32>
    %254 = tpu.matmul %253, %51, %cst_58 {dimension_numbers = #tpu.dot_dimension_numbers<[1], [0], [0], [1], [0, 0, 1, 1], [], []>} : vector<2x64xf32>, vector<64x128xf32>, vector<2x128xf32> -> vector<2x128xf32>
    %255 = vector.broadcast %52 : vector<1x128xf32> to vector<2x128xf32>
    %256 = arith.addf %254, %255 : vector<2x128xf32>
    %257 = vector.extract_strided_slice %256 {offsets = [0, 0], sizes = [2, 32], strides = [1, 1]} : vector<2x128xf32> to vector<2x32xf32>
    %258 = arith.negf %257 : vector<2x32xf32>
    %259 = math.exp %258 : vector<2x32xf32>
    %cst_59 = arith.constant 1.000000e+00 : f32
    %260 = vector.broadcast %cst_59 : f32 to vector<2x32xf32>
    %261 = arith.addf %260, %259 : vector<2x32xf32>
    %262 = arith.divf %260, %261 : vector<2x32xf32>
    %263 = vector.extract_strided_slice %256 {offsets = [0, 32], sizes = [2, 32], strides = [1, 1]} : vector<2x128xf32> to vector<2x32xf32>
    %264 = arith.negf %263 : vector<2x32xf32>
    %265 = math.exp %264 : vector<2x32xf32>
    %cst_60 = arith.constant 1.000000e+00 : f32
    %266 = vector.broadcast %cst_60 : f32 to vector<2x32xf32>
    %267 = arith.addf %266, %265 : vector<2x32xf32>
    %268 = arith.divf %266, %267 : vector<2x32xf32>
    %269 = vector.extract_strided_slice %256 {offsets = [0, 64], sizes = [2, 32], strides = [1, 1]} : vector<2x128xf32> to vector<2x32xf32>
    %270 = vector.extract_strided_slice %256 {offsets = [0, 96], sizes = [2, 32], strides = [1, 1]} : vector<2x128xf32> to vector<2x32xf32>
    %271 = arith.mulf %262, %270 : vector<2x32xf32>
    %272 = arith.addf %269, %271 : vector<2x32xf32>
    %273 = math.tanh %272 : vector<2x32xf32>
    %cst_61 = arith.constant 1.000000e+00 : f32
    %274 = vector.broadcast %cst_61 : f32 to vector<2x32xf32>
    %275 = arith.subf %274, %268 : vector<2x32xf32>
    %276 = arith.mulf %275, %273 : vector<2x32xf32>
    %277 = arith.mulf %268, %222 : vector<2x32xf32>
    %278 = arith.addf %276, %277 : vector<2x32xf32>
    %279 = vector.extract_strided_slice %48 {offsets = [8, 0], sizes = [2, 128], strides = [1, 1]} : vector<16x128xf32> to vector<2x128xf32>
    %cst_62 = arith.constant dense<0.000000e+00> : vector<2x128xf32>
    %280 = tpu.matmul %252, %49, %cst_62 {dimension_numbers = #tpu.dot_dimension_numbers<[1], [0], [0], [1], [0, 0, 1, 1], [], []>} : vector<2x32xf32>, vector<32x128xf32>, vector<2x128xf32> -> vector<2x128xf32>
    %281 = vector.broadcast %50 : vector<1x128xf32> to vector<2x128xf32>
    %282 = arith.addf %280, %281 : vector<2x128xf32>
    %283 = vector.extract_strided_slice %279 {offsets = [0, 0], sizes = [2, 32], strides = [1, 1]} : vector<2x128xf32> to vector<2x32xf32>
    %284 = vector.extract_strided_slice %282 {offsets = [0, 0], sizes = [2, 32], strides = [1, 1]} : vector<2x128xf32> to vector<2x32xf32>
    %285 = arith.addf %283, %284 : vector<2x32xf32>
    %286 = arith.negf %285 : vector<2x32xf32>
    %287 = math.exp %286 : vector<2x32xf32>
    %cst_63 = arith.constant 1.000000e+00 : f32
    %288 = vector.broadcast %cst_63 : f32 to vector<2x32xf32>
    %289 = arith.addf %288, %287 : vector<2x32xf32>
    %290 = arith.divf %288, %289 : vector<2x32xf32>
    %291 = vector.extract_strided_slice %279 {offsets = [0, 32], sizes = [2, 32], strides = [1, 1]} : vector<2x128xf32> to vector<2x32xf32>
    %292 = vector.extract_strided_slice %282 {offsets = [0, 32], sizes = [2, 32], strides = [1, 1]} : vector<2x128xf32> to vector<2x32xf32>
    %293 = arith.addf %291, %292 : vector<2x32xf32>
    %294 = arith.negf %293 : vector<2x32xf32>
    %295 = math.exp %294 : vector<2x32xf32>
    %cst_64 = arith.constant 1.000000e+00 : f32
    %296 = vector.broadcast %cst_64 : f32 to vector<2x32xf32>
    %297 = arith.addf %296, %295 : vector<2x32xf32>
    %298 = arith.divf %296, %297 : vector<2x32xf32>
    %299 = vector.extract_strided_slice %279 {offsets = [0, 64], sizes = [2, 32], strides = [1, 1]} : vector<2x128xf32> to vector<2x32xf32>
    %300 = vector.extract_strided_slice %282 {offsets = [0, 64], sizes = [2, 32], strides = [1, 1]} : vector<2x128xf32> to vector<2x32xf32>
    %301 = arith.mulf %290, %300 : vector<2x32xf32>
    %302 = arith.addf %299, %301 : vector<2x32xf32>
    %303 = math.tanh %302 : vector<2x32xf32>
    %cst_65 = arith.constant 1.000000e+00 : f32
    %304 = vector.broadcast %cst_65 : f32 to vector<2x32xf32>
    %305 = arith.subf %304, %298 : vector<2x32xf32>
    %306 = arith.mulf %305, %303 : vector<2x32xf32>
    %307 = arith.mulf %298, %252 : vector<2x32xf32>
    %308 = arith.addf %306, %307 : vector<2x32xf32>
    %309 = tpu.concatenate %308, %278 in 1 : vector<2x32xf32>, vector<2x32xf32> -> vector<2x64xf32>
    %cst_66 = arith.constant dense<0.000000e+00> : vector<2x128xf32>
    %310 = tpu.matmul %309, %51, %cst_66 {dimension_numbers = #tpu.dot_dimension_numbers<[1], [0], [0], [1], [0, 0, 1, 1], [], []>} : vector<2x64xf32>, vector<64x128xf32>, vector<2x128xf32> -> vector<2x128xf32>
    %311 = vector.broadcast %52 : vector<1x128xf32> to vector<2x128xf32>
    %312 = arith.addf %310, %311 : vector<2x128xf32>
    %313 = vector.extract_strided_slice %312 {offsets = [0, 0], sizes = [2, 32], strides = [1, 1]} : vector<2x128xf32> to vector<2x32xf32>
    %314 = arith.negf %313 : vector<2x32xf32>
    %315 = math.exp %314 : vector<2x32xf32>
    %cst_67 = arith.constant 1.000000e+00 : f32
    %316 = vector.broadcast %cst_67 : f32 to vector<2x32xf32>
    %317 = arith.addf %316, %315 : vector<2x32xf32>
    %318 = arith.divf %316, %317 : vector<2x32xf32>
    %319 = vector.extract_strided_slice %312 {offsets = [0, 32], sizes = [2, 32], strides = [1, 1]} : vector<2x128xf32> to vector<2x32xf32>
    %320 = arith.negf %319 : vector<2x32xf32>
    %321 = math.exp %320 : vector<2x32xf32>
    %cst_68 = arith.constant 1.000000e+00 : f32
    %322 = vector.broadcast %cst_68 : f32 to vector<2x32xf32>
    %323 = arith.addf %322, %321 : vector<2x32xf32>
    %324 = arith.divf %322, %323 : vector<2x32xf32>
    %325 = vector.extract_strided_slice %312 {offsets = [0, 64], sizes = [2, 32], strides = [1, 1]} : vector<2x128xf32> to vector<2x32xf32>
    %326 = vector.extract_strided_slice %312 {offsets = [0, 96], sizes = [2, 32], strides = [1, 1]} : vector<2x128xf32> to vector<2x32xf32>
    %327 = arith.mulf %318, %326 : vector<2x32xf32>
    %328 = arith.addf %325, %327 : vector<2x32xf32>
    %329 = math.tanh %328 : vector<2x32xf32>
    %cst_69 = arith.constant 1.000000e+00 : f32
    %330 = vector.broadcast %cst_69 : f32 to vector<2x32xf32>
    %331 = arith.subf %330, %324 : vector<2x32xf32>
    %332 = arith.mulf %331, %329 : vector<2x32xf32>
    %333 = arith.mulf %324, %278 : vector<2x32xf32>
    %334 = arith.addf %332, %333 : vector<2x32xf32>
    %335 = vector.extract_strided_slice %48 {offsets = [10, 0], sizes = [2, 128], strides = [1, 1]} : vector<16x128xf32> to vector<2x128xf32>
    %cst_70 = arith.constant dense<0.000000e+00> : vector<2x128xf32>
    %336 = tpu.matmul %308, %49, %cst_70 {dimension_numbers = #tpu.dot_dimension_numbers<[1], [0], [0], [1], [0, 0, 1, 1], [], []>} : vector<2x32xf32>, vector<32x128xf32>, vector<2x128xf32> -> vector<2x128xf32>
    %337 = vector.broadcast %50 : vector<1x128xf32> to vector<2x128xf32>
    %338 = arith.addf %336, %337 : vector<2x128xf32>
    %339 = vector.extract_strided_slice %335 {offsets = [0, 0], sizes = [2, 32], strides = [1, 1]} : vector<2x128xf32> to vector<2x32xf32>
    %340 = vector.extract_strided_slice %338 {offsets = [0, 0], sizes = [2, 32], strides = [1, 1]} : vector<2x128xf32> to vector<2x32xf32>
    %341 = arith.addf %339, %340 : vector<2x32xf32>
    %342 = arith.negf %341 : vector<2x32xf32>
    %343 = math.exp %342 : vector<2x32xf32>
    %cst_71 = arith.constant 1.000000e+00 : f32
    %344 = vector.broadcast %cst_71 : f32 to vector<2x32xf32>
    %345 = arith.addf %344, %343 : vector<2x32xf32>
    %346 = arith.divf %344, %345 : vector<2x32xf32>
    %347 = vector.extract_strided_slice %335 {offsets = [0, 32], sizes = [2, 32], strides = [1, 1]} : vector<2x128xf32> to vector<2x32xf32>
    %348 = vector.extract_strided_slice %338 {offsets = [0, 32], sizes = [2, 32], strides = [1, 1]} : vector<2x128xf32> to vector<2x32xf32>
    %349 = arith.addf %347, %348 : vector<2x32xf32>
    %350 = arith.negf %349 : vector<2x32xf32>
    %351 = math.exp %350 : vector<2x32xf32>
    %cst_72 = arith.constant 1.000000e+00 : f32
    %352 = vector.broadcast %cst_72 : f32 to vector<2x32xf32>
    %353 = arith.addf %352, %351 : vector<2x32xf32>
    %354 = arith.divf %352, %353 : vector<2x32xf32>
    %355 = vector.extract_strided_slice %335 {offsets = [0, 64], sizes = [2, 32], strides = [1, 1]} : vector<2x128xf32> to vector<2x32xf32>
    %356 = vector.extract_strided_slice %338 {offsets = [0, 64], sizes = [2, 32], strides = [1, 1]} : vector<2x128xf32> to vector<2x32xf32>
    %357 = arith.mulf %346, %356 : vector<2x32xf32>
    %358 = arith.addf %355, %357 : vector<2x32xf32>
    %359 = math.tanh %358 : vector<2x32xf32>
    %cst_73 = arith.constant 1.000000e+00 : f32
    %360 = vector.broadcast %cst_73 : f32 to vector<2x32xf32>
    %361 = arith.subf %360, %354 : vector<2x32xf32>
    %362 = arith.mulf %361, %359 : vector<2x32xf32>
    %363 = arith.mulf %354, %308 : vector<2x32xf32>
    %364 = arith.addf %362, %363 : vector<2x32xf32>
    %365 = tpu.concatenate %364, %334 in 1 : vector<2x32xf32>, vector<2x32xf32> -> vector<2x64xf32>
    %cst_74 = arith.constant dense<0.000000e+00> : vector<2x128xf32>
    %366 = tpu.matmul %365, %51, %cst_74 {dimension_numbers = #tpu.dot_dimension_numbers<[1], [0], [0], [1], [0, 0, 1, 1], [], []>} : vector<2x64xf32>, vector<64x128xf32>, vector<2x128xf32> -> vector<2x128xf32>
    %367 = vector.broadcast %52 : vector<1x128xf32> to vector<2x128xf32>
    %368 = arith.addf %366, %367 : vector<2x128xf32>
    %369 = vector.extract_strided_slice %368 {offsets = [0, 0], sizes = [2, 32], strides = [1, 1]} : vector<2x128xf32> to vector<2x32xf32>
    %370 = arith.negf %369 : vector<2x32xf32>
    %371 = math.exp %370 : vector<2x32xf32>
    %cst_75 = arith.constant 1.000000e+00 : f32
    %372 = vector.broadcast %cst_75 : f32 to vector<2x32xf32>
    %373 = arith.addf %372, %371 : vector<2x32xf32>
    %374 = arith.divf %372, %373 : vector<2x32xf32>
    %375 = vector.extract_strided_slice %368 {offsets = [0, 32], sizes = [2, 32], strides = [1, 1]} : vector<2x128xf32> to vector<2x32xf32>
    %376 = arith.negf %375 : vector<2x32xf32>
    %377 = math.exp %376 : vector<2x32xf32>
    %cst_76 = arith.constant 1.000000e+00 : f32
    %378 = vector.broadcast %cst_76 : f32 to vector<2x32xf32>
    %379 = arith.addf %378, %377 : vector<2x32xf32>
    %380 = arith.divf %378, %379 : vector<2x32xf32>
    %381 = vector.extract_strided_slice %368 {offsets = [0, 64], sizes = [2, 32], strides = [1, 1]} : vector<2x128xf32> to vector<2x32xf32>
    %382 = vector.extract_strided_slice %368 {offsets = [0, 96], sizes = [2, 32], strides = [1, 1]} : vector<2x128xf32> to vector<2x32xf32>
    %383 = arith.mulf %374, %382 : vector<2x32xf32>
    %384 = arith.addf %381, %383 : vector<2x32xf32>
    %385 = math.tanh %384 : vector<2x32xf32>
    %cst_77 = arith.constant 1.000000e+00 : f32
    %386 = vector.broadcast %cst_77 : f32 to vector<2x32xf32>
    %387 = arith.subf %386, %380 : vector<2x32xf32>
    %388 = arith.mulf %387, %385 : vector<2x32xf32>
    %389 = arith.mulf %380, %334 : vector<2x32xf32>
    %390 = arith.addf %388, %389 : vector<2x32xf32>
    %391 = vector.extract_strided_slice %48 {offsets = [12, 0], sizes = [2, 128], strides = [1, 1]} : vector<16x128xf32> to vector<2x128xf32>
    %cst_78 = arith.constant dense<0.000000e+00> : vector<2x128xf32>
    %392 = tpu.matmul %364, %49, %cst_78 {dimension_numbers = #tpu.dot_dimension_numbers<[1], [0], [0], [1], [0, 0, 1, 1], [], []>} : vector<2x32xf32>, vector<32x128xf32>, vector<2x128xf32> -> vector<2x128xf32>
    %393 = vector.broadcast %50 : vector<1x128xf32> to vector<2x128xf32>
    %394 = arith.addf %392, %393 : vector<2x128xf32>
    %395 = vector.extract_strided_slice %391 {offsets = [0, 0], sizes = [2, 32], strides = [1, 1]} : vector<2x128xf32> to vector<2x32xf32>
    %396 = vector.extract_strided_slice %394 {offsets = [0, 0], sizes = [2, 32], strides = [1, 1]} : vector<2x128xf32> to vector<2x32xf32>
    %397 = arith.addf %395, %396 : vector<2x32xf32>
    %398 = arith.negf %397 : vector<2x32xf32>
    %399 = math.exp %398 : vector<2x32xf32>
    %cst_79 = arith.constant 1.000000e+00 : f32
    %400 = vector.broadcast %cst_79 : f32 to vector<2x32xf32>
    %401 = arith.addf %400, %399 : vector<2x32xf32>
    %402 = arith.divf %400, %401 : vector<2x32xf32>
    %403 = vector.extract_strided_slice %391 {offsets = [0, 32], sizes = [2, 32], strides = [1, 1]} : vector<2x128xf32> to vector<2x32xf32>
    %404 = vector.extract_strided_slice %394 {offsets = [0, 32], sizes = [2, 32], strides = [1, 1]} : vector<2x128xf32> to vector<2x32xf32>
    %405 = arith.addf %403, %404 : vector<2x32xf32>
    %406 = arith.negf %405 : vector<2x32xf32>
    %407 = math.exp %406 : vector<2x32xf32>
    %cst_80 = arith.constant 1.000000e+00 : f32
    %408 = vector.broadcast %cst_80 : f32 to vector<2x32xf32>
    %409 = arith.addf %408, %407 : vector<2x32xf32>
    %410 = arith.divf %408, %409 : vector<2x32xf32>
    %411 = vector.extract_strided_slice %391 {offsets = [0, 64], sizes = [2, 32], strides = [1, 1]} : vector<2x128xf32> to vector<2x32xf32>
    %412 = vector.extract_strided_slice %394 {offsets = [0, 64], sizes = [2, 32], strides = [1, 1]} : vector<2x128xf32> to vector<2x32xf32>
    %413 = arith.mulf %402, %412 : vector<2x32xf32>
    %414 = arith.addf %411, %413 : vector<2x32xf32>
    %415 = math.tanh %414 : vector<2x32xf32>
    %cst_81 = arith.constant 1.000000e+00 : f32
    %416 = vector.broadcast %cst_81 : f32 to vector<2x32xf32>
    %417 = arith.subf %416, %410 : vector<2x32xf32>
    %418 = arith.mulf %417, %415 : vector<2x32xf32>
    %419 = arith.mulf %410, %364 : vector<2x32xf32>
    %420 = arith.addf %418, %419 : vector<2x32xf32>
    %421 = tpu.concatenate %420, %390 in 1 : vector<2x32xf32>, vector<2x32xf32> -> vector<2x64xf32>
    %cst_82 = arith.constant dense<0.000000e+00> : vector<2x128xf32>
    %422 = tpu.matmul %421, %51, %cst_82 {dimension_numbers = #tpu.dot_dimension_numbers<[1], [0], [0], [1], [0, 0, 1, 1], [], []>} : vector<2x64xf32>, vector<64x128xf32>, vector<2x128xf32> -> vector<2x128xf32>
    %423 = vector.broadcast %52 : vector<1x128xf32> to vector<2x128xf32>
    %424 = arith.addf %422, %423 : vector<2x128xf32>
    %425 = vector.extract_strided_slice %424 {offsets = [0, 0], sizes = [2, 32], strides = [1, 1]} : vector<2x128xf32> to vector<2x32xf32>
    %426 = arith.negf %425 : vector<2x32xf32>
    %427 = math.exp %426 : vector<2x32xf32>
    %cst_83 = arith.constant 1.000000e+00 : f32
    %428 = vector.broadcast %cst_83 : f32 to vector<2x32xf32>
    %429 = arith.addf %428, %427 : vector<2x32xf32>
    %430 = arith.divf %428, %429 : vector<2x32xf32>
    %431 = vector.extract_strided_slice %424 {offsets = [0, 32], sizes = [2, 32], strides = [1, 1]} : vector<2x128xf32> to vector<2x32xf32>
    %432 = arith.negf %431 : vector<2x32xf32>
    %433 = math.exp %432 : vector<2x32xf32>
    %cst_84 = arith.constant 1.000000e+00 : f32
    %434 = vector.broadcast %cst_84 : f32 to vector<2x32xf32>
    %435 = arith.addf %434, %433 : vector<2x32xf32>
    %436 = arith.divf %434, %435 : vector<2x32xf32>
    %437 = vector.extract_strided_slice %424 {offsets = [0, 64], sizes = [2, 32], strides = [1, 1]} : vector<2x128xf32> to vector<2x32xf32>
    %438 = vector.extract_strided_slice %424 {offsets = [0, 96], sizes = [2, 32], strides = [1, 1]} : vector<2x128xf32> to vector<2x32xf32>
    %439 = arith.mulf %430, %438 : vector<2x32xf32>
    %440 = arith.addf %437, %439 : vector<2x32xf32>
    %441 = math.tanh %440 : vector<2x32xf32>
    %cst_85 = arith.constant 1.000000e+00 : f32
    %442 = vector.broadcast %cst_85 : f32 to vector<2x32xf32>
    %443 = arith.subf %442, %436 : vector<2x32xf32>
    %444 = arith.mulf %443, %441 : vector<2x32xf32>
    %445 = arith.mulf %436, %390 : vector<2x32xf32>
    %446 = arith.addf %444, %445 : vector<2x32xf32>
    %447 = vector.extract_strided_slice %48 {offsets = [14, 0], sizes = [2, 128], strides = [1, 1]} : vector<16x128xf32> to vector<2x128xf32>
    %cst_86 = arith.constant dense<0.000000e+00> : vector<2x128xf32>
    %448 = tpu.matmul %420, %49, %cst_86 {dimension_numbers = #tpu.dot_dimension_numbers<[1], [0], [0], [1], [0, 0, 1, 1], [], []>} : vector<2x32xf32>, vector<32x128xf32>, vector<2x128xf32> -> vector<2x128xf32>
    %449 = vector.broadcast %50 : vector<1x128xf32> to vector<2x128xf32>
    %450 = arith.addf %448, %449 : vector<2x128xf32>
    %451 = vector.extract_strided_slice %447 {offsets = [0, 0], sizes = [2, 32], strides = [1, 1]} : vector<2x128xf32> to vector<2x32xf32>
    %452 = vector.extract_strided_slice %450 {offsets = [0, 0], sizes = [2, 32], strides = [1, 1]} : vector<2x128xf32> to vector<2x32xf32>
    %453 = arith.addf %451, %452 : vector<2x32xf32>
    %454 = arith.negf %453 : vector<2x32xf32>
    %455 = math.exp %454 : vector<2x32xf32>
    %cst_87 = arith.constant 1.000000e+00 : f32
    %456 = vector.broadcast %cst_87 : f32 to vector<2x32xf32>
    %457 = arith.addf %456, %455 : vector<2x32xf32>
    %458 = arith.divf %456, %457 : vector<2x32xf32>
    %459 = vector.extract_strided_slice %447 {offsets = [0, 32], sizes = [2, 32], strides = [1, 1]} : vector<2x128xf32> to vector<2x32xf32>
    %460 = vector.extract_strided_slice %450 {offsets = [0, 32], sizes = [2, 32], strides = [1, 1]} : vector<2x128xf32> to vector<2x32xf32>
    %461 = arith.addf %459, %460 : vector<2x32xf32>
    %462 = arith.negf %461 : vector<2x32xf32>
    %463 = math.exp %462 : vector<2x32xf32>
    %cst_88 = arith.constant 1.000000e+00 : f32
    %464 = vector.broadcast %cst_88 : f32 to vector<2x32xf32>
    %465 = arith.addf %464, %463 : vector<2x32xf32>
    %466 = arith.divf %464, %465 : vector<2x32xf32>
    %467 = vector.extract_strided_slice %447 {offsets = [0, 64], sizes = [2, 32], strides = [1, 1]} : vector<2x128xf32> to vector<2x32xf32>
    %468 = vector.extract_strided_slice %450 {offsets = [0, 64], sizes = [2, 32], strides = [1, 1]} : vector<2x128xf32> to vector<2x32xf32>
    %469 = arith.mulf %458, %468 : vector<2x32xf32>
    %470 = arith.addf %467, %469 : vector<2x32xf32>
    %471 = math.tanh %470 : vector<2x32xf32>
    %cst_89 = arith.constant 1.000000e+00 : f32
    %472 = vector.broadcast %cst_89 : f32 to vector<2x32xf32>
    %473 = arith.subf %472, %466 : vector<2x32xf32>
    %474 = arith.mulf %473, %471 : vector<2x32xf32>
    %475 = arith.mulf %466, %420 : vector<2x32xf32>
    %476 = arith.addf %474, %475 : vector<2x32xf32>
    %477 = tpu.concatenate %476, %446 in 1 : vector<2x32xf32>, vector<2x32xf32> -> vector<2x64xf32>
    %cst_90 = arith.constant dense<0.000000e+00> : vector<2x128xf32>
    %478 = tpu.matmul %477, %51, %cst_90 {dimension_numbers = #tpu.dot_dimension_numbers<[1], [0], [0], [1], [0, 0, 1, 1], [], []>} : vector<2x64xf32>, vector<64x128xf32>, vector<2x128xf32> -> vector<2x128xf32>
    %479 = vector.broadcast %52 : vector<1x128xf32> to vector<2x128xf32>
    %480 = arith.addf %478, %479 : vector<2x128xf32>
    %481 = vector.extract_strided_slice %480 {offsets = [0, 0], sizes = [2, 32], strides = [1, 1]} : vector<2x128xf32> to vector<2x32xf32>
    %482 = arith.negf %481 : vector<2x32xf32>
    %483 = math.exp %482 : vector<2x32xf32>
    %cst_91 = arith.constant 1.000000e+00 : f32
    %484 = vector.broadcast %cst_91 : f32 to vector<2x32xf32>
    %485 = arith.addf %484, %483 : vector<2x32xf32>
    %486 = arith.divf %484, %485 : vector<2x32xf32>
    %487 = vector.extract_strided_slice %480 {offsets = [0, 32], sizes = [2, 32], strides = [1, 1]} : vector<2x128xf32> to vector<2x32xf32>
    %488 = arith.negf %487 : vector<2x32xf32>
    %489 = math.exp %488 : vector<2x32xf32>
    %cst_92 = arith.constant 1.000000e+00 : f32
    %490 = vector.broadcast %cst_92 : f32 to vector<2x32xf32>
    %491 = arith.addf %490, %489 : vector<2x32xf32>
    %492 = arith.divf %490, %491 : vector<2x32xf32>
    %493 = vector.extract_strided_slice %480 {offsets = [0, 64], sizes = [2, 32], strides = [1, 1]} : vector<2x128xf32> to vector<2x32xf32>
    %494 = vector.extract_strided_slice %480 {offsets = [0, 96], sizes = [2, 32], strides = [1, 1]} : vector<2x128xf32> to vector<2x32xf32>
    %495 = arith.mulf %486, %494 : vector<2x32xf32>
    %496 = arith.addf %493, %495 : vector<2x32xf32>
    %497 = math.tanh %496 : vector<2x32xf32>
    %cst_93 = arith.constant 1.000000e+00 : f32
    %498 = vector.broadcast %cst_93 : f32 to vector<2x32xf32>
    %499 = arith.subf %498, %492 : vector<2x32xf32>
    %500 = arith.mulf %499, %497 : vector<2x32xf32>
    %501 = arith.mulf %492, %446 : vector<2x32xf32>
    %502 = arith.addf %500, %501 : vector<2x32xf32>
    %503 = tpu.concatenate %110, %166, %222, %278, %334, %390, %446, %502 in 0 : vector<2x32xf32>, vector<2x32xf32>, vector<2x32xf32>, vector<2x32xf32>, vector<2x32xf32>, vector<2x32xf32>, vector<2x32xf32>, vector<2x32xf32> -> vector<16x32xf32>
    %c112 = arith.constant 112 : index
    %c0_94 = arith.constant 0 : index
    %504 = vector.load %arg3[%c112, %c0_94] : memref<336x128xf32, #tpu.memory_space<vmem>>, vector<32x128xf32>
    %cst_95 = arith.constant dense<0.000000e+00> : vector<16x128xf32>
    %505 = tpu.matmul %503, %504, %cst_95 {dimension_numbers = #tpu.dot_dimension_numbers<[1], [0], [0], [1], [0, 0, 1, 1], [], []>} : vector<16x32xf32>, vector<32x128xf32>, vector<16x128xf32> -> vector<16x128xf32>
    %c144 = arith.constant 144 : index
    %c0_96 = arith.constant 0 : index
    %506 = vector.load %arg3[%c144, %c0_96] : memref<336x128xf32, #tpu.memory_space<vmem>>, vector<1x128xf32>
    %507 = vector.broadcast %506 : vector<1x128xf32> to vector<16x128xf32>
    %508 = arith.addf %505, %507 : vector<16x128xf32>
    %509 = math.tanh %508 : vector<16x128xf32>
    %c152 = arith.constant 152 : index
    %c0_97 = arith.constant 0 : index
    %510 = vector.load %arg3[%c152, %c0_97] : memref<336x128xf32, #tpu.memory_space<vmem>>, vector<128x128xf32>
    %cst_98 = arith.constant dense<0.000000e+00> : vector<16x128xf32>
    %511 = tpu.matmul %509, %510, %cst_98 {dimension_numbers = #tpu.dot_dimension_numbers<[1], [0], [0], [1], [0, 0, 1, 1], [], []>} : vector<16x128xf32>, vector<128x128xf32>, vector<16x128xf32> -> vector<16x128xf32>
    %c280 = arith.constant 280 : index
    %c0_99 = arith.constant 0 : index
    %512 = vector.load %arg3[%c280, %c0_99] : memref<336x128xf32, #tpu.memory_space<vmem>>, vector<1x128xf32>
    %513 = vector.broadcast %512 : vector<1x128xf32> to vector<16x128xf32>
    %514 = arith.addf %511, %513 : vector<16x128xf32>
    %515 = math.tanh %514 : vector<16x128xf32>
    %516 = vector.extract_strided_slice %515 {offsets = [0, 0], sizes = [16, 1], strides = [1, 1]} : vector<16x128xf32> to vector<16x1xf32>
    %517 = math.exp %516 : vector<16x1xf32>
    %518 = vector.shape_cast %517 : vector<16x1xf32> to vector<16x1xf32>
    %519 = vector.broadcast %518 : vector<16x1xf32> to vector<16x32xf32>
    %c288 = arith.constant 288 : index
    %c0_100 = arith.constant 0 : index
    %520 = vector.load %arg3[%c288, %c0_100] : memref<336x128xf32, #tpu.memory_space<vmem>>, vector<2x128xf32>
    %521 = vector.extract_strided_slice %520 {offsets = [0, 0], sizes = [2, 16], strides = [1, 1]} : vector<2x128xf32> to vector<2x16xf32>
    %522 = arith.mulf %503, %519 : vector<16x32xf32>
    %cst_101 = arith.constant dense<0.000000e+00> : vector<2x32xf32>
    %523 = tpu.matmul %521, %522, %cst_101 {dimension_numbers = #tpu.dot_dimension_numbers<[1], [0], [0], [1], [0, 0, 1, 1], [], []>} : vector<2x16xf32>, vector<16x32xf32>, vector<2x32xf32> -> vector<2x32xf32>
    %cst_102 = arith.constant dense<0.000000e+00> : vector<2x32xf32>
    %524 = tpu.matmul %521, %519, %cst_102 {dimension_numbers = #tpu.dot_dimension_numbers<[1], [0], [0], [1], [0, 0, 1, 1], [], []>} : vector<2x16xf32>, vector<16x32xf32>, vector<2x32xf32> -> vector<2x32xf32>
    %525 = tpu.reciprocal %524 {approx = true} : vector<2x32xf32> -> vector<2x32xf32>
    %526 = arith.mulf %523, %525 : vector<2x32xf32>
    %c296 = arith.constant 296 : index
    %c0_103 = arith.constant 0 : index
    %527 = vector.load %arg3[%c296, %c0_103] : memref<336x128xf32, #tpu.memory_space<vmem>>, vector<32x128xf32>
    %cst_104 = arith.constant dense<0.000000e+00> : vector<2x128xf32>
    %528 = tpu.matmul %526, %527, %cst_104 {dimension_numbers = #tpu.dot_dimension_numbers<[1], [0], [0], [1], [0, 0, 1, 1], [], []>} : vector<2x32xf32>, vector<32x128xf32>, vector<2x128xf32> -> vector<2x128xf32>
    %c328 = arith.constant 328 : index
    %c0_105 = arith.constant 0 : index
    %529 = vector.load %arg3[%c328, %c0_105] : memref<336x128xf32, #tpu.memory_space<vmem>>, vector<1x128xf32>
    %530 = vector.broadcast %529 : vector<1x128xf32> to vector<2x128xf32>
    %531 = arith.addf %528, %530 : vector<2x128xf32>
    %c0_106 = arith.constant 0 : index
    %c0_107 = arith.constant 0 : index
    %c0_108 = arith.constant 0 : index
    %532 = vector.load %arg4[%c0_106, %c0_107, %c0_108] : memref<1x2x128xf32, #tpu.memory_space<vmem>>, vector<1x2x128xf32>
    %533 = vector.shape_cast %532 : vector<1x2x128xf32> to vector<2x128xf32>
    %534 = vector.shape_cast %531 : vector<2x128xf32> to vector<1x2x128xf32>
    tpu.vector_store %arg4[%c0_106, %c0_107, %c0_108], %534 {strides = array<i32>} : memref<1x2x128xf32, #tpu.memory_space<vmem>>, vector<1x2x128xf32>,
    return
  }
  func.func @transform_0(%arg0: i32) -> (i32, i32, i32) {
    %c0_i32 = arith.constant 0 : i32
    %c0_i32_0 = arith.constant 0 : i32
    %c0_i32_1 = arith.constant 0 : i32
    return %arg0, %c0_i32, %c0_i32_0 : i32, i32, i32
  }
  func.func @transform_1(%arg0: i32) -> (i32, i32) {
    %c0_i32 = arith.constant 0 : i32
    %c0_i32_0 = arith.constant 0 : i32
    %c0_i32_1 = arith.constant 0 : i32
    return %c0_i32, %c0_i32_0 : i32, i32
  }
  func.func @transform_2(%arg0: i32) -> (i32, i32) {
    %c0_i32 = arith.constant 0 : i32
    %c0_i32_0 = arith.constant 0 : i32
    %c0_i32_1 = arith.constant 0 : i32
    return %c0_i32, %c0_i32_0 : i32, i32
  }
  func.func @transform_3(%arg0: i32) -> (i32, i32, i32) {
    %c0_i32 = arith.constant 0 : i32
    %c0_i32_0 = arith.constant 0 : i32
    %c0_i32_1 = arith.constant 0 : i32
    return %arg0, %c0_i32, %c0_i32_0 : i32, i32, i32
  }
}

</mosaic_0001>

<llo_original>
// kernel: attnsense_forward.1
$region0: #{attnsense_forward.1}
  #allocation0 [shape = 'u32[]', space=smem, size = 0x4, offset = 0x4, fixed_abs, tag = 'smem constant byte address 0x4 - core index']
  #allocation1 [shape = 'u32[144,128]{1,0:T(1,128)}', space=vmem, size = 0x12000, scoped, tag = 'internal scratch']
  %s0 = inlined_call_operand.hbm [shape: f32[2,16,256], index: 0, kind: input, shape index: {}]
  %s1 = inlined_call_operand.hbm [shape: f32[936,128], index: 1, kind: input, shape index: {}]
  %s2 = inlined_call_operand.hbm [shape: f32[336,128], index: 2, kind: input, shape index: {}]
  %s3 = inlined_call_operand.vmem [shape: f32[2,2,128], index: 3, kind: output, shape index: {}]
  %s4 = sld [smem:[#allocation0]]
  $region57: #{attnsense_forward.1} parent=0
    _
  %s6 = ssub.s32 1, %s4
  %s7 = scalar_select 0, %s6, %s4
  $region1: #{attnsense_forward.1} parent=0
    #allocation2 [shape = 'u8[32768]{0}', space=vmem, size = 0x8000, scoped, tag = 'input window, operand 0']
    #allocation3 [shape = 's32[2]{0}', space=sflag, size = 0x8, scoped, tag = 'scoped memory for attnsense_forward.1']
    #allocation4 [shape = 'u8[479232]{0}', space=vmem, size = 0x75000, scoped, tag = 'input window, operand 1, single buffered']
    #allocation5 [shape = 's32[1]{0}', space=sflag, size = 0x4, scoped, tag = 'scoped memory for attnsense_forward.1']
    #allocation6 [shape = 'u8[172032]{0}', space=vmem, size = 0x2a000, scoped, tag = 'input window, operand 2, single buffered']
    %8 = vsyncpa [#allocation3], 0
    %s9 = scalar_lea.sflag [#allocation3], 1
    %10 = vsyncpa %s9, 0
    %11 = vsyncpa [#allocation5], 0
    loop: start=0, step=1, limit=4
    $region2: #{attnsense_forward.1} parent=1 // loop_pre_header
      _
    $region3: #{attnsense_forward.1} parent=1 // loop_header
      %s13 = sphi 0, %s17
      %p14 = scmp.ge.s32.totalorder %s13, 4
      %s23 = sphi 0, %s25
      %s26 = sphi 0, %s23
      %s27 = sphi 0, %s26
      %s43 = sphi 0, %s27
      %s47 = sphi 0, %s47
      %s49 = sphi 0, %s47
      %s50 = sphi 0, %s49
      %s64 = sphi 0, %s50
      %s68 = sphi 0, %s68
      %s70 = sphi 0, %s68
      %s71 = sphi 0, %s70
      %s85 = sphi 0, %s71
      %s91 = sphi 0, %s93
      %s94 = sphi 0, %s91
      %s95 = sphi 0, %s94
      %s111 = sphi 0, %s95
    $region4: #{attnsense_forward.1} parent=1 // loop_header_branch
      %16 = sbr.rel (%p14) target = $region8
    $region5: #{attnsense_forward.1} parent=1 // loop_body
      %s18 = ssub.s32 %s13, 1
      %s19 = ssub.s32 %s13, 2
      %s20 = sadd.s32 %s13, 1
      %s21 = ssub.s32 %s13, %s20
      %p22 = scmp.eq.s32.totalorder %s21, 0
      %s24 = sadd.s32 %s23, 1
      %s25 = scalar_select %p22, %s23, %s24
      %p28 = pneg %p22
      %p29 = scmp.eq.s32.totalorder %s13, 1
      %p30 = por %p28, %p29
      %p31 = scmp.ne.s32.totalorder %s23, %s26
      %p32 = scmp.eq.s32.totalorder %s13, 0
      %p33 = por %p31, %p32
      %p34 = scmp.ne.s32.totalorder %s23, %s26
      %p35 = scmp.eq.s32.totalorder %s18, 1
      %p36 = por %p34, %p35
      %p37 = scmp.ne.s32.totalorder %s26, %s27
      %p38 = scmp.eq.s32.totalorder %s18, 0
      %p39 = por %p37, %p38
      %p40 = scmp.ne.s32.totalorder %s26, %s27
      %p41 = scmp.eq.s32.totalorder %s19, 1
      %p42 = por %p40, %p41
      %p44 = scmp.ne.s32.totalorder %s27, %s43
      %p45 = scmp.eq.s32.totalorder %s19, 0
      %p46 = por %p44, %p45
      %s48 = sadd.s32 %s47, 1
      %p51 = scmp.eq.s32.totalorder %s13, 1
      %p52 = scmp.ne.s32.totalorder %s47, %s49
      %p53 = scmp.eq.s32.totalorder %s13, 0
      %p54 = por %p52, %p53
      %p55 = scmp.ne.s32.totalorder %s47, %s49
      %p56 = scmp.eq.s32.totalorder %s18, 1
      %p57 = por %p55, %p56
      %p58 = scmp.ne.s32.totalorder %s49, %s50
      %p59 = scmp.eq.s32.totalorder %s18, 0
      %p60 = por %p58, %p59
      %p61 = scmp.ne.s32.totalorder %s49, %s50
      %p62 = scmp.eq.s32.totalorder %s19, 1
      %p63 = por %p61, %p62
      %p65 = scmp.ne.s32.totalorder %s50, %s64
      %p66 = scmp.eq.s32.totalorder %s19, 0
      %p67 = por %p65, %p66
      %s69 = sadd.s32 %s68, 1
      %p72 = scmp.eq.s32.totalorder %s13, 1
      %p73 = scmp.ne.s32.totalorder %s68, %s70
      %p74 = scmp.eq.s32.totalorder %s13, 0
      %p75 = por %p73, %p74
      %p76 = scmp.ne.s32.totalorder %s68, %s70
      %p77 = scmp.eq.s32.totalorder %s18, 1
      %p78 = por %p76, %p77
      %p79 = scmp.ne.s32.totalorder %s70, %s71
      %p80 = scmp.eq.s32.totalorder %s18, 0
      %p81 = por %p79, %p80
      %p82 = scmp.ne.s32.totalorder %s70, %s71
      %p83 = scmp.eq.s32.totalorder %s19, 1
      %p84 = por %p82, %p83
      %p86 = scmp.ne.s32.totalorder %s71, %s85
      %p87 = scmp.eq.s32.totalorder %s19, 0
      %p88 = por %p86, %p87
      %s89 = ssub.s32 %s13, %s20
      %p90 = scmp.eq.s32.totalorder %s89, 0
      %s92 = sadd.s32 %s91, 1
      %s93 = scalar_select %p90, %s91, %s92
      %p96 = pneg %p90
      %p97 = scmp.eq.s32.totalorder %s13, 1
      %p98 = por %p96, %p97
      %p99 = scmp.ne.s32.totalorder %s91, %s94
      %p100 = scmp.eq.s32.totalorder %s13, 0
      %p101 = por %p99, %p100
      %p102 = scmp.ne.s32.totalorder %s91, %s94
      %p103 = scmp.eq.s32.totalorder %s18, 1
      %p104 = por %p102, %p103
      %p105 = scmp.ne.s32.totalorder %s94, %s95
      %p106 = scmp.eq.s32.totalorder %s18, 0
      %p107 = por %p105, %p106
      %p108 = scmp.ne.s32.totalorder %s94, %s95
      %p109 = scmp.eq.s32.totalorder %s19, 1
      %p110 = por %p108, %p109
      %p112 = scmp.ne.s32.totalorder %s95, %s111
      %p113 = scmp.eq.s32.totalorder %s19, 0
      %p114 = por %p112, %p113
      %p115 = scmp.le.s32.totalorder 1, %s13
      %p116 = scmp.lt.s32.totalorder %s13, 3
      %p117 = pnand %p115, %p116
      %p118 = pneg %p117
      // Predicated region
      $region9: #{attnsense_forward.1} parent=5 // pred_check
        _
      $region10: #{attnsense_forward.1} parent=5 // pred_check_branch
        %120 = sbr.rel (%p117) target = $region12
      $region11: #{attnsense_forward.1} parent=5 // pred_region
        %s121 = ssub.s32 %s13, 1
        // Predicated region
        $region13: #{attnsense_forward.1} parent=11 // pred_check
          %p122 = pneg %p60
        $region14: #{attnsense_forward.1} parent=11 // pred_check_branch
          %124 = sbr.rel (%p122) target = $region16
        $region15: #{attnsense_forward.1} parent=11 // pred_region
          %s126 = ssub.s32 14976, 14976
          %127 = vsyncadd [#allocation5], %s126
          %s128 = sshll.u32 [#allocation4], 4
          %s129 = int_to_ptr.vmem [resolvable:$true] %s128
          %134 = dma.hbm_to_vmem [thread:$0]  %s1, 14976, %s129, [#allocation5], 128, 128, 8
        $region16: #{attnsense_forward.1} parent=11 // pred_fallthru
          _
        // Predicated region
        $region17: #{attnsense_forward.1} parent=11 // pred_check
          %p135 = pneg %p81
        $region18: #{attnsense_forward.1} parent=11 // pred_check_branch
          %137 = sbr.rel (%p135) target = $region20
        $region19: #{attnsense_forward.1} parent=11 // pred_region
          %s139 = ssub.s32 5376, 5376
          %140 = vsyncadd [#allocation5], %s139
          %s141 = sshll.u32 [#allocation6], 4
          %s142 = int_to_ptr.vmem [resolvable:$true] %s141
          %147 = dma.hbm_to_vmem [thread:$0]  %s2, 5376, %s142, [#allocation5], 128, 128, 8
        $region20: #{attnsense_forward.1} parent=11 // pred_fallthru
          _
      $region12: #{attnsense_forward.1} parent=5 // pred_fallthru
        _
      %p148 = scmp.lt.s32.totalorder %s13, 2
      // Predicated region
      $region21: #{attnsense_forward.1} parent=5 // pred_check
        %p149 = pneg %p148
      $region22: #{attnsense_forward.1} parent=5 // pred_check_branch
        %151 = sbr.rel (%p149) target = $region24
      $region23: #{attnsense_forward.1} parent=5 // pred_region
        // Predicated region
        $region25: #{attnsense_forward.1} parent=23 // pred_check
          %p152 = pneg %p33
        $region26: #{attnsense_forward.1} parent=23 // pred_check_branch
          %154 = sbr.rel (%p152) target = $region28
        $region27: #{attnsense_forward.1} parent=23 // pred_region
          %s155 = sand.u32 %s23, 1
          %s156 = scalar_lea.sflag [#allocation3], %s155
          %s157 = sand.u32 %s23, 1
          %s158 = smul.addr %s157, 32
          %s159 = scalar_lea.vmem [#allocation2], %s158
          %s161 = ssub.s32 512, 512
          %162 = vsyncadd %s156, %s161
          %s163 = smul.addr %s13, 4
          %s164 = smul.addr %s163, 128
          %s165 = scalar_lea.hbm %s0, %s164
          %s166 = sshll.u32 %s159, 4
          %s167 = int_to_ptr.vmem [resolvable:$true] %s166
          %172 = dma.hbm_to_vmem [thread:$0]  %s165, 512, %s167, %s156, 256, 256, 16
        $region28: #{attnsense_forward.1} parent=23 // pred_fallthru
          _
      $region24: #{attnsense_forward.1} parent=5 // pred_fallthru
        _
      %p173 = scmp.le.s32.totalorder 1, %s13
      %p174 = scmp.lt.s32.totalorder %s13, 3
      %p175 = pnand %p173, %p174
      %p176 = pneg %p175
      // Predicated region
      $region29: #{attnsense_forward.1} parent=5 // pred_check
        _
      $region30: #{attnsense_forward.1} parent=5 // pred_check_branch
        %178 = sbr.rel (%p175) target = $region32
      $region31: #{attnsense_forward.1} parent=5 // pred_region
        %s179 = ssub.s32 %s13, 1
        %s180 = sand.u32 %s26, 1
        %s181 = scalar_lea.sflag [#allocation3], %s180
        %s182 = sand.u32 %s26, 1
        %s183 = smul.addr %s182, 32
        %s184 = scalar_lea.vmem [#allocation2], %s183
        // Predicated region
        $region33: #{attnsense_forward.1} parent=31 // pred_check
          %p185 = pneg %p39
        $region34: #{attnsense_forward.1} parent=31 // pred_check_branch
          %187 = sbr.rel (%p185) target = $region36
        $region35: #{attnsense_forward.1} parent=31 // pred_region
          %188 = dma.done %s181, 512
        $region36: #{attnsense_forward.1} parent=31 // pred_fallthru
          _
        // Predicated region
        $region37: #{attnsense_forward.1} parent=31 // pred_check
          %p189 = pneg %p60
        $region38: #{attnsense_forward.1} parent=31 // pred_check_branch
          %191 = sbr.rel (%p189) target = $region40
        $region39: #{attnsense_forward.1} parent=31 // pred_region
          %192 = dma.done [#allocation5], 14976
        $region40: #{attnsense_forward.1} parent=31 // pred_fallthru
          _
        // Predicated region
        $region41: #{attnsense_forward.1} parent=31 // pred_check
          %p193 = pneg %p81
        $region42: #{attnsense_forward.1} parent=31 // pred_check_branch
          %195 = sbr.rel (%p193) target = $region44
        $region43: #{attnsense_forward.1} parent=31 // pred_region
          %196 = dma.done [#allocation5], 5376
        $region44: #{attnsense_forward.1} parent=31 // pred_fallthru
          _
        %s197 = sand.u32 %s26, 1
        %s198 = scalar_lea.sflag [#allocation3], %s197
        %s199 = sand.u32 %s26, 1
        %s200 = smul.addr %s199, 32
        %s201 = scalar_lea.vmem [#allocation2], %s200
        %p202 = pneg %p39
        %p203 = pneg %p36
        %p204 = pneg %p60
        %p205 = pneg %p57
        %p206 = pneg %p81
        %p207 = pneg %p78
        %p208 = pneg %p107
        %p209 = pneg %p104
        %p210 = scmp.lt.s32.totalorder %s18, 1
        %s211 = scalar_select %p210, %s18, 1
        %s212 = smul.addr %s211, 2
        %s213 = scalar_lea.vmem %s3, %s212
        %p214 = scmp.lt.s32.totalorder %s18, 1
        %s215 = scalar_select %p214, %s18, 1
        %s216 = smul.addr %s215, 2
        %s217 = scalar_lea.vmem %s3, %s216
        %v218 = vld [vmem:[%s184] sm:$0xff]
        %v219 = vld [vmem:[%s184 + $0x8] sm:$0xff]
        %v220 = vld [vmem:[%s184 + $0x10] sm:$0xff]
        %v221 = vld [vmem:[%s184 + $0x18] sm:$0xff]
        %v222 = vld [vmem:[#allocation4] sm:$0xff]
        %v223 = vld [vmem:[#allocation4 + $0x8] sm:$0xff]
        %v224 = vld [vmem:[#allocation4 + $0x10] sm:$0xff]
        %v225 = vld [vmem:[#allocation4 + $0x18] sm:$0xff]
        %v226 = vld [vmem:[#allocation4 + $0x20] sm:$0xff]
        %v227 = vld [vmem:[#allocation4 + $0x28] sm:$0xff]
        %v228 = vld [vmem:[#allocation4 + $0x30] sm:$0xff]
        %v229 = vld [vmem:[#allocation4 + $0x38] sm:$0xff]
        %v230 = vld [vmem:[#allocation4 + $0x40] sm:$0xff]
        %v231 = vld [vmem:[#allocation4 + $0x48] sm:$0xff]
        %v232 = vld [vmem:[#allocation4 + $0x50] sm:$0xff]
        %v233 = vld [vmem:[#allocation4 + $0x58] sm:$0xff]
        %v234 = vld [vmem:[#allocation4 + $0x60] sm:$0xff]
        %v235 = vld [vmem:[#allocation4 + $0x68] sm:$0xff]
        %v236 = vld [vmem:[#allocation4 + $0x70] sm:$0xff]
        %v237 = vld [vmem:[#allocation4 + $0x78] sm:$0xff]
        %v238 = vld [vmem:[#allocation4 + $0x80] sm:$0xff]
        %v239 = vld [vmem:[#allocation4 + $0x88] sm:$0xff]
        %v240 = vld [vmem:[#allocation4 + $0x90] sm:$0xff]
        %v241 = vld [vmem:[#allocation4 + $0x98] sm:$0xff]
        %v242 = vld [vmem:[#allocation4 + $0xa0] sm:$0xff]
        %v243 = vld [vmem:[#allocation4 + $0xa8] sm:$0xff]
        %v244 = vld [vmem:[#allocation4 + $0xb0] sm:$0xff]
        %v245 = vld [vmem:[#allocation4 + $0xb8] sm:$0xff]
        %v246 = vld [vmem:[#allocation4 + $0xc0] sm:$0xff]
        %v247 = vld [vmem:[#allocation4 + $0xc8] sm:$0xff]
        %v248 = vld [vmem:[#allocation4 + $0xd0] sm:$0xff]
        %v249 = vld [vmem:[#allocation4 + $0xd8] sm:$0xff]
        %v250 = vld [vmem:[#allocation4 + $0xe0] sm:$0xff]
        %v251 = vld [vmem:[#allocation4 + $0xe8] sm:$0xff]
        %v252 = vld [vmem:[#allocation4 + $0xf0] sm:$0xff]
        %v253 = vld [vmem:[#allocation4 + $0xf8] sm:$0xff]
        %v254 = vld [vmem:[#allocation4 + $0x100] sm:$0x1]
        %v255 = vlaneseq
        %v256 = vshrl.u32 %v255, 7
        %v257 = vsub.s32 0, %v256
        %v258 = vrot.slane %v254, %v257
        %259 = vmatprep.subr.mxu0 0.0
        %260 = vmatpush1.msra.mxu0 %v237
        %261 = vmatprep.subr.mxu0 0.0
        %262 = vmatpush1.msra.mxu0 %v236
        %263 = vmatprep.subr.mxu0 0.0
        %264 = vmatpush1.msra.mxu0 %v235
        %265 = vmatprep.subr.mxu0 0.0
        %266 = vmatpush1.msra.mxu0 %v234
        %267 = vmatprep.subr.mxu0 0.0
        %268 = vmatpush1.msra.mxu0 %v233
        %269 = vmatprep.subr.mxu0 0.0
        %270 = vmatpush1.msra.mxu0 %v232
        %271 = vmatprep.subr.mxu0 0.0
        %272 = vmatpush1.msra.mxu0 %v231
        %273 = vmatprep.subr.mxu0 0.0
        %274 = vmatpush1.msra.mxu0 %v230
        %275 = vmatprep.subr.mxu0 0.0
        %276 = vmatpush1.msra.mxu0 %v229
        %277 = vmatprep.subr.mxu0 0.0
        %278 = vmatpush1.msra.mxu0 %v228
        %279 = vmatprep.subr.mxu0 0.0
        %280 = vmatpush1.msra.mxu0 %v227
        %281 = vmatprep.subr.mxu0 0.0
        %282 = vmatpush1.msra.mxu0 %v226
        %283 = vmatprep.subr.mxu0 0.0
        %284 = vmatpush1.msra.mxu0 %v225
        %285 = vmatprep.subr.mxu0 0.0
        %286 = vmatpush1.msra.mxu0 %v224
        %287 = vmatprep.subr.mxu0 0.0
        %288 = vmatpush1.msra.mxu0 %v223
        %289 = vmatprep.subr.mxu0 0.0
        %290 = vmatpush1.msra.mxu0 %v222
        %291 = vmatprep.subr.mxu0 0.0
        %292 = vmatpush2.msra.mxu0 %v253
        %293 = vmatprep.subr.mxu0 0.0
        %294 = vmatpush2.msra.mxu0 %v252
        %295 = vmatprep.subr.mxu0 0.0
        %296 = vmatpush2.msra.mxu0 %v251
        %297 = vmatprep.subr.mxu0 0.0
        %298 = vmatpush2.msra.mxu0 %v250
        %299 = vmatprep.subr.mxu0 0.0
        %300 = vmatpush2.msra.mxu0 %v249
        %301 = vmatprep.subr.mxu0 0.0
        %302 = vmatpush2.msra.mxu0 %v248
        %303 = vmatprep.subr.mxu0 0.0
        %304 = vmatpush2.msra.mxu0 %v247
        %305 = vmatprep.subr.mxu0 0.0
        %306 = vmatpush2.msra.mxu0 %v246
        %307 = vmatprep.subr.mxu0 0.0
        %308 = vmatpush2.msra.mxu0 %v245
        %309 = vmatprep.subr.mxu0 0.0
        %310 = vmatpush2.msra.mxu0 %v244
        %311 = vmatprep.subr.mxu0 0.0
        %312 = vmatpush2.msra.mxu0 %v243
        %313 = vmatprep.subr.mxu0 0.0
        %314 = vmatpush2.msra.mxu0 %v242
        %315 = vmatprep.subr.mxu0 0.0
        %316 = vmatpush2.msra.mxu0 %v241
        %317 = vmatprep.subr.mxu0 0.0
        %318 = vmatpush2.msra.mxu0 %v240
        %319 = vmatprep.subr.mxu0 0.0
        %320 = vmatpush2.msra.mxu0 %v239
        %321 = vmatprep.subr.mxu0 0.0
        %322 = vmatpush2.msra.mxu0 %v238
        %323 = vmatprep.mubr.f32.mxu0 %v219
        %324 = vmatmul.mubr.f32.gmra.mxu0 %v218
        %v325 = vpop.f32.mrf.mxu0
        %v326 = vadd.f32 %v258, %v325
        %v327 = vpop.f32.mrf.mxu0
        %328 = vmatprep.mubr.f32.mxu0 %v221
        %329 = vmatmul.mubr.f32.gmra.mxu0 %v220
        %v330 = vpop.f32.mrf.mxu0
        %v331 = vadd.f32 %v258, %v330
        %v332 = vpop.f32.mrf.mxu0
        %333 = vdwg.mxu0
        %v334 = vmax.f32 %v326, 0.0
        %v335 = vmax.f32 %v331, 0.0
        %v336 = vld [vmem:[#allocation4 + $0x108] sm:$0xff]
        %v337 = vld [vmem:[#allocation4 + $0x110] sm:$0xff]
        %v338 = vld [vmem:[#allocation4 + $0x118] sm:$0xff]
        %v339 = vld [vmem:[#allocation4 + $0x120] sm:$0xff]
        %v340 = vld [vmem:[#allocation4 + $0x128] sm:$0xff]
        %v341 = vld [vmem:[#allocation4 + $0x130] sm:$0xff]
        %v342 = vld [vmem:[#allocation4 + $0x138] sm:$0xff]
        %v343 = vld [vmem:[#allocation4 + $0x140] sm:$0xff]
        %v344 = vld [vmem:[#allocation4 + $0x148] sm:$0xff]
        %v345 = vld [vmem:[#allocation4 + $0x150] sm:$0xff]
        %v346 = vld [vmem:[#allocation4 + $0x158] sm:$0xff]
        %v347 = vld [vmem:[#allocation4 + $0x160] sm:$0xff]
        %v348 = vld [vmem:[#allocation4 + $0x168] sm:$0xff]
        %v349 = vld [vmem:[#allocation4 + $0x170] sm:$0xff]
        %v350 = vld [vmem:[#allocation4 + $0x178] sm:$0xff]
        %v351 = vld [vmem:[#allocation4 + $0x180] sm:$0xff]
        %v352 = vld [vmem:[#allocation4 + $0x188] sm:$0x1]
        %v353 = vlaneseq
        %v354 = vshrl.u32 %v353, 7
        %v355 = vsub.s32 0, %v354
        %v356 = vrot.slane %v352, %v355
        %357 = vmatprep.subr.mxu0 0.0
        %358 = vmatpush1.msra.mxu0 %v351
        %359 = vmatprep.subr.mxu0 0.0
        %360 = vmatpush1.msra.mxu0 %v350
        %361 = vmatprep.subr.mxu0 0.0
        %362 = vmatpush1.msra.mxu0 %v349
        %363 = vmatprep.subr.mxu0 0.0
        %364 = vmatpush1.msra.mxu0 %v348
        %365 = vmatprep.subr.mxu0 0.0
        %366 = vmatpush1.msra.mxu0 %v347
        %367 = vmatprep.subr.mxu0 0.0
        %368 = vmatpush1.msra.mxu0 %v346
        %369 = vmatprep.subr.mxu0 0.0
        %370 = vmatpush1.msra.mxu0 %v345
        %371 = vmatprep.subr.mxu0 0.0
        %372 = vmatpush1.msra.mxu0 %v344
        %373 = vmatprep.subr.mxu0 0.0
        %374 = vmatpush1.msra.mxu0 %v343
        %375 = vmatprep.subr.mxu0 0.0
        %376 = vmatpush1.msra.mxu0 %v342
        %377 = vmatprep.subr.mxu0 0.0
        %378 = vmatpush1.msra.mxu0 %v341
        %379 = vmatprep.subr.mxu0 0.0
        %380 = vmatpush1.msra.mxu0 %v340
        %381 = vmatprep.subr.mxu0 0.0
        %382 = vmatpush1.msra.mxu0 %v339
        %383 = vmatprep.subr.mxu0 0.0
        %384 = vmatpush1.msra.mxu0 %v338
        %385 = vmatprep.subr.mxu0 0.0
        %386 = vmatpush1.msra.mxu0 %v337
        %387 = vmatprep.subr.mxu0 0.0
        %388 = vmatpush1.msra.mxu0 %v336
        %389 = vmatprep.subr.mxu0 0.0
        %390 = vmatpush2.msra.mxu0 0.0
        %391 = vmatprep.subr.mxu0 0.0
        %392 = vmatpush2.msra.mxu0 0.0
        %393 = vmatprep.subr.mxu0 0.0
        %394 = vmatpush2.msra.mxu0 0.0
        %395 = vmatprep.subr.mxu0 0.0
        %396 = vmatpush2.msra.mxu0 0.0
        %397 = vmatprep.subr.mxu0 0.0
        %398 = vmatpush2.msra.mxu0 0.0
        %399 = vmatprep.subr.mxu0 0.0
        %400 = vmatpush2.msra.mxu0 0.0
        %401 = vmatprep.subr.mxu0 0.0
        %402 = vmatpush2.msra.mxu0 0.0
        %403 = vmatprep.subr.mxu0 0.0
        %404 = vmatpush2.msra.mxu0 0.0
        %405 = vmatprep.subr.mxu0 0.0
        %406 = vmatpush2.msra.mxu0 0.0
        %407 = vmatprep.subr.mxu0 0.0
        %408 = vmatpush2.msra.mxu0 0.0
        %409 = vmatprep.subr.mxu0 0.0
        %410 = vmatpush2.msra.mxu0 0.0
        %411 = vmatprep.subr.mxu0 0.0
        %412 = vmatpush2.msra.mxu0 0.0
        %413 = vmatprep.subr.mxu0 0.0
        %414 = vmatpush2.msra.mxu0 0.0
        %415 = vmatprep.subr.mxu0 0.0
        %416 = vmatpush2.msra.mxu0 0.0
        %417 = vmatprep.subr.mxu0 0.0
        %418 = vmatpush2.msra.mxu0 0.0
        %419 = vmatprep.subr.mxu0 0.0
        %420 = vmatpush2.msra.mxu0 0.0
        %421 = vmatprep.mubr.f32.mxu0 0.0
        %422 = vmatmul.mubr.f32.gmra.mxu0 %v334
        %v423 = vpop.f32.mrf.mxu0
        %v424 = vadd.f32 %v356, %v423
        %v425 = vpop.f32.mrf.mxu0
        %426 = vmatprep.mubr.f32.mxu0 0.0
        %427 = vmatmul.mubr.f32.gmra.mxu0 %v335
        %v428 = vpop.f32.mrf.mxu0
        %v429 = vadd.f32 %v356, %v428
        %v430 = vpop.f32.mrf.mxu0
        %431 = vdwg.mxu0
        %v432 = vmax.f32 %v424, 0.0
        %v433 = vmax.f32 %v429, 0.0
        %v434 = vld [vmem:[#allocation4 + $0x190] sm:$0xff]
        %v435 = vld [vmem:[#allocation4 + $0x198] sm:$0xff]
        %v436 = vld [vmem:[#allocation4 + $0x1a0] sm:$0xff]
        %v437 = vld [vmem:[#allocation4 + $0x1a8] sm:$0xff]
        %v438 = vld [vmem:[#allocation4 + $0x1b0] sm:$0xff]
        %v439 = vld [vmem:[#allocation4 + $0x1b8] sm:$0xff]
        %v440 = vld [vmem:[#allocation4 + $0x1c0] sm:$0xff]
        %v441 = vld [vmem:[#allocation4 + $0x1c8] sm:$0xff]
        %v442 = vld [vmem:[#allocation4 + $0x1d0] sm:$0xff]
        %v443 = vld [vmem:[#allocation4 + $0x1d8] sm:$0xff]
        %v444 = vld [vmem:[#allocation4 + $0x1e0] sm:$0xff]
        %v445 = vld [vmem:[#allocation4 + $0x1e8] sm:$0xff]
        %v446 = vld [vmem:[#allocation4 + $0x1f0] sm:$0xff]
        %v447 = vld [vmem:[#allocation4 + $0x1f8] sm:$0xff]
        %v448 = vld [vmem:[#allocation4 + $0x200] sm:$0xff]
        %v449 = vld [vmem:[#allocation4 + $0x208] sm:$0xff]
        %v450 = vld [vmem:[#allocation4 + $0x210] sm:$0x1]
        %v451 = vlaneseq
        %v452 = vshrl.u32 %v451, 7
        %v453 = vsub.s32 0, %v452
        %v454 = vrot.slane %v450, %v453
        %455 = vmatprep.subr.mxu0 0.0
        %456 = vmatpush1.msra.mxu0 %v449
        %457 = vmatprep.subr.mxu0 0.0
        %458 = vmatpush1.msra.mxu0 %v448
        %459 = vmatprep.subr.mxu0 0.0
        %460 = vmatpush1.msra.mxu0 %v447
        %461 = vmatprep.subr.mxu0 0.0
        %462 = vmatpush1.msra.mxu0 %v446
        %463 = vmatprep.subr.mxu0 0.0
        %464 = vmatpush1.msra.mxu0 %v445
        %465 = vmatprep.subr.mxu0 0.0
        %466 = vmatpush1.msra.mxu0 %v444
        %467 = vmatprep.subr.mxu0 0.0
        %468 = vmatpush1.msra.mxu0 %v443
        %469 = vmatprep.subr.mxu0 0.0
        %470 = vmatpush1.msra.mxu0 %v442
        %471 = vmatprep.subr.mxu0 0.0
        %472 = vmatpush1.msra.mxu0 %v441
        %473 = vmatprep.subr.mxu0 0.0
        %474 = vmatpush1.msra.mxu0 %v440
        %475 = vmatprep.subr.mxu0 0.0
        %476 = vmatpush1.msra.mxu0 %v439
        %477 = vmatprep.subr.mxu0 0.0
        %478 = vmatpush1.msra.mxu0 %v438
        %479 = vmatprep.subr.mxu0 0.0
        %480 = vmatpush1.msra.mxu0 %v437
        %481 = vmatprep.subr.mxu0 0.0
        %482 = vmatpush1.msra.mxu0 %v436
        %483 = vmatprep.subr.mxu0 0.0
        %484 = vmatpush1.msra.mxu0 %v435
        %485 = vmatprep.subr.mxu0 0.0
        %486 = vmatpush1.msra.mxu0 %v434
        %487 = vmatprep.subr.mxu0 0.0
        %488 = vmatpush2.msra.mxu0 0.0
        %489 = vmatprep.subr.mxu0 0.0
        %490 = vmatpush2.msra.mxu0 0.0
        %491 = vmatprep.subr.mxu0 0.0
        %492 = vmatpush2.msra.mxu0 0.0
        %493 = vmatprep.subr.mxu0 0.0
        %494 = vmatpush2.msra.mxu0 0.0
        %495 = vmatprep.subr.mxu0 0.0
        %496 = vmatpush2.msra.mxu0 0.0
        %497 = vmatprep.subr.mxu0 0.0
        %498 = vmatpush2.msra.mxu0 0.0
        %499 = vmatprep.subr.mxu0 0.0
        %500 = vmatpush2.msra.mxu0 0.0
        %501 = vmatprep.subr.mxu0 0.0
        %502 = vmatpush2.msra.mxu0 0.0
        %503 = vmatprep.subr.mxu0 0.0
        %504 = vmatpush2.msra.mxu0 0.0
        %505 = vmatprep.subr.mxu0 0.0
        %506 = vmatpush2.msra.mxu0 0.0
        %507 = vmatprep.subr.mxu0 0.0
        %508 = vmatpush2.msra.mxu0 0.0
        %509 = vmatprep.subr.mxu0 0.0
        %510 = vmatpush2.msra.mxu0 0.0
        %511 = vmatprep.subr.mxu0 0.0
        %512 = vmatpush2.msra.mxu0 0.0
        %513 = vmatprep.subr.mxu0 0.0
        %514 = vmatpush2.msra.mxu0 0.0
        %515 = vmatprep.subr.mxu0 0.0
        %516 = vmatpush2.msra.mxu0 0.0
        %517 = vmatprep.subr.mxu0 0.0
        %518 = vmatpush2.msra.mxu0 0.0
        %519 = vmatprep.mubr.f32.mxu0 0.0
        %520 = vmatmul.mubr.f32.gmra.mxu0 %v432
        %v521 = vpop.f32.mrf.mxu0
        %v522 = vadd.f32 %v454, %v521
        %v523 = vpop.f32.mrf.mxu0
        %524 = vmatprep.mubr.f32.mxu0 0.0
        %525 = vmatmul.mubr.f32.gmra.mxu0 %v433
        %v526 = vpop.f32.mrf.mxu0
        %v527 = vadd.f32 %v454, %v526
        %v528 = vpop.f32.mrf.mxu0
        %529 = vdwg.mxu0
        %v530 = vmax.f32 %v522, 0.0
        %v531 = vmax.f32 %v527, 0.0
        %v532 = vld [vmem:[#allocation4 + $0x218] sm:$0xff]
        %v533 = vld [vmem:[#allocation4 + $0x220] sm:$0xff]
        %v534 = vld [vmem:[#allocation4 + $0x228] sm:$0xff]
        %v535 = vld [vmem:[#allocation4 + $0x230] sm:$0xff]
        %v536 = vld [vmem:[#allocation4 + $0x238] sm:$0xff]
        %v537 = vld [vmem:[#allocation4 + $0x240] sm:$0xff]
        %v538 = vld [vmem:[#allocation4 + $0x248] sm:$0xff]
        %v539 = vld [vmem:[#allocation4 + $0x250] sm:$0xff]
        %v540 = vld [vmem:[#allocation4 + $0x258] sm:$0xff]
        %v541 = vld [vmem:[#allocation4 + $0x260] sm:$0xff]
        %v542 = vld [vmem:[#allocation4 + $0x268] sm:$0xff]
        %v543 = vld [vmem:[#allocation4 + $0x270] sm:$0xff]
        %v544 = vld [vmem:[#allocation4 + $0x278] sm:$0xff]
        %v545 = vld [vmem:[#allocation4 + $0x280] sm:$0xff]
        %v546 = vld [vmem:[#allocation4 + $0x288] sm:$0xff]
        %v547 = vld [vmem:[#allocation4 + $0x290] sm:$0xff]
        %v548 = vld [vmem:[#allocation4 + $0x298] sm:$0x1]
        %v549 = vlaneseq
        %v550 = vshrl.u32 %v549, 7
        %v551 = vsub.s32 0, %v550
        %v552 = vrot.slane %v548, %v551
        %553 = vmatprep.subr.mxu0 0.0
        %554 = vmatpush1.msra.mxu0 %v547
        %555 = vmatprep.subr.mxu0 0.0
        %556 = vmatpush1.msra.mxu0 %v546
        %557 = vmatprep.subr.mxu0 0.0
        %558 = vmatpush1.msra.mxu0 %v545
        %559 = vmatprep.subr.mxu0 0.0
        %560 = vmatpush1.msra.mxu0 %v544
        %561 = vmatprep.subr.mxu0 0.0
        %562 = vmatpush1.msra.mxu0 %v543
        %563 = vmatprep.subr.mxu0 0.0
        %564 = vmatpush1.msra.mxu0 %v542
        %565 = vmatprep.subr.mxu0 0.0
        %566 = vmatpush1.msra.mxu0 %v541
        %567 = vmatprep.subr.mxu0 0.0
        %568 = vmatpush1.msra.mxu0 %v540
        %569 = vmatprep.subr.mxu0 0.0
        %570 = vmatpush1.msra.mxu0 %v539
        %571 = vmatprep.subr.mxu0 0.0
        %572 = vmatpush1.msra.mxu0 %v538
        %573 = vmatprep.subr.mxu0 0.0
        %574 = vmatpush1.msra.mxu0 %v537
        %575 = vmatprep.subr.mxu0 0.0
        %576 = vmatpush1.msra.mxu0 %v536
        %577 = vmatprep.subr.mxu0 0.0
        %578 = vmatpush1.msra.mxu0 %v535
        %579 = vmatprep.subr.mxu0 0.0
        %580 = vmatpush1.msra.mxu0 %v534
        %581 = vmatprep.subr.mxu0 0.0
        %582 = vmatpush1.msra.mxu0 %v533
        %583 = vmatprep.subr.mxu0 0.0
        %584 = vmatpush1.msra.mxu0 %v532
        %585 = vmatprep.subr.mxu0 0.0
        %586 = vmatpush2.msra.mxu0 0.0
        %587 = vmatprep.subr.mxu0 0.0
        %588 = vmatpush2.msra.mxu0 0.0
        %589 = vmatprep.subr.mxu0 0.0
        %590 = vmatpush2.msra.mxu0 0.0
        %591 = vmatprep.subr.mxu0 0.0
        %592 = vmatpush2.msra.mxu0 0.0
        %593 = vmatprep.subr.mxu0 0.0
        %594 = vmatpush2.msra.mxu0 0.0
        %595 = vmatprep.subr.mxu0 0.0
        %596 = vmatpush2.msra.mxu0 0.0
        %597 = vmatprep.subr.mxu0 0.0
        %598 = vmatpush2.msra.mxu0 0.0
        %599 = vmatprep.subr.mxu0 0.0
        %600 = vmatpush2.msra.mxu0 0.0
        %601 = vmatprep.subr.mxu0 0.0
        %602 = vmatpush2.msra.mxu0 0.0
        %603 = vmatprep.subr.mxu0 0.0
        %604 = vmatpush2.msra.mxu0 0.0
        %605 = vmatprep.subr.mxu0 0.0
        %606 = vmatpush2.msra.mxu0 0.0
        %607 = vmatprep.subr.mxu0 0.0
        %608 = vmatpush2.msra.mxu0 0.0
        %609 = vmatprep.subr.mxu0 0.0
        %610 = vmatpush2.msra.mxu0 0.0
        %611 = vmatprep.subr.mxu0 0.0
        %612 = vmatpush2.msra.mxu0 0.0
        %613 = vmatprep.subr.mxu0 0.0
        %614 = vmatpush2.msra.mxu0 0.0
        %615 = vmatprep.subr.mxu0 0.0
        %616 = vmatpush2.msra.mxu0 0.0
        %617 = vmatprep.mubr.f32.mxu0 0.0
        %618 = vmatmul.mubr.f32.gmra.mxu0 %v530
        %v619 = vpop.f32.mrf.mxu0
        %v620 = vadd.f32 %v552, %v619
        %v621 = vpop.f32.mrf.mxu0
        %622 = vmatprep.mubr.f32.mxu0 0.0
        %623 = vmatmul.mubr.f32.gmra.mxu0 %v531
        %v624 = vpop.f32.mrf.mxu0
        %v625 = vadd.f32 %v552, %v624
        %v626 = vpop.f32.mrf.mxu0
        %627 = vdwg.mxu0
        %v628 = vtanh.pop %v620
        %v629 = vtanh.pop %v625
        %v630 = vmul.f32 %v628, 1.442695
        %v631 = vpow.pop %v630
        %v632 = vmul.f32 %v629, 1.442695
        %v633 = vpow.pop %v632
        %v634 = vlaneseq
        %v635 = vand.u32 %v634, 127
        %vm636 = vcmp.lt.s32.totalorder %v635, 4
        %v637 = vsel %vm636, 1, 0
        %v638 = vcvt.s32.f32 %v637
        %v639 = vmul.f32 %v631, %v638
        %v640 = vmul.f32 %v633, %v638
        %641 = vadd.xlane.f32.xlu0 %v639
        %v642 = vpop.xlane.xlu0 %641
        %643 = vadd.xlane.f32.xlu0 %v640
        %v644 = vpop.xlane.xlu0 %643
        %v645 = vrcp.pop %v642
        %v646 = vmul.f32 %v631, %v645
        %v647 = vrcp.pop %v644
        %v648 = vmul.f32 %v633, %v647
        %v649 = vld [vmem:[#allocation4 + $0x2a0] sm:$0xff]
        %v650 = vld [vmem:[#allocation4 + $0x2a8] sm:$0xff]
        %v651 = vld [vmem:[#allocation4 + $0x2b0] sm:$0xff]
        %v652 = vld [vmem:[#allocation4 + $0x2b8] sm:$0xff]
        %v653 = vld [vmem:[#allocation4 + $0x2c0] sm:$0xff]
        %v654 = vld [vmem:[#allocation4 + $0x2c8] sm:$0xff]
        %v655 = vld [vmem:[#allocation4 + $0x2d0] sm:$0xff]
        %v656 = vld [vmem:[#allocation4 + $0x2d8] sm:$0xff]
        %v657 = vld [vmem:[#allocation4 + $0x2e0] sm:$0xff]
        %v658 = vld [vmem:[#allocation4 + $0x2e8] sm:$0xff]
        %v659 = vld [vmem:[#allocation4 + $0x2f0] sm:$0xff]
        %v660 = vld [vmem:[#allocation4 + $0x2f8] sm:$0xff]
        %v661 = vld [vmem:[#allocation4 + $0x300] sm:$0xff]
        %v662 = vld [vmem:[#allocation4 + $0x308] sm:$0xff]
        %v663 = vld [vmem:[#allocation4 + $0x310] sm:$0xff]
        %v664 = vld [vmem:[#allocation4 + $0x318] sm:$0xff]
        %665 = vmatprep.subr.mxu0 0.0
        %666 = vmatpush1.msra.mxu0 %v664
        %667 = vmatprep.subr.mxu0 0.0
        %668 = vmatpush1.msra.mxu0 %v663
        %669 = vmatprep.subr.mxu0 0.0
        %670 = vmatpush1.msra.mxu0 %v662
        %671 = vmatprep.subr.mxu0 0.0
        %672 = vmatpush1.msra.mxu0 %v661
        %673 = vmatprep.subr.mxu0 0.0
        %674 = vmatpush1.msra.mxu0 %v660
        %675 = vmatprep.subr.mxu0 0.0
        %676 = vmatpush1.msra.mxu0 %v659
        %677 = vmatprep.subr.mxu0 0.0
        %678 = vmatpush1.msra.mxu0 %v658
        %679 = vmatprep.subr.mxu0 0.0
        %680 = vmatpush1.msra.mxu0 %v657
        %681 = vmatprep.subr.mxu0 0.0
        %682 = vmatpush1.msra.mxu0 %v656
        %683 = vmatprep.subr.mxu0 0.0
        %684 = vmatpush1.msra.mxu0 %v655
        %685 = vmatprep.subr.mxu0 0.0
        %686 = vmatpush1.msra.mxu0 %v654
        %687 = vmatprep.subr.mxu0 0.0
        %688 = vmatpush1.msra.mxu0 %v653
        %689 = vmatprep.subr.mxu0 0.0
        %690 = vmatpush1.msra.mxu0 %v652
        %691 = vmatprep.subr.mxu0 0.0
        %692 = vmatpush1.msra.mxu0 %v651
        %693 = vmatprep.subr.mxu0 0.0
        %694 = vmatpush1.msra.mxu0 %v650
        %695 = vmatprep.subr.mxu0 0.0
        %696 = vmatpush1.msra.mxu0 %v649
        %697 = vmatprep.subr.mxu0 0.0
        %698 = vmatpush2.msra.mxu0 0.0
        %699 = vmatprep.subr.mxu0 0.0
        %700 = vmatpush2.msra.mxu0 0.0
        %701 = vmatprep.subr.mxu0 0.0
        %702 = vmatpush2.msra.mxu0 0.0
        %703 = vmatprep.subr.mxu0 0.0
        %704 = vmatpush2.msra.mxu0 0.0
        %705 = vmatprep.subr.mxu0 0.0
        %706 = vmatpush2.msra.mxu0 0.0
        %707 = vmatprep.subr.mxu0 0.0
        %708 = vmatpush2.msra.mxu0 0.0
        %709 = vmatprep.subr.mxu0 0.0
        %710 = vmatpush2.msra.mxu0 0.0
        %711 = vmatprep.subr.mxu0 0.0
        %712 = vmatpush2.msra.mxu0 0.0
        %713 = vmatprep.subr.mxu0 0.0
        %714 = vmatpush2.msra.mxu0 0.0
        %715 = vmatprep.subr.mxu0 0.0
        %716 = vmatpush2.msra.mxu0 0.0
        %717 = vmatprep.subr.mxu0 0.0
        %718 = vmatpush2.msra.mxu0 0.0
        %719 = vmatprep.subr.mxu0 0.0
        %720 = vmatpush2.msra.mxu0 0.0
        %721 = vmatprep.subr.mxu0 0.0
        %722 = vmatpush2.msra.mxu0 0.0
        %723 = vmatprep.subr.mxu0 0.0
        %724 = vmatpush2.msra.mxu0 0.0
        %725 = vmatprep.subr.mxu0 0.0
        %726 = vmatpush2.msra.mxu0 0.0
        %727 = vmatprep.subr.mxu0 0.0
        %728 = vmatpush2.msra.mxu0 0.0
        %729 = vmatprep.mubr.f32.mxu0 0.0
        %730 = vmatmul.mubr.f32.gmra.mxu0 %v646
        %v731 = vpop.f32.mrf.mxu0
        %v732 = vadd.f32 0.0, %v731
        %v733 = vpop.f32.mrf.mxu0
        %734 = vmatprep.mubr.f32.mxu0 0.0
        %735 = vmatmul.mubr.f32.gmra.mxu0 %v648
        %v736 = vpop.f32.mrf.mxu0
        %v737 = vadd.f32 0.0, %v736
        %v738 = vpop.f32.mrf.mxu0
        %739 = vdwg.mxu0
        %v740 = vmul.f32 %v530, %v732
        %v741 = vmul.f32 %v531, %v737
        %v742 = vld [vmem:[#allocation4 + $0x320] sm:$0xff]
        %v743 = vld [vmem:[#allocation4 + $0x328] sm:$0xff]
        %v744 = vld [vmem:[#allocation4 + $0x330] sm:$0xff]
        %v745 = vld [vmem:[#allocation4 + $0x338] sm:$0xff]
        %v746 = vld [vmem:[#allocation4 + $0x340] sm:$0xff]
        %v747 = vld [vmem:[#allocation4 + $0x348] sm:$0xff]
        %v748 = vld [vmem:[#allocation4 + $0x350] sm:$0xff]
        %v749 = vld [vmem:[#allocation4 + $0x358] sm:$0xff]
        %v750 = vld [vmem:[#allocation4 + $0x360] sm:$0xff]
        %v751 = vld [vmem:[#allocation4 + $0x368] sm:$0xff]
        %v752 = vld [vmem:[#allocation4 + $0x370] sm:$0xff]
        %v753 = vld [vmem:[#allocation4 + $0x378] sm:$0xff]
        %v754 = vld [vmem:[#allocation4 + $0x380] sm:$0xff]
        %v755 = vld [vmem:[#allocation4 + $0x388] sm:$0xff]
        %v756 = vld [vmem:[#allocation4 + $0x390] sm:$0xff]
        %v757 = vld [vmem:[#allocation4 + $0x398] sm:$0xff]
        %v758 = vld [vmem:[#allocation4 + $0x3a0] sm:$0x1]
        %v759 = vlaneseq
        %v760 = vshrl.u32 %v759, 7
        %v761 = vsub.s32 0, %v760
        %v762 = vrot.slane %v758, %v761
        %763 = vmatprep.subr.mxu0 0.0
        %764 = vmatpush1.msra.mxu0 %v757
        %765 = vmatprep.subr.mxu0 0.0
        %766 = vmatpush1.msra.mxu0 %v756
        %767 = vmatprep.subr.mxu0 0.0
        %768 = vmatpush1.msra.mxu0 %v755
        %769 = vmatprep.subr.mxu0 0.0
        %770 = vmatpush1.msra.mxu0 %v754
        %771 = vmatprep.subr.mxu0 0.0
        %772 = vmatpush1.msra.mxu0 %v753
        %773 = vmatprep.subr.mxu0 0.0
        %774 = vmatpush1.msra.mxu0 %v752
        %775 = vmatprep.subr.mxu0 0.0
        %776 = vmatpush1.msra.mxu0 %v751
        %777 = vmatprep.subr.mxu0 0.0
        %778 = vmatpush1.msra.mxu0 %v750
        %779 = vmatprep.subr.mxu0 0.0
        %780 = vmatpush1.msra.mxu0 %v749
        %781 = vmatprep.subr.mxu0 0.0
        %782 = vmatpush1.msra.mxu0 %v748
        %783 = vmatprep.subr.mxu0 0.0
        %784 = vmatpush1.msra.mxu0 %v747
        %785 = vmatprep.subr.mxu0 0.0
        %786 = vmatpush1.msra.mxu0 %v746
        %787 = vmatprep.subr.mxu0 0.0
        %788 = vmatpush1.msra.mxu0 %v745
        %789 = vmatprep.subr.mxu0 0.0
        %790 = vmatpush1.msra.mxu0 %v744
        %791 = vmatprep.subr.mxu0 0.0
        %792 = vmatpush1.msra.mxu0 %v743
        %793 = vmatprep.subr.mxu0 0.0
        %794 = vmatpush1.msra.mxu0 %v742
        %795 = vmatprep.subr.mxu0 0.0
        %796 = vmatpush2.msra.mxu0 0.0
        %797 = vmatprep.subr.mxu0 0.0
        %798 = vmatpush2.msra.mxu0 0.0
        %799 = vmatprep.subr.mxu0 0.0
        %800 = vmatpush2.msra.mxu0 0.0
        %801 = vmatprep.subr.mxu0 0.0
        %802 = vmatpush2.msra.mxu0 0.0
        %803 = vmatprep.subr.mxu0 0.0
        %804 = vmatpush2.msra.mxu0 0.0
        %805 = vmatprep.subr.mxu0 0.0
        %806 = vmatpush2.msra.mxu0 0.0
        %807 = vmatprep.subr.mxu0 0.0
        %808 = vmatpush2.msra.mxu0 0.0
        %809 = vmatprep.subr.mxu0 0.0
        %810 = vmatpush2.msra.mxu0 0.0
        %811 = vmatprep.subr.mxu0 0.0
        %812 = vmatpush2.msra.mxu0 0.0
        %813 = vmatprep.subr.mxu0 0.0
        %814 = vmatpush2.msra.mxu0 0.0
        %815 = vmatprep.subr.mxu0 0.0
        %816 = vmatpush2.msra.mxu0 0.0
        %817 = vmatprep.subr.mxu0 0.0
        %818 = vmatpush2.msra.mxu0 0.0
        %819 = vmatprep.subr.mxu0 0.0
        %820 = vmatpush2.msra.mxu0 0.0
        %821 = vmatprep.subr.mxu0 0.0
        %822 = vmatpush2.msra.mxu0 0.0
        %823 = vmatprep.subr.mxu0 0.0
        %824 = vmatpush2.msra.mxu0 0.0
        %825 = vmatprep.subr.mxu0 0.0
        %826 = vmatpush2.msra.mxu0 0.0
        %827 = vmatprep.mubr.f32.mxu0 0.0
        %828 = vmatmul.mubr.f32.gmra.mxu0 %v740
        %v829 = vpop.f32.mrf.mxu0
        %v830 = vadd.f32 %v762, %v829
        %v831 = vpop.f32.mrf.mxu0
        %832 = vmatprep.mubr.f32.mxu0 0.0
        %833 = vmatmul.mubr.f32.gmra.mxu0 %v741
        %v834 = vpop.f32.mrf.mxu0
        %v835 = vadd.f32 %v762, %v834
        %v836 = vpop.f32.mrf.mxu0
        %837 = vdwg.mxu0
        %v838 = vld [vmem:[#allocation6] sm:$0xff]
        %v839 = vld [vmem:[#allocation6 + $0x8] sm:$0xff]
        %v840 = vld [vmem:[#allocation6 + $0x10] sm:$0xff]
        %v841 = vld [vmem:[#allocation6 + $0x18] sm:$0xff]
        %v842 = vld [vmem:[#allocation6 + $0x20] sm:$0x1]
        %v843 = vld [vmem:[#allocation6 + $0x28] sm:$0xff]
        %v844 = vld [vmem:[#allocation6 + $0x30] sm:$0xff]
        %v845 = vld [vmem:[#allocation6 + $0x38] sm:$0xff]
        %v846 = vld [vmem:[#allocation6 + $0x40] sm:$0xff]
        %v847 = vld [vmem:[#allocation6 + $0x48] sm:$0xff]
        %v848 = vld [vmem:[#allocation6 + $0x50] sm:$0xff]
        %v849 = vld [vmem:[#allocation6 + $0x58] sm:$0xff]
        %v850 = vld [vmem:[#allocation6 + $0x60] sm:$0xff]
        %v851 = vld [vmem:[#allocation6 + $0x68] sm:$0x1]
        %v852 = vlaneseq
        %v853 = vshrl.u32 %v852, 7
        %v854 = vsub.s32 0, %v853
        %v855 = vrot.slane %v842, %v854
        %vm856 = vcmask 261120
        %v858 = vsel %vm856, 0.0, 0
        %860 = vmatprep.subr.mxu0 0.0
        %861 = vmatpush1.msra.mxu0 0.0
        %862 = vmatprep.subr.mxu0 0.0
        %863 = vmatpush1.msra.mxu0 0.0
        %864 = vmatprep.subr.mxu0 0.0
        %865 = vmatpush1.msra.mxu0 0.0
        %866 = vmatprep.subr.mxu0 0.0
        %867 = vmatpush1.msra.mxu0 0.0
        %868 = vmatprep.subr.mxu0 0.0
        %869 = vmatpush1.msra.mxu0 0.0
        %870 = vmatprep.subr.mxu0 0.0
        %871 = vmatpush1.msra.mxu0 0.0
        %872 = vmatprep.subr.mxu0 0.0
        %873 = vmatpush1.msra.mxu0 0.0
        %874 = vmatprep.subr.mxu0 0.0
        %875 = vmatpush1.msra.mxu0 0.0
        %876 = vmatprep.subr.mxu0 0.0
        %877 = vmatpush1.msra.mxu0 0.0
        %878 = vmatprep.subr.mxu0 0.0
        %879 = vmatpush1.msra.mxu0 0.0
        %880 = vmatprep.subr.mxu0 0.0
        %881 = vmatpush1.msra.mxu0 0.0
        %882 = vmatprep.subr.mxu0 0.0
        %883 = vmatpush1.msra.mxu0 0.0
        %884 = vmatprep.subr.mxu0 0.0
        %885 = vmatpush1.msra.mxu0 %v841
        %886 = vmatprep.subr.mxu0 0.0
        %887 = vmatpush1.msra.mxu0 %v840
        %888 = vmatprep.subr.mxu0 0.0
        %889 = vmatpush1.msra.mxu0 %v839
        %890 = vmatprep.subr.mxu0 0.0
        %891 = vmatpush1.msra.mxu0 %v838
        %892 = vmatprep.subr.mxu0 0.0
        %893 = vmatpush2.msra.mxu0 0.0
        %894 = vmatprep.subr.mxu0 0.0
        %895 = vmatpush2.msra.mxu0 0.0
        %896 = vmatprep.subr.mxu0 0.0
        %897 = vmatpush2.msra.mxu0 0.0
        %898 = vmatprep.subr.mxu0 0.0
        %899 = vmatpush2.msra.mxu0 0.0
        %900 = vmatprep.subr.mxu0 0.0
        %901 = vmatpush2.msra.mxu0 0.0
        %902 = vmatprep.subr.mxu0 0.0
        %903 = vmatpush2.msra.mxu0 0.0
        %904 = vmatprep.subr.mxu0 0.0
        %905 = vmatpush2.msra.mxu0 0.0
        %906 = vmatprep.subr.mxu0 0.0
        %907 = vmatpush2.msra.mxu0 0.0
        %908 = vmatprep.subr.mxu0 0.0
        %909 = vmatpush2.msra.mxu0 0.0
        %910 = vmatprep.subr.mxu0 0.0
        %911 = vmatpush2.msra.mxu0 0.0
        %912 = vmatprep.subr.mxu0 0.0
        %913 = vmatpush2.msra.mxu0 0.0
        %914 = vmatprep.subr.mxu0 0.0
        %915 = vmatpush2.msra.mxu0 0.0
        %916 = vmatprep.subr.mxu0 0.0
        %917 = vmatpush2.msra.mxu0 0.0
        %918 = vmatprep.subr.mxu0 0.0
        %919 = vmatpush2.msra.mxu0 0.0
        %920 = vmatprep.subr.mxu0 0.0
        %921 = vmatpush2.msra.mxu0 0.0
        %922 = vmatprep.subr.mxu0 0.0
        %923 = vmatpush2.msra.mxu0 0.0
        %924 = vmatprep.mubr.f32.mxu0 0.0
        %925 = vmatmul.mubr.f32.gmra.mxu0 %v858
        %v926 = vpop.f32.mrf.mxu0
        %v927 = vadd.f32 %v855, %v926
        %v928 = vpop.f32.mrf.mxu0
        %929 = vdwg.mxu0
        %v930 = vadd.f32 %v830, %v927
        %v931 = vxor.u32 %v930, 2147483648
        %v932 = vmul.f32 %v931, 1.442695
        %v933 = vpow.pop %v932
        %v934 = vadd.f32 %v933, 1.0
        %v935 = vrcp.pop %v934
        %v936 = vmul.f32 1.0, %v935
        %938 = vrot.lane.b32.xlu0 %v927, 64
        %v939 = vpop.permute.xlu0 %938
        %v941 = vmul.f32 %v936, %v939
        %943 = vrot.lane.b32.xlu0 %v941, 64
        %v944 = vpop.permute.xlu0 %943
        %v946 = vadd.f32 %v830, %v944
        %v947 = vtanh.pop %v946
        %v948 = vsub.f32 1.0, %v936
        %950 = vrot.lane.b32.xlu0 %v947, 96
        %v951 = vpop.permute.xlu0 %950
        %v953 = vmul.f32 %v948, %v951
        %v954 = vmul.f32 %v936, 0.0
        %v955 = vadd.f32 %v953, %v954
        %957 = vrot.lane.b32.xlu0 %v955, 96
        %v958 = vpop.permute.xlu0 %957
        %v960 = vsel %vm856, %v958, 0.0
        %v961 = vlaneseq
        %v962 = vshrl.u32 %v961, 7
        %v963 = vsub.s32 0, %v962
        %v964 = vrot.slane %v851, %v963
        %vm965 = vcmask 523264
        %v967 = vsel %vm965, %v960, 0
        %969 = vmatprep.subr.mxu0 0.0
        %970 = vmatpush1.msra.mxu0 0.0
        %971 = vmatprep.subr.mxu0 0.0
        %972 = vmatpush1.msra.mxu0 0.0
        %973 = vmatprep.subr.mxu0 0.0
        %974 = vmatpush1.msra.mxu0 0.0
        %975 = vmatprep.subr.mxu0 0.0
        %976 = vmatpush1.msra.mxu0 0.0
        %977 = vmatprep.subr.mxu0 0.0
        %978 = vmatpush1.msra.mxu0 0.0
        %979 = vmatprep.subr.mxu0 0.0
        %980 = vmatpush1.msra.mxu0 0.0
        %981 = vmatprep.subr.mxu0 0.0
        %982 = vmatpush1.msra.mxu0 0.0
        %983 = vmatprep.subr.mxu0 0.0
        %984 = vmatpush1.msra.mxu0 0.0
        %985 = vmatprep.subr.mxu0 0.0
        %986 = vmatpush1.msra.mxu0 %v850
        %987 = vmatprep.subr.mxu0 0.0
        %988 = vmatpush1.msra.mxu0 %v849
        %989 = vmatprep.subr.mxu0 0.0
        %990 = vmatpush1.msra.mxu0 %v848
        %991 = vmatprep.subr.mxu0 0.0
        %992 = vmatpush1.msra.mxu0 %v847
        %993 = vmatprep.subr.mxu0 0.0
        %994 = vmatpush1.msra.mxu0 %v846
        %995 = vmatprep.subr.mxu0 0.0
        %996 = vmatpush1.msra.mxu0 %v845
        %997 = vmatprep.subr.mxu0 0.0
        %998 = vmatpush1.msra.mxu0 %v844
        %999 = vmatprep.subr.mxu0 0.0
        %1000 = vmatpush1.msra.mxu0 %v843
        %1001 = vmatprep.subr.mxu0 0.0
        %1002 = vmatpush2.msra.mxu0 0.0
        %1003 = vmatprep.subr.mxu0 0.0
        %1004 = vmatpush2.msra.mxu0 0.0
        %1005 = vmatprep.subr.mxu0 0.0
        %1006 = vmatpush2.msra.mxu0 0.0
        %1007 = vmatprep.subr.mxu0 0.0
        %1008 = vmatpush2.msra.mxu0 0.0
        %1009 = vmatprep.subr.mxu0 0.0
        %1010 = vmatpush2.msra.mxu0 0.0
        %1011 = vmatprep.subr.mxu0 0.0
        %1012 = vmatpush2.msra.mxu0 0.0
        %1013 = vmatprep.subr.mxu0 0.0
        %1014 = vmatpush2.msra.mxu0 0.0
        %1015 = vmatprep.subr.mxu0 0.0
        %1016 = vmatpush2.msra.mxu0 0.0
        %1017 = vmatprep.subr.mxu0 0.0
        %1018 = vmatpush2.msra.mxu0 0.0
        %1019 = vmatprep.subr.mxu0 0.0
        %1020 = vmatpush2.msra.mxu0 0.0
        %1021 = vmatprep.subr.mxu0 0.0
        %1022 = vmatpush2.msra.mxu0 0.0
        %1023 = vmatprep.subr.mxu0 0.0
        %1024 = vmatpush2.msra.mxu0 0.0
        %1025 = vmatprep.subr.mxu0 0.0
        %1026 = vmatpush2.msra.mxu0 0.0
        %1027 = vmatprep.subr.mxu0 0.0
        %1028 = vmatpush2.msra.mxu0 0.0
        %1029 = vmatprep.subr.mxu0 0.0
        %1030 = vmatpush2.msra.mxu0 0.0
        %1031 = vmatprep.subr.mxu0 0.0
        %1032 = vmatpush2.msra.mxu0 0.0
        %1033 = vmatprep.mubr.f32.mxu0 0.0
        %1034 = vmatmul.mubr.f32.gmra.mxu0 %v967
        %v1035 = vpop.f32.mrf.mxu0
        %v1036 = vadd.f32 %v964, %v1035
        %v1037 = vpop.f32.mrf.mxu0
        %1038 = vdwg.mxu0
        %v1039 = vxor.u32 %v1036, 2147483648
        %v1040 = vmul.f32 %v1039, 1.442695
        %v1041 = vpow.pop %v1040
        %v1042 = vadd.f32 %v1041, 1.0
        %v1043 = vrcp.pop %v1042
        %v1044 = vmul.f32 1.0, %v1043
        %1046 = vrot.lane.b32.xlu0 %v1036, 32
        %v1047 = vpop.permute.xlu0 %1046
        %v1049 = vmul.f32 %v1044, %v1047
        %1051 = vrot.lane.b32.xlu0 %v1049, 64
        %v1052 = vpop.permute.xlu0 %1051
        %v1054 = vadd.f32 %v1036, %v1052
        %v1055 = vtanh.pop %v1054
        %v1056 = vsub.f32 1.0, %v1044
        %1058 = vrot.lane.b32.xlu0 %v1055, 96
        %v1059 = vpop.permute.xlu0 %1058
        %v1061 = vmul.f32 %v1056, %v1059
        %v1062 = vmul.f32 %v1044, 0.0
        %v1063 = vadd.f32 %v1061, %v1062
        %v1064 = vsel %vm856, %v958, 0
        %1066 = vmatprep.subr.mxu0 0.0
        %1067 = vmatpush1.msra.mxu0 0.0
        %1068 = vmatprep.subr.mxu0 0.0
        %1069 = vmatpush1.msra.mxu0 0.0
        %1070 = vmatprep.subr.mxu0 0.0
        %1071 = vmatpush1.msra.mxu0 0.0
        %1072 = vmatprep.subr.mxu0 0.0
        %1073 = vmatpush1.msra.mxu0 0.0
        %1074 = vmatprep.subr.mxu0 0.0
        %1075 = vmatpush1.msra.mxu0 0.0
        %1076 = vmatprep.subr.mxu0 0.0
        %1077 = vmatpush1.msra.mxu0 0.0
        %1078 = vmatprep.subr.mxu0 0.0
        %1079 = vmatpush1.msra.mxu0 0.0
        %1080 = vmatprep.subr.mxu0 0.0
        %1081 = vmatpush1.msra.mxu0 0.0
        %1082 = vmatprep.subr.mxu0 0.0
        %1083 = vmatpush1.msra.mxu0 0.0
        %1084 = vmatprep.subr.mxu0 0.0
        %1085 = vmatpush1.msra.mxu0 0.0
        %1086 = vmatprep.subr.mxu0 0.0
        %1087 = vmatpush1.msra.mxu0 0.0
        %1088 = vmatprep.subr.mxu0 0.0
        %1089 = vmatpush1.msra.mxu0 0.0
        %1090 = vmatprep.subr.mxu0 0.0
        %1091 = vmatpush1.msra.mxu0 %v841
        %1092 = vmatprep.subr.mxu0 0.0
        %1093 = vmatpush1.msra.mxu0 %v840
        %1094 = vmatprep.subr.mxu0 0.0
        %1095 = vmatpush1.msra.mxu0 %v839
        %1096 = vmatprep.subr.mxu0 0.0
        %1097 = vmatpush1.msra.mxu0 %v838
        %1098 = vmatprep.subr.mxu0 0.0
        %1099 = vmatpush2.msra.mxu0 0.0
        %1100 = vmatprep.subr.mxu0 0.0
        %1101 = vmatpush2.msra.mxu0 0.0
        %1102 = vmatprep.subr.mxu0 0.0
        %1103 = vmatpush2.msra.mxu0 0.0
        %1104 = vmatprep.subr.mxu0 0.0
        %1105 = vmatpush2.msra.mxu0 0.0
        %1106 = vmatprep.subr.mxu0 0.0
        %1107 = vmatpush2.msra.mxu0 0.0
        %1108 = vmatprep.subr.mxu0 0.0
        %1109 = vmatpush2.msra.mxu0 0.0
        %1110 = vmatprep.subr.mxu0 0.0
        %1111 = vmatpush2.msra.mxu0 0.0
        %1112 = vmatprep.subr.mxu0 0.0
        %1113 = vmatpush2.msra.mxu0 0.0
        %1114 = vmatprep.subr.mxu0 0.0
        %1115 = vmatpush2.msra.mxu0 0.0
        %1116 = vmatprep.subr.mxu0 0.0
        %1117 = vmatpush2.msra.mxu0 0.0
        %1118 = vmatprep.subr.mxu0 0.0
        %1119 = vmatpush2.msra.mxu0 0.0
        %1120 = vmatprep.subr.mxu0 0.0
        %1121 = vmatpush2.msra.mxu0 0.0
        %1122 = vmatprep.subr.mxu0 0.0
        %1123 = vmatpush2.msra.mxu0 0.0
        %1124 = vmatprep.subr.mxu0 0.0
        %1125 = vmatpush2.msra.mxu0 0.0
        %1126 = vmatprep.subr.mxu0 0.0
        %1127 = vmatpush2.msra.mxu0 0.0
        %1128 = vmatprep.subr.mxu0 0.0
        %1129 = vmatpush2.msra.mxu0 0.0
        %1130 = vmatprep.mubr.f32.mxu0 0.0
        %1131 = vmatmul.mubr.f32.gmra.mxu0 %v1064
        %v1132 = vpop.f32.mrf.mxu0
        %v1133 = vadd.f32 %v855, %v1132
        %v1134 = vpop.f32.mrf.mxu0
        %1135 = vdwg.mxu0
        %v1137 = vrot.slane %v1133, 6
        %v1139 = vadd.f32 %v830, %v1137
        %v1140 = vxor.u32 %v1139, 2147483648
        %v1141 = vmul.f32 %v1140, 1.442695
        %v1142 = vpow.pop %v1141
        %v1143 = vadd.f32 %v1142, 1.0
        %v1144 = vrcp.pop %v1143
        %v1145 = vmul.f32 1.0, %v1144
        %1146 = vrot.lane.b32.xlu0 %v1137, 64
        %v1147 = vpop.permute.xlu0 %1146
        %v1149 = vmul.f32 %v1145, %v1147
        %1151 = vrot.lane.b32.xlu0 %v1149, 64
        %v1152 = vpop.permute.xlu0 %1151
        %v1154 = vadd.f32 %v830, %v1152
        %v1155 = vtanh.pop %v1154
        %v1156 = vsub.f32 1.0, %v1145
        %1158 = vrot.lane.b32.xlu0 %v1155, 96
        %v1159 = vpop.permute.xlu0 %1158
        %v1161 = vmul.f32 %v1156, %v1159
        %v1162 = vrot.slane %v955, 6
        %v1164 = vmul.f32 %v1145, %v1162
        %v1165 = vadd.f32 %v1161, %v1164
        %1167 = vrot.lane.b32.xlu0 %v1165, 96
        %v1168 = vpop.permute.xlu0 %1167
        %v1171 = vrot.slane %v1063, 6
        %v1173 = vsel %vm856, %v1168, %v1171
        %v1175 = vrot.slane %v1173, 2
        %v1176 = vsel %vm965, %v1175, 0
        %1178 = vmatprep.subr.mxu0 0.0
        %1179 = vmatpush1.msra.mxu0 0.0
        %1180 = vmatprep.subr.mxu0 0.0
        %1181 = vmatpush1.msra.mxu0 0.0
        %1182 = vmatprep.subr.mxu0 0.0
        %1183 = vmatpush1.msra.mxu0 0.0
        %1184 = vmatprep.subr.mxu0 0.0
        %1185 = vmatpush1.msra.mxu0 0.0
        %1186 = vmatprep.subr.mxu0 0.0
        %1187 = vmatpush1.msra.mxu0 0.0
        %1188 = vmatprep.subr.mxu0 0.0
        %1189 = vmatpush1.msra.mxu0 0.0
        %1190 = vmatprep.subr.mxu0 0.0
        %1191 = vmatpush1.msra.mxu0 0.0
        %1192 = vmatprep.subr.mxu0 0.0
        %1193 = vmatpush1.msra.mxu0 0.0
        %1194 = vmatprep.subr.mxu0 0.0
        %1195 = vmatpush1.msra.mxu0 %v850
        %1196 = vmatprep.subr.mxu0 0.0
        %1197 = vmatpush1.msra.mxu0 %v849
        %1198 = vmatprep.subr.mxu0 0.0
        %1199 = vmatpush1.msra.mxu0 %v848
        %1200 = vmatprep.subr.mxu0 0.0
        %1201 = vmatpush1.msra.mxu0 %v847
        %1202 = vmatprep.subr.mxu0 0.0
        %1203 = vmatpush1.msra.mxu0 %v846
        %1204 = vmatprep.subr.mxu0 0.0
        %1205 = vmatpush1.msra.mxu0 %v845
        %1206 = vmatprep.subr.mxu0 0.0
        %1207 = vmatpush1.msra.mxu0 %v844
        %1208 = vmatprep.subr.mxu0 0.0
        %1209 = vmatpush1.msra.mxu0 %v843
        %1210 = vmatprep.subr.mxu0 0.0
        %1211 = vmatpush2.msra.mxu0 0.0
        %1212 = vmatprep.subr.mxu0 0.0
        %1213 = vmatpush2.msra.mxu0 0.0
        %1214 = vmatprep.subr.mxu0 0.0
        %1215 = vmatpush2.msra.mxu0 0.0
        %1216 = vmatprep.subr.mxu0 0.0
        %1217 = vmatpush2.msra.mxu0 0.0
        %1218 = vmatprep.subr.mxu0 0.0
        %1219 = vmatpush2.msra.mxu0 0.0
        %1220 = vmatprep.subr.mxu0 0.0
        %1221 = vmatpush2.msra.mxu0 0.0
        %1222 = vmatprep.subr.mxu0 0.0
        %1223 = vmatpush2.msra.mxu0 0.0
        %1224 = vmatprep.subr.mxu0 0.0
        %1225 = vmatpush2.msra.mxu0 0.0
        %1226 = vmatprep.subr.mxu0 0.0
        %1227 = vmatpush2.msra.mxu0 0.0
        %1228 = vmatprep.subr.mxu0 0.0
        %1229 = vmatpush2.msra.mxu0 0.0
        %1230 = vmatprep.subr.mxu0 0.0
        %1231 = vmatpush2.msra.mxu0 0.0
        %1232 = vmatprep.subr.mxu0 0.0
        %1233 = vmatpush2.msra.mxu0 0.0
        %1234 = vmatprep.subr.mxu0 0.0
        %1235 = vmatpush2.msra.mxu0 0.0
        %1236 = vmatprep.subr.mxu0 0.0
        %1237 = vmatpush2.msra.mxu0 0.0
        %1238 = vmatprep.subr.mxu0 0.0
        %1239 = vmatpush2.msra.mxu0 0.0
        %1240 = vmatprep.subr.mxu0 0.0
        %1241 = vmatpush2.msra.mxu0 0.0
        %1242 = vmatprep.mubr.f32.mxu0 0.0
        %1243 = vmatmul.mubr.f32.gmra.mxu0 %v1176
        %v1244 = vpop.f32.mrf.mxu0
        %v1245 = vadd.f32 %v964, %v1244
        %v1246 = vpop.f32.mrf.mxu0
        %1247 = vdwg.mxu0
        %v1248 = vxor.u32 %v1245, 2147483648
        %v1249 = vmul.f32 %v1248, 1.442695
        %v1250 = vpow.pop %v1249
        %v1251 = vadd.f32 %v1250, 1.0
        %v1252 = vrcp.pop %v1251
        %v1253 = vmul.f32 1.0, %v1252
        %1255 = vrot.lane.b32.xlu0 %v1245, 32
        %v1256 = vpop.permute.xlu0 %1255
        %v1258 = vmul.f32 %v1253, %v1256
        %1260 = vrot.lane.b32.xlu0 %v1258, 64
        %v1261 = vpop.permute.xlu0 %1260
        %v1263 = vadd.f32 %v1245, %v1261
        %v1264 = vtanh.pop %v1263
        %v1265 = vsub.f32 1.0, %v1253
        %1267 = vrot.lane.b32.xlu0 %v1264, 96
        %v1268 = vpop.permute.xlu0 %1267
        %v1270 = vmul.f32 %v1265, %v1268
        %v1271 = vmul.f32 %v1253, %v1063
        %v1272 = vadd.f32 %v1270, %v1271
        %v1273 = vrot.slane %v1165, 2
        %1274 = vrot.lane.b32.xlu0 %v1273, 96
        %v1275 = vpop.permute.xlu0 %1274
        %v1276 = vsel %vm856, %v1275, 0
        %1278 = vmatprep.subr.mxu0 0.0
        %1279 = vmatpush1.msra.mxu0 0.0
        %1280 = vmatprep.subr.mxu0 0.0
        %1281 = vmatpush1.msra.mxu0 0.0
        %1282 = vmatprep.subr.mxu0 0.0
        %1283 = vmatpush1.msra.mxu0 0.0
        %1284 = vmatprep.subr.mxu0 0.0
        %1285 = vmatpush1.msra.mxu0 0.0
        %1286 = vmatprep.subr.mxu0 0.0
        %1287 = vmatpush1.msra.mxu0 0.0
        %1288 = vmatprep.subr.mxu0 0.0
        %1289 = vmatpush1.msra.mxu0 0.0
        %1290 = vmatprep.subr.mxu0 0.0
        %1291 = vmatpush1.msra.mxu0 0.0
        %1292 = vmatprep.subr.mxu0 0.0
        %1293 = vmatpush1.msra.mxu0 0.0
        %1294 = vmatprep.subr.mxu0 0.0
        %1295 = vmatpush1.msra.mxu0 0.0
        %1296 = vmatprep.subr.mxu0 0.0
        %1297 = vmatpush1.msra.mxu0 0.0
        %1298 = vmatprep.subr.mxu0 0.0
        %1299 = vmatpush1.msra.mxu0 0.0
        %1300 = vmatprep.subr.mxu0 0.0
        %1301 = vmatpush1.msra.mxu0 0.0
        %1302 = vmatprep.subr.mxu0 0.0
        %1303 = vmatpush1.msra.mxu0 %v841
        %1304 = vmatprep.subr.mxu0 0.0
        %1305 = vmatpush1.msra.mxu0 %v840
        %1306 = vmatprep.subr.mxu0 0.0
        %1307 = vmatpush1.msra.mxu0 %v839
        %1308 = vmatprep.subr.mxu0 0.0
        %1309 = vmatpush1.msra.mxu0 %v838
        %1310 = vmatprep.subr.mxu0 0.0
        %1311 = vmatpush2.msra.mxu0 0.0
        %1312 = vmatprep.subr.mxu0 0.0
        %1313 = vmatpush2.msra.mxu0 0.0
        %1314 = vmatprep.subr.mxu0 0.0
        %1315 = vmatpush2.msra.mxu0 0.0
        %1316 = vmatprep.subr.mxu0 0.0
        %1317 = vmatpush2.msra.mxu0 0.0
        %1318 = vmatprep.subr.mxu0 0.0
        %1319 = vmatpush2.msra.mxu0 0.0
        %1320 = vmatprep.subr.mxu0 0.0
        %1321 = vmatpush2.msra.mxu0 0.0
        %1322 = vmatprep.subr.mxu0 0.0
        %1323 = vmatpush2.msra.mxu0 0.0
        %1324 = vmatprep.subr.mxu0 0.0
        %1325 = vmatpush2.msra.mxu0 0.0
        %1326 = vmatprep.subr.mxu0 0.0
        %1327 = vmatpush2.msra.mxu0 0.0
        %1328 = vmatprep.subr.mxu0 0.0
        %1329 = vmatpush2.msra.mxu0 0.0
        %1330 = vmatprep.subr.mxu0 0.0
        %1331 = vmatpush2.msra.mxu0 0.0
        %1332 = vmatprep.subr.mxu0 0.0
        %1333 = vmatpush2.msra.mxu0 0.0
        %1334 = vmatprep.subr.mxu0 0.0
        %1335 = vmatpush2.msra.mxu0 0.0
        %1336 = vmatprep.subr.mxu0 0.0
        %1337 = vmatpush2.msra.mxu0 0.0
        %1338 = vmatprep.subr.mxu0 0.0
        %1339 = vmatpush2.msra.mxu0 0.0
        %1340 = vmatprep.subr.mxu0 0.0
        %1341 = vmatpush2.msra.mxu0 0.0
        %1342 = vmatprep.mubr.f32.mxu0 0.0
        %1343 = vmatmul.mubr.f32.gmra.mxu0 %v1276
        %v1344 = vpop.f32.mrf.mxu0
        %v1345 = vadd.f32 %v855, %v1344
        %v1346 = vpop.f32.mrf.mxu0
        %1347 = vdwg.mxu0
        %v1349 = vrot.slane %v1345, 4
        %v1351 = vadd.f32 %v830, %v1349
        %v1352 = vxor.u32 %v1351, 2147483648
        %v1353 = vmul.f32 %v1352, 1.442695
        %v1354 = vpow.pop %v1353
        %v1355 = vadd.f32 %v1354, 1.0
        %v1356 = vrcp.pop %v1355
        %v1357 = vmul.f32 1.0, %v1356
        %1358 = vrot.lane.b32.xlu0 %v1349, 64
        %v1359 = vpop.permute.xlu0 %1358
        %v1361 = vmul.f32 %v1357, %v1359
        %1363 = vrot.lane.b32.xlu0 %v1361, 64
        %v1364 = vpop.permute.xlu0 %1363
        %v1366 = vadd.f32 %v830, %v1364
        %v1367 = vtanh.pop %v1366
        %v1368 = vsub.f32 1.0, %v1357
        %1370 = vrot.lane.b32.xlu0 %v1367, 96
        %v1371 = vpop.permute.xlu0 %1370
        %v1373 = vmul.f32 %v1368, %v1371
        %v1374 = vrot.slane %v1165, 6
        %v1376 = vmul.f32 %v1357, %v1374
        %v1377 = vadd.f32 %v1373, %v1376
        %1379 = vrot.lane.b32.xlu0 %v1377, 96
        %v1380 = vpop.permute.xlu0 %1379
        %v1383 = vrot.slane %v1272, 4
        %v1385 = vsel %vm856, %v1380, %v1383
        %v1387 = vrot.slane %v1385, 4
        %v1388 = vsel %vm965, %v1387, 0
        %1390 = vmatprep.subr.mxu0 0.0
        %1391 = vmatpush1.msra.mxu0 0.0
        %1392 = vmatprep.subr.mxu0 0.0
        %1393 = vmatpush1.msra.mxu0 0.0
        %1394 = vmatprep.subr.mxu0 0.0
        %1395 = vmatpush1.msra.mxu0 0.0
        %1396 = vmatprep.subr.mxu0 0.0
        %1397 = vmatpush1.msra.mxu0 0.0
        %1398 = vmatprep.subr.mxu0 0.0
        %1399 = vmatpush1.msra.mxu0 0.0
        %1400 = vmatprep.subr.mxu0 0.0
        %1401 = vmatpush1.msra.mxu0 0.0
        %1402 = vmatprep.subr.mxu0 0.0
        %1403 = vmatpush1.msra.mxu0 0.0
        %1404 = vmatprep.subr.mxu0 0.0
        %1405 = vmatpush1.msra.mxu0 0.0
        %1406 = vmatprep.subr.mxu0 0.0
        %1407 = vmatpush1.msra.mxu0 %v850
        %1408 = vmatprep.subr.mxu0 0.0
        %1409 = vmatpush1.msra.mxu0 %v849
        %1410 = vmatprep.subr.mxu0 0.0
        %1411 = vmatpush1.msra.mxu0 %v848
        %1412 = vmatprep.subr.mxu0 0.0
        %1413 = vmatpush1.msra.mxu0 %v847
        %1414 = vmatprep.subr.mxu0 0.0
        %1415 = vmatpush1.msra.mxu0 %v846
        %1416 = vmatprep.subr.mxu0 0.0
        %1417 = vmatpush1.msra.mxu0 %v845
        %1418 = vmatprep.subr.mxu0 0.0
        %1419 = vmatpush1.msra.mxu0 %v844
        %1420 = vmatprep.subr.mxu0 0.0
        %1421 = vmatpush1.msra.mxu0 %v843
        %1422 = vmatprep.subr.mxu0 0.0
        %1423 = vmatpush2.msra.mxu0 0.0
        %1424 = vmatprep.subr.mxu0 0.0
        %1425 = vmatpush2.msra.mxu0 0.0
        %1426 = vmatprep.subr.mxu0 0.0
        %1427 = vmatpush2.msra.mxu0 0.0
        %1428 = vmatprep.subr.mxu0 0.0
        %1429 = vmatpush2.msra.mxu0 0.0
        %1430 = vmatprep.subr.mxu0 0.0
        %1431 = vmatpush2.msra.mxu0 0.0
        %1432 = vmatprep.subr.mxu0 0.0
        %1433 = vmatpush2.msra.mxu0 0.0
        %1434 = vmatprep.subr.mxu0 0.0
        %1435 = vmatpush2.msra.mxu0 0.0
        %1436 = vmatprep.subr.mxu0 0.0
        %1437 = vmatpush2.msra.mxu0 0.0
        %1438 = vmatprep.subr.mxu0 0.0
        %1439 = vmatpush2.msra.mxu0 0.0
        %1440 = vmatprep.subr.mxu0 0.0
        %1441 = vmatpush2.msra.mxu0 0.0
        %1442 = vmatprep.subr.mxu0 0.0
        %1443 = vmatpush2.msra.mxu0 0.0
        %1444 = vmatprep.subr.mxu0 0.0
        %1445 = vmatpush2.msra.mxu0 0.0
        %1446 = vmatprep.subr.mxu0 0.0
        %1447 = vmatpush2.msra.mxu0 0.0
        %1448 = vmatprep.subr.mxu0 0.0
        %1449 = vmatpush2.msra.mxu0 0.0
        %1450 = vmatprep.subr.mxu0 0.0
        %1451 = vmatpush2.msra.mxu0 0.0
        %1452 = vmatprep.subr.mxu0 0.0
        %1453 = vmatpush2.msra.mxu0 0.0
        %1454 = vmatprep.mubr.f32.mxu0 0.0
        %1455 = vmatmul.mubr.f32.gmra.mxu0 %v1388
        %v1456 = vpop.f32.mrf.mxu0
        %v1457 = vadd.f32 %v964, %v1456
        %v1458 = vpop.f32.mrf.mxu0
        %1459 = vdwg.mxu0
        %v1460 = vxor.u32 %v1457, 2147483648
        %v1461 = vmul.f32 %v1460, 1.442695
        %v1462 = vpow.pop %v1461
        %v1463 = vadd.f32 %v1462, 1.0
        %v1464 = vrcp.pop %v1463
        %v1465 = vmul.f32 1.0, %v1464
        %1467 = vrot.lane.b32.xlu0 %v1457, 32
        %v1468 = vpop.permute.xlu0 %1467
        %v1470 = vmul.f32 %v1465, %v1468
        %1472 = vrot.lane.b32.xlu0 %v1470, 64
        %v1473 = vpop.permute.xlu0 %1472
        %v1475 = vadd.f32 %v1457, %v1473
        %v1476 = vtanh.pop %v1475
        %v1477 = vsub.f32 1.0, %v1465
        %1479 = vrot.lane.b32.xlu0 %v1476, 96
        %v1480 = vpop.permute.xlu0 %1479
        %v1482 = vmul.f32 %v1477, %v1480
        %v1483 = vmul.f32 %v1465, %v1272
        %v1484 = vadd.f32 %v1482, %v1483
        %v1485 = vrot.slane %v1377, 4
        %1486 = vrot.lane.b32.xlu0 %v1485, 96
        %v1487 = vpop.permute.xlu0 %1486
        %v1488 = vsel %vm856, %v1487, 0
        %1490 = vmatprep.subr.mxu0 0.0
        %1491 = vmatpush1.msra.mxu0 0.0
        %1492 = vmatprep.subr.mxu0 0.0
        %1493 = vmatpush1.msra.mxu0 0.0
        %1494 = vmatprep.subr.mxu0 0.0
        %1495 = vmatpush1.msra.mxu0 0.0
        %1496 = vmatprep.subr.mxu0 0.0
        %1497 = vmatpush1.msra.mxu0 0.0
        %1498 = vmatprep.subr.mxu0 0.0
        %1499 = vmatpush1.msra.mxu0 0.0
        %1500 = vmatprep.subr.mxu0 0.0
        %1501 = vmatpush1.msra.mxu0 0.0
        %1502 = vmatprep.subr.mxu0 0.0
        %1503 = vmatpush1.msra.mxu0 0.0
        %1504 = vmatprep.subr.mxu0 0.0
        %1505 = vmatpush1.msra.mxu0 0.0
        %1506 = vmatprep.subr.mxu0 0.0
        %1507 = vmatpush1.msra.mxu0 0.0
        %1508 = vmatprep.subr.mxu0 0.0
        %1509 = vmatpush1.msra.mxu0 0.0
        %1510 = vmatprep.subr.mxu0 0.0
        %1511 = vmatpush1.msra.mxu0 0.0
        %1512 = vmatprep.subr.mxu0 0.0
        %1513 = vmatpush1.msra.mxu0 0.0
        %1514 = vmatprep.subr.mxu0 0.0
        %1515 = vmatpush1.msra.mxu0 %v841
        %1516 = vmatprep.subr.mxu0 0.0
        %1517 = vmatpush1.msra.mxu0 %v840
        %1518 = vmatprep.subr.mxu0 0.0
        %1519 = vmatpush1.msra.mxu0 %v839
        %1520 = vmatprep.subr.mxu0 0.0
        %1521 = vmatpush1.msra.mxu0 %v838
        %1522 = vmatprep.subr.mxu0 0.0
        %1523 = vmatpush2.msra.mxu0 0.0
        %1524 = vmatprep.subr.mxu0 0.0
        %1525 = vmatpush2.msra.mxu0 0.0
        %1526 = vmatprep.subr.mxu0 0.0
        %1527 = vmatpush2.msra.mxu0 0.0
        %1528 = vmatprep.subr.mxu0 0.0
        %1529 = vmatpush2.msra.mxu0 0.0
        %1530 = vmatprep.subr.mxu0 0.0
        %1531 = vmatpush2.msra.mxu0 0.0
        %1532 = vmatprep.subr.mxu0 0.0
        %1533 = vmatpush2.msra.mxu0 0.0
        %1534 = vmatprep.subr.mxu0 0.0
        %1535 = vmatpush2.msra.mxu0 0.0
        %1536 = vmatprep.subr.mxu0 0.0
        %1537 = vmatpush2.msra.mxu0 0.0
        %1538 = vmatprep.subr.mxu0 0.0
        %1539 = vmatpush2.msra.mxu0 0.0
        %1540 = vmatprep.subr.mxu0 0.0
        %1541 = vmatpush2.msra.mxu0 0.0
        %1542 = vmatprep.subr.mxu0 0.0
        %1543 = vmatpush2.msra.mxu0 0.0
        %1544 = vmatprep.subr.mxu0 0.0
        %1545 = vmatpush2.msra.mxu0 0.0
        %1546 = vmatprep.subr.mxu0 0.0
        %1547 = vmatpush2.msra.mxu0 0.0
        %1548 = vmatprep.subr.mxu0 0.0
        %1549 = vmatpush2.msra.mxu0 0.0
        %1550 = vmatprep.subr.mxu0 0.0
        %1551 = vmatpush2.msra.mxu0 0.0
        %1552 = vmatprep.subr.mxu0 0.0
        %1553 = vmatpush2.msra.mxu0 0.0
        %1554 = vmatprep.mubr.f32.mxu0 0.0
        %1555 = vmatmul.mubr.f32.gmra.mxu0 %v1488
        %v1556 = vpop.f32.mrf.mxu0
        %v1557 = vadd.f32 %v855, %v1556
        %v1558 = vpop.f32.mrf.mxu0
        %1559 = vdwg.mxu0
        %v1561 = vrot.slane %v1557, 2
        %v1563 = vadd.f32 %v830, %v1561
        %v1564 = vxor.u32 %v1563, 2147483648
        %v1565 = vmul.f32 %v1564, 1.442695
        %v1566 = vpow.pop %v1565
        %v1567 = vadd.f32 %v1566, 1.0
        %v1568 = vrcp.pop %v1567
        %v1569 = vmul.f32 1.0, %v1568
        %1570 = vrot.lane.b32.xlu0 %v1561, 64
        %v1571 = vpop.permute.xlu0 %1570
        %v1573 = vmul.f32 %v1569, %v1571
        %1575 = vrot.lane.b32.xlu0 %v1573, 64
        %v1576 = vpop.permute.xlu0 %1575
        %v1578 = vadd.f32 %v830, %v1576
        %v1579 = vtanh.pop %v1578
        %v1580 = vsub.f32 1.0, %v1569
        %1582 = vrot.lane.b32.xlu0 %v1579, 96
        %v1583 = vpop.permute.xlu0 %1582
        %v1585 = vmul.f32 %v1580, %v1583
        %v1586 = vrot.slane %v1377, 6
        %v1588 = vmul.f32 %v1569, %v1586
        %v1589 = vadd.f32 %v1585, %v1588
        %1591 = vrot.lane.b32.xlu0 %v1589, 96
        %v1592 = vpop.permute.xlu0 %1591
        %v1595 = vrot.slane %v1484, 2
        %v1597 = vsel %vm856, %v1592, %v1595
        %v1599 = vrot.slane %v1597, 6
        %v1600 = vsel %vm965, %v1599, 0
        %1602 = vmatprep.subr.mxu0 0.0
        %1603 = vmatpush1.msra.mxu0 0.0
        %1604 = vmatprep.subr.mxu0 0.0
        %1605 = vmatpush1.msra.mxu0 0.0
        %1606 = vmatprep.subr.mxu0 0.0
        %1607 = vmatpush1.msra.mxu0 0.0
        %1608 = vmatprep.subr.mxu0 0.0
        %1609 = vmatpush1.msra.mxu0 0.0
        %1610 = vmatprep.subr.mxu0 0.0
        %1611 = vmatpush1.msra.mxu0 0.0
        %1612 = vmatprep.subr.mxu0 0.0
        %1613 = vmatpush1.msra.mxu0 0.0
        %1614 = vmatprep.subr.mxu0 0.0
        %1615 = vmatpush1.msra.mxu0 0.0
        %1616 = vmatprep.subr.mxu0 0.0
        %1617 = vmatpush1.msra.mxu0 0.0
        %1618 = vmatprep.subr.mxu0 0.0
        %1619 = vmatpush1.msra.mxu0 %v850
        %1620 = vmatprep.subr.mxu0 0.0
        %1621 = vmatpush1.msra.mxu0 %v849
        %1622 = vmatprep.subr.mxu0 0.0
        %1623 = vmatpush1.msra.mxu0 %v848
        %1624 = vmatprep.subr.mxu0 0.0
        %1625 = vmatpush1.msra.mxu0 %v847
        %1626 = vmatprep.subr.mxu0 0.0
        %1627 = vmatpush1.msra.mxu0 %v846
        %1628 = vmatprep.subr.mxu0 0.0
        %1629 = vmatpush1.msra.mxu0 %v845
        %1630 = vmatprep.subr.mxu0 0.0
        %1631 = vmatpush1.msra.mxu0 %v844
        %1632 = vmatprep.subr.mxu0 0.0
        %1633 = vmatpush1.msra.mxu0 %v843
        %1634 = vmatprep.subr.mxu0 0.0
        %1635 = vmatpush2.msra.mxu0 0.0
        %1636 = vmatprep.subr.mxu0 0.0
        %1637 = vmatpush2.msra.mxu0 0.0
        %1638 = vmatprep.subr.mxu0 0.0
        %1639 = vmatpush2.msra.mxu0 0.0
        %1640 = vmatprep.subr.mxu0 0.0
        %1641 = vmatpush2.msra.mxu0 0.0
        %1642 = vmatprep.subr.mxu0 0.0
        %1643 = vmatpush2.msra.mxu0 0.0
        %1644 = vmatprep.subr.mxu0 0.0
        %1645 = vmatpush2.msra.mxu0 0.0
        %1646 = vmatprep.subr.mxu0 0.0
        %1647 = vmatpush2.msra.mxu0 0.0
        %1648 = vmatprep.subr.mxu0 0.0
        %1649 = vmatpush2.msra.mxu0 0.0
        %1650 = vmatprep.subr.mxu0 0.0
        %1651 = vmatpush2.msra.mxu0 0.0
        %1652 = vmatprep.subr.mxu0 0.0
        %1653 = vmatpush2.msra.mxu0 0.0
        %1654 = vmatprep.subr.mxu0 0.0
        %1655 = vmatpush2.msra.mxu0 0.0
        %1656 = vmatprep.subr.mxu0 0.0
        %1657 = vmatpush2.msra.mxu0 0.0
        %1658 = vmatprep.subr.mxu0 0.0
        %1659 = vmatpush2.msra.mxu0 0.0
        %1660 = vmatprep.subr.mxu0 0.0
        %1661 = vmatpush2.msra.mxu0 0.0
        %1662 = vmatprep.subr.mxu0 0.0
        %1663 = vmatpush2.msra.mxu0 0.0
        %1664 = vmatprep.subr.mxu0 0.0
        %1665 = vmatpush2.msra.mxu0 0.0
        %1666 = vmatprep.mubr.f32.mxu0 0.0
        %1667 = vmatmul.mubr.f32.gmra.mxu0 %v1600
        %v1668 = vpop.f32.mrf.mxu0
        %v1669 = vadd.f32 %v964, %v1668
        %v1670 = vpop.f32.mrf.mxu0
        %1671 = vdwg.mxu0
        %v1672 = vxor.u32 %v1669, 2147483648
        %v1673 = vmul.f32 %v1672, 1.442695
        %v1674 = vpow.pop %v1673
        %v1675 = vadd.f32 %v1674, 1.0
        %v1676 = vrcp.pop %v1675
        %v1677 = vmul.f32 1.0, %v1676
        %1679 = vrot.lane.b32.xlu0 %v1669, 32
        %v1680 = vpop.permute.xlu0 %1679
        %v1682 = vmul.f32 %v1677, %v1680
        %1684 = vrot.lane.b32.xlu0 %v1682, 64
        %v1685 = vpop.permute.xlu0 %1684
        %v1687 = vadd.f32 %v1669, %v1685
        %v1688 = vtanh.pop %v1687
        %v1689 = vsub.f32 1.0, %v1677
        %1691 = vrot.lane.b32.xlu0 %v1688, 96
        %v1692 = vpop.permute.xlu0 %1691
        %v1694 = vmul.f32 %v1689, %v1692
        %v1695 = vmul.f32 %v1677, %v1484
        %v1696 = vadd.f32 %v1694, %v1695
        %v1697 = vrot.slane %v1589, 6
        %1698 = vrot.lane.b32.xlu0 %v1697, 96
        %v1699 = vpop.permute.xlu0 %1698
        %v1700 = vsel %vm856, %v1699, 0
        %1702 = vmatprep.subr.mxu0 0.0
        %1703 = vmatpush1.msra.mxu0 0.0
        %1704 = vmatprep.subr.mxu0 0.0
        %1705 = vmatpush1.msra.mxu0 0.0
        %1706 = vmatprep.subr.mxu0 0.0
        %1707 = vmatpush1.msra.mxu0 0.0
        %1708 = vmatprep.subr.mxu0 0.0
        %1709 = vmatpush1.msra.mxu0 0.0
        %1710 = vmatprep.subr.mxu0 0.0
        %1711 = vmatpush1.msra.mxu0 0.0
        %1712 = vmatprep.subr.mxu0 0.0
        %1713 = vmatpush1.msra.mxu0 0.0
        %1714 = vmatprep.subr.mxu0 0.0
        %1715 = vmatpush1.msra.mxu0 0.0
        %1716 = vmatprep.subr.mxu0 0.0
        %1717 = vmatpush1.msra.mxu0 0.0
        %1718 = vmatprep.subr.mxu0 0.0
        %1719 = vmatpush1.msra.mxu0 0.0
        %1720 = vmatprep.subr.mxu0 0.0
        %1721 = vmatpush1.msra.mxu0 0.0
        %1722 = vmatprep.subr.mxu0 0.0
        %1723 = vmatpush1.msra.mxu0 0.0
        %1724 = vmatprep.subr.mxu0 0.0
        %1725 = vmatpush1.msra.mxu0 0.0
        %1726 = vmatprep.subr.mxu0 0.0
        %1727 = vmatpush1.msra.mxu0 %v841
        %1728 = vmatprep.subr.mxu0 0.0
        %1729 = vmatpush1.msra.mxu0 %v840
        %1730 = vmatprep.subr.mxu0 0.0
        %1731 = vmatpush1.msra.mxu0 %v839
        %1732 = vmatprep.subr.mxu0 0.0
        %1733 = vmatpush1.msra.mxu0 %v838
        %1734 = vmatprep.subr.mxu0 0.0
        %1735 = vmatpush2.msra.mxu0 0.0
        %1736 = vmatprep.subr.mxu0 0.0
        %1737 = vmatpush2.msra.mxu0 0.0
        %1738 = vmatprep.subr.mxu0 0.0
        %1739 = vmatpush2.msra.mxu0 0.0
        %1740 = vmatprep.subr.mxu0 0.0
        %1741 = vmatpush2.msra.mxu0 0.0
        %1742 = vmatprep.subr.mxu0 0.0
        %1743 = vmatpush2.msra.mxu0 0.0
        %1744 = vmatprep.subr.mxu0 0.0
        %1745 = vmatpush2.msra.mxu0 0.0
        %1746 = vmatprep.subr.mxu0 0.0
        %1747 = vmatpush2.msra.mxu0 0.0
        %1748 = vmatprep.subr.mxu0 0.0
        %1749 = vmatpush2.msra.mxu0 0.0
        %1750 = vmatprep.subr.mxu0 0.0
        %1751 = vmatpush2.msra.mxu0 0.0
        %1752 = vmatprep.subr.mxu0 0.0
        %1753 = vmatpush2.msra.mxu0 0.0
        %1754 = vmatprep.subr.mxu0 0.0
        %1755 = vmatpush2.msra.mxu0 0.0
        %1756 = vmatprep.subr.mxu0 0.0
        %1757 = vmatpush2.msra.mxu0 0.0
        %1758 = vmatprep.subr.mxu0 0.0
        %1759 = vmatpush2.msra.mxu0 0.0
        %1760 = vmatprep.subr.mxu0 0.0
        %1761 = vmatpush2.msra.mxu0 0.0
        %1762 = vmatprep.subr.mxu0 0.0
        %1763 = vmatpush2.msra.mxu0 0.0
        %1764 = vmatprep.subr.mxu0 0.0
        %1765 = vmatpush2.msra.mxu0 0.0
        %1766 = vmatprep.mubr.f32.mxu0 0.0
        %1767 = vmatmul.mubr.f32.gmra.mxu0 %v1700
        %v1768 = vpop.f32.mrf.mxu0
        %v1769 = vadd.f32 %v855, %v1768
        %v1770 = vpop.f32.mrf.mxu0
        %1771 = vdwg.mxu0
        %v1772 = vadd.f32 %v835, %v1769
        %v1773 = vxor.u32 %v1772, 2147483648
        %v1774 = vmul.f32 %v1773, 1.442695
        %v1775 = vpow.pop %v1774
        %v1776 = vadd.f32 %v1775, 1.0
        %v1777 = vrcp.pop %v1776
        %v1778 = vmul.f32 1.0, %v1777
        %1780 = vrot.lane.b32.xlu0 %v1769, 64
        %v1781 = vpop.permute.xlu0 %1780
        %v1783 = vmul.f32 %v1778, %v1781
        %1785 = vrot.lane.b32.xlu0 %v1783, 64
        %v1786 = vpop.permute.xlu0 %1785
        %v1788 = vadd.f32 %v835, %v1786
        %v1789 = vtanh.pop %v1788
        %v1790 = vsub.f32 1.0, %v1778
        %1792 = vrot.lane.b32.xlu0 %v1789, 96
        %v1793 = vpop.permute.xlu0 %1792
        %v1795 = vmul.f32 %v1790, %v1793
        %v1797 = vmul.f32 %v1778, %v1697
        %v1798 = vadd.f32 %v1795, %v1797
        %1800 = vrot.lane.b32.xlu0 %v1798, 96
        %v1801 = vpop.permute.xlu0 %1800
        %v1803 = vsel %vm856, %v1801, %v1696
        %v1805 = vsel %vm965, %v1803, 0
        %1807 = vmatprep.subr.mxu0 0.0
        %1808 = vmatpush1.msra.mxu0 0.0
        %1809 = vmatprep.subr.mxu0 0.0
        %1810 = vmatpush1.msra.mxu0 0.0
        %1811 = vmatprep.subr.mxu0 0.0
        %1812 = vmatpush1.msra.mxu0 0.0
        %1813 = vmatprep.subr.mxu0 0.0
        %1814 = vmatpush1.msra.mxu0 0.0
        %1815 = vmatprep.subr.mxu0 0.0
        %1816 = vmatpush1.msra.mxu0 0.0
        %1817 = vmatprep.subr.mxu0 0.0
        %1818 = vmatpush1.msra.mxu0 0.0
        %1819 = vmatprep.subr.mxu0 0.0
        %1820 = vmatpush1.msra.mxu0 0.0
        %1821 = vmatprep.subr.mxu0 0.0
        %1822 = vmatpush1.msra.mxu0 0.0
        %1823 = vmatprep.subr.mxu0 0.0
        %1824 = vmatpush1.msra.mxu0 %v850
        %1825 = vmatprep.subr.mxu0 0.0
        %1826 = vmatpush1.msra.mxu0 %v849
        %1827 = vmatprep.subr.mxu0 0.0
        %1828 = vmatpush1.msra.mxu0 %v848
        %1829 = vmatprep.subr.mxu0 0.0
        %1830 = vmatpush1.msra.mxu0 %v847
        %1831 = vmatprep.subr.mxu0 0.0
        %1832 = vmatpush1.msra.mxu0 %v846
        %1833 = vmatprep.subr.mxu0 0.0
        %1834 = vmatpush1.msra.mxu0 %v845
        %1835 = vmatprep.subr.mxu0 0.0
        %1836 = vmatpush1.msra.mxu0 %v844
        %1837 = vmatprep.subr.mxu0 0.0
        %1838 = vmatpush1.msra.mxu0 %v843
        %1839 = vmatprep.subr.mxu0 0.0
        %1840 = vmatpush2.msra.mxu0 0.0
        %1841 = vmatprep.subr.mxu0 0.0
        %1842 = vmatpush2.msra.mxu0 0.0
        %1843 = vmatprep.subr.mxu0 0.0
        %1844 = vmatpush2.msra.mxu0 0.0
        %1845 = vmatprep.subr.mxu0 0.0
        %1846 = vmatpush2.msra.mxu0 0.0
        %1847 = vmatprep.subr.mxu0 0.0
        %1848 = vmatpush2.msra.mxu0 0.0
        %1849 = vmatprep.subr.mxu0 0.0
        %1850 = vmatpush2.msra.mxu0 0.0
        %1851 = vmatprep.subr.mxu0 0.0
        %1852 = vmatpush2.msra.mxu0 0.0
        %1853 = vmatprep.subr.mxu0 0.0
        %1854 = vmatpush2.msra.mxu0 0.0
        %1855 = vmatprep.subr.mxu0 0.0
        %1856 = vmatpush2.msra.mxu0 0.0
        %1857 = vmatprep.subr.mxu0 0.0
        %1858 = vmatpush2.msra.mxu0 0.0
        %1859 = vmatprep.subr.mxu0 0.0
        %1860 = vmatpush2.msra.mxu0 0.0
        %1861 = vmatprep.subr.mxu0 0.0
        %1862 = vmatpush2.msra.mxu0 0.0
        %1863 = vmatprep.subr.mxu0 0.0
        %1864 = vmatpush2.msra.mxu0 0.0
        %1865 = vmatprep.subr.mxu0 0.0
        %1866 = vmatpush2.msra.mxu0 0.0
        %1867 = vmatprep.subr.mxu0 0.0
        %1868 = vmatpush2.msra.mxu0 0.0
        %1869 = vmatprep.subr.mxu0 0.0
        %1870 = vmatpush2.msra.mxu0 0.0
        %1871 = vmatprep.mubr.f32.mxu0 0.0
        %1872 = vmatmul.mubr.f32.gmra.mxu0 %v1805
        %v1873 = vpop.f32.mrf.mxu0
        %v1874 = vadd.f32 %v964, %v1873
        %v1875 = vpop.f32.mrf.mxu0
        %1876 = vdwg.mxu0
        %v1877 = vxor.u32 %v1874, 2147483648
        %v1878 = vmul.f32 %v1877, 1.442695
        %v1879 = vpow.pop %v1878
        %v1880 = vadd.f32 %v1879, 1.0
        %v1881 = vrcp.pop %v1880
        %v1882 = vmul.f32 1.0, %v1881
        %1884 = vrot.lane.b32.xlu0 %v1874, 32
        %v1885 = vpop.permute.xlu0 %1884
        %v1887 = vmul.f32 %v1882, %v1885
        %1889 = vrot.lane.b32.xlu0 %v1887, 64
        %v1890 = vpop.permute.xlu0 %1889
        %v1892 = vadd.f32 %v1874, %v1890
        %v1893 = vtanh.pop %v1892
        %v1894 = vsub.f32 1.0, %v1882
        %1896 = vrot.lane.b32.xlu0 %v1893, 96
        %v1897 = vpop.permute.xlu0 %1896
        %v1899 = vmul.f32 %v1894, %v1897
        %v1900 = vmul.f32 %v1882, %v1696
        %v1901 = vadd.f32 %v1899, %v1900
        %v1902 = vsel %vm856, %v1801, 0
        %1904 = vmatprep.subr.mxu0 0.0
        %1905 = vmatpush1.msra.mxu0 0.0
        %1906 = vmatprep.subr.mxu0 0.0
        %1907 = vmatpush1.msra.mxu0 0.0
        %1908 = vmatprep.subr.mxu0 0.0
        %1909 = vmatpush1.msra.mxu0 0.0
        %1910 = vmatprep.subr.mxu0 0.0
        %1911 = vmatpush1.msra.mxu0 0.0
        %1912 = vmatprep.subr.mxu0 0.0
        %1913 = vmatpush1.msra.mxu0 0.0
        %1914 = vmatprep.subr.mxu0 0.0
        %1915 = vmatpush1.msra.mxu0 0.0
        %1916 = vmatprep.subr.mxu0 0.0
        %1917 = vmatpush1.msra.mxu0 0.0
        %1918 = vmatprep.subr.mxu0 0.0
        %1919 = vmatpush1.msra.mxu0 0.0
        %1920 = vmatprep.subr.mxu0 0.0
        %1921 = vmatpush1.msra.mxu0 0.0
        %1922 = vmatprep.subr.mxu0 0.0
        %1923 = vmatpush1.msra.mxu0 0.0
        %1924 = vmatprep.subr.mxu0 0.0
        %1925 = vmatpush1.msra.mxu0 0.0
        %1926 = vmatprep.subr.mxu0 0.0
        %1927 = vmatpush1.msra.mxu0 0.0
        %1928 = vmatprep.subr.mxu0 0.0
        %1929 = vmatpush1.msra.mxu0 %v841
        %1930 = vmatprep.subr.mxu0 0.0
        %1931 = vmatpush1.msra.mxu0 %v840
        %1932 = vmatprep.subr.mxu0 0.0
        %1933 = vmatpush1.msra.mxu0 %v839
        %1934 = vmatprep.subr.mxu0 0.0
        %1935 = vmatpush1.msra.mxu0 %v838
        %1936 = vmatprep.subr.mxu0 0.0
        %1937 = vmatpush2.msra.mxu0 0.0
        %1938 = vmatprep.subr.mxu0 0.0
        %1939 = vmatpush2.msra.mxu0 0.0
        %1940 = vmatprep.subr.mxu0 0.0
        %1941 = vmatpush2.msra.mxu0 0.0
        %1942 = vmatprep.subr.mxu0 0.0
        %1943 = vmatpush2.msra.mxu0 0.0
        %1944 = vmatprep.subr.mxu0 0.0
        %1945 = vmatpush2.msra.mxu0 0.0
        %1946 = vmatprep.subr.mxu0 0.0
        %1947 = vmatpush2.msra.mxu0 0.0
        %1948 = vmatprep.subr.mxu0 0.0
        %1949 = vmatpush2.msra.mxu0 0.0
        %1950 = vmatprep.subr.mxu0 0.0
        %1951 = vmatpush2.msra.mxu0 0.0
        %1952 = vmatprep.subr.mxu0 0.0
        %1953 = vmatpush2.msra.mxu0 0.0
        %1954 = vmatprep.subr.mxu0 0.0
        %1955 = vmatpush2.msra.mxu0 0.0
        %1956 = vmatprep.subr.mxu0 0.0
        %1957 = vmatpush2.msra.mxu0 0.0
        %1958 = vmatprep.subr.mxu0 0.0
        %1959 = vmatpush2.msra.mxu0 0.0
        %1960 = vmatprep.subr.mxu0 0.0
        %1961 = vmatpush2.msra.mxu0 0.0
        %1962 = vmatprep.subr.mxu0 0.0
        %1963 = vmatpush2.msra.mxu0 0.0
        %1964 = vmatprep.subr.mxu0 0.0
        %1965 = vmatpush2.msra.mxu0 0.0
        %1966 = vmatprep.subr.mxu0 0.0
        %1967 = vmatpush2.msra.mxu0 0.0
        %1968 = vmatprep.mubr.f32.mxu0 0.0
        %1969 = vmatmul.mubr.f32.gmra.mxu0 %v1902
        %v1970 = vpop.f32.mrf.mxu0
        %v1971 = vadd.f32 %v855, %v1970
        %v1972 = vpop.f32.mrf.mxu0
        %1973 = vdwg.mxu0
        %v1975 = vrot.slane %v1971, 6
        %v1977 = vadd.f32 %v835, %v1975
        %v1978 = vxor.u32 %v1977, 2147483648
        %v1979 = vmul.f32 %v1978, 1.442695
        %v1980 = vpow.pop %v1979
        %v1981 = vadd.f32 %v1980, 1.0
        %v1982 = vrcp.pop %v1981
        %v1983 = vmul.f32 1.0, %v1982
        %1984 = vrot.lane.b32.xlu0 %v1975, 64
        %v1985 = vpop.permute.xlu0 %1984
        %v1987 = vmul.f32 %v1983, %v1985
        %1989 = vrot.lane.b32.xlu0 %v1987, 64
        %v1990 = vpop.permute.xlu0 %1989
        %v1992 = vadd.f32 %v835, %v1990
        %v1993 = vtanh.pop %v1992
        %v1994 = vsub.f32 1.0, %v1983
        %1996 = vrot.lane.b32.xlu0 %v1993, 96
        %v1997 = vpop.permute.xlu0 %1996
        %v1999 = vmul.f32 %v1994, %v1997
        %v2000 = vrot.slane %v1798, 6
        %v2002 = vmul.f32 %v1983, %v2000
        %v2003 = vadd.f32 %v1999, %v2002
        %2005 = vrot.lane.b32.xlu0 %v2003, 96
        %v2006 = vpop.permute.xlu0 %2005
        %v2009 = vrot.slane %v1901, 6
        %v2011 = vsel %vm856, %v2006, %v2009
        %v2013 = vrot.slane %v2011, 2
        %v2014 = vsel %vm965, %v2013, 0
        %2016 = vmatprep.subr.mxu0 0.0
        %2017 = vmatpush1.msra.mxu0 0.0
        %2018 = vmatprep.subr.mxu0 0.0
        %2019 = vmatpush1.msra.mxu0 0.0
        %2020 = vmatprep.subr.mxu0 0.0
        %2021 = vmatpush1.msra.mxu0 0.0
        %2022 = vmatprep.subr.mxu0 0.0
        %2023 = vmatpush1.msra.mxu0 0.0
        %2024 = vmatprep.subr.mxu0 0.0
        %2025 = vmatpush1.msra.mxu0 0.0
        %2026 = vmatprep.subr.mxu0 0.0
        %2027 = vmatpush1.msra.mxu0 0.0
        %2028 = vmatprep.subr.mxu0 0.0
        %2029 = vmatpush1.msra.mxu0 0.0
        %2030 = vmatprep.subr.mxu0 0.0
        %2031 = vmatpush1.msra.mxu0 0.0
        %2032 = vmatprep.subr.mxu0 0.0
        %2033 = vmatpush1.msra.mxu0 %v850
        %2034 = vmatprep.subr.mxu0 0.0
        %2035 = vmatpush1.msra.mxu0 %v849
        %2036 = vmatprep.subr.mxu0 0.0
        %2037 = vmatpush1.msra.mxu0 %v848
        %2038 = vmatprep.subr.mxu0 0.0
        %2039 = vmatpush1.msra.mxu0 %v847
        %2040 = vmatprep.subr.mxu0 0.0
        %2041 = vmatpush1.msra.mxu0 %v846
        %2042 = vmatprep.subr.mxu0 0.0
        %2043 = vmatpush1.msra.mxu0 %v845
        %2044 = vmatprep.subr.mxu0 0.0
        %2045 = vmatpush1.msra.mxu0 %v844
        %2046 = vmatprep.subr.mxu0 0.0
        %2047 = vmatpush1.msra.mxu0 %v843
        %2048 = vmatprep.subr.mxu0 0.0
        %2049 = vmatpush2.msra.mxu0 0.0
        %2050 = vmatprep.subr.mxu0 0.0
        %2051 = vmatpush2.msra.mxu0 0.0
        %2052 = vmatprep.subr.mxu0 0.0
        %2053 = vmatpush2.msra.mxu0 0.0
        %2054 = vmatprep.subr.mxu0 0.0
        %2055 = vmatpush2.msra.mxu0 0.0
        %2056 = vmatprep.subr.mxu0 0.0
        %2057 = vmatpush2.msra.mxu0 0.0
        %2058 = vmatprep.subr.mxu0 0.0
        %2059 = vmatpush2.msra.mxu0 0.0
        %2060 = vmatprep.subr.mxu0 0.0
        %2061 = vmatpush2.msra.mxu0 0.0
        %2062 = vmatprep.subr.mxu0 0.0
        %2063 = vmatpush2.msra.mxu0 0.0
        %2064 = vmatprep.subr.mxu0 0.0
        %2065 = vmatpush2.msra.mxu0 0.0
        %2066 = vmatprep.subr.mxu0 0.0
        %2067 = vmatpush2.msra.mxu0 0.0
        %2068 = vmatprep.subr.mxu0 0.0
        %2069 = vmatpush2.msra.mxu0 0.0
        %2070 = vmatprep.subr.mxu0 0.0
        %2071 = vmatpush2.msra.mxu0 0.0
        %2072 = vmatprep.subr.mxu0 0.0
        %2073 = vmatpush2.msra.mxu0 0.0
        %2074 = vmatprep.subr.mxu0 0.0
        %2075 = vmatpush2.msra.mxu0 0.0
        %2076 = vmatprep.subr.mxu0 0.0
        %2077 = vmatpush2.msra.mxu0 0.0
        %2078 = vmatprep.subr.mxu0 0.0
        %2079 = vmatpush2.msra.mxu0 0.0
        %2080 = vmatprep.mubr.f32.mxu0 0.0
        %2081 = vmatmul.mubr.f32.gmra.mxu0 %v2014
        %v2082 = vpop.f32.mrf.mxu0
        %v2083 = vadd.f32 %v964, %v2082
        %v2084 = vpop.f32.mrf.mxu0
        %2085 = vdwg.mxu0
        %v2086 = vxor.u32 %v2083, 2147483648
        %v2087 = vmul.f32 %v2086, 1.442695
        %v2088 = vpow.pop %v2087
        %v2089 = vadd.f32 %v2088, 1.0
        %v2090 = vrcp.pop %v2089
        %v2091 = vmul.f32 1.0, %v2090
        %2093 = vrot.lane.b32.xlu0 %v2083, 32
        %v2094 = vpop.permute.xlu0 %2093
        %v2096 = vmul.f32 %v2091, %v2094
        %2098 = vrot.lane.b32.xlu0 %v2096, 64
        %v2099 = vpop.permute.xlu0 %2098
        %v2101 = vadd.f32 %v2083, %v2099
        %v2102 = vtanh.pop %v2101
        %v2103 = vsub.f32 1.0, %v2091
        %2105 = vrot.lane.b32.xlu0 %v2102, 96
        %v2106 = vpop.permute.xlu0 %2105
        %v2108 = vmul.f32 %v2103, %v2106
        %v2109 = vmul.f32 %v2091, %v1901
        %v2110 = vadd.f32 %v2108, %v2109
        %v2111 = vrot.slane %v2003, 2
        %2112 = vrot.lane.b32.xlu0 %v2111, 96
        %v2113 = vpop.permute.xlu0 %2112
        %v2114 = vsel %vm856, %v2113, 0
        %2116 = vmatprep.subr.mxu0 0.0
        %2117 = vmatpush1.msra.mxu0 0.0
        %2118 = vmatprep.subr.mxu0 0.0
        %2119 = vmatpush1.msra.mxu0 0.0
        %2120 = vmatprep.subr.mxu0 0.0
        %2121 = vmatpush1.msra.mxu0 0.0
        %2122 = vmatprep.subr.mxu0 0.0
        %2123 = vmatpush1.msra.mxu0 0.0
        %2124 = vmatprep.subr.mxu0 0.0
        %2125 = vmatpush1.msra.mxu0 0.0
        %2126 = vmatprep.subr.mxu0 0.0
        %2127 = vmatpush1.msra.mxu0 0.0
        %2128 = vmatprep.subr.mxu0 0.0
        %2129 = vmatpush1.msra.mxu0 0.0
        %2130 = vmatprep.subr.mxu0 0.0
        %2131 = vmatpush1.msra.mxu0 0.0
        %2132 = vmatprep.subr.mxu0 0.0
        %2133 = vmatpush1.msra.mxu0 0.0
        %2134 = vmatprep.subr.mxu0 0.0
        %2135 = vmatpush1.msra.mxu0 0.0
        %2136 = vmatprep.subr.mxu0 0.0
        %2137 = vmatpush1.msra.mxu0 0.0
        %2138 = vmatprep.subr.mxu0 0.0
        %2139 = vmatpush1.msra.mxu0 0.0
        %2140 = vmatprep.subr.mxu0 0.0
        %2141 = vmatpush1.msra.mxu0 %v841
        %2142 = vmatprep.subr.mxu0 0.0
        %2143 = vmatpush1.msra.mxu0 %v840
        %2144 = vmatprep.subr.mxu0 0.0
        %2145 = vmatpush1.msra.mxu0 %v839
        %2146 = vmatprep.subr.mxu0 0.0
        %2147 = vmatpush1.msra.mxu0 %v838
        %2148 = vmatprep.subr.mxu0 0.0
        %2149 = vmatpush2.msra.mxu0 0.0
        %2150 = vmatprep.subr.mxu0 0.0
        %2151 = vmatpush2.msra.mxu0 0.0
        %2152 = vmatprep.subr.mxu0 0.0
        %2153 = vmatpush2.msra.mxu0 0.0
        %2154 = vmatprep.subr.mxu0 0.0
        %2155 = vmatpush2.msra.mxu0 0.0
        %2156 = vmatprep.subr.mxu0 0.0
        %2157 = vmatpush2.msra.mxu0 0.0
        %2158 = vmatprep.subr.mxu0 0.0
        %2159 = vmatpush2.msra.mxu0 0.0
        %2160 = vmatprep.subr.mxu0 0.0
        %2161 = vmatpush2.msra.mxu0 0.0
        %2162 = vmatprep.subr.mxu0 0.0
        %2163 = vmatpush2.msra.mxu0 0.0
        %2164 = vmatprep.subr.mxu0 0.0
        %2165 = vmatpush2.msra.mxu0 0.0
        %2166 = vmatprep.subr.mxu0 0.0
        %2167 = vmatpush2.msra.mxu0 0.0
        %2168 = vmatprep.subr.mxu0 0.0
        %2169 = vmatpush2.msra.mxu0 0.0
        %2170 = vmatprep.subr.mxu0 0.0
        %2171 = vmatpush2.msra.mxu0 0.0
        %2172 = vmatprep.subr.mxu0 0.0
        %2173 = vmatpush2.msra.mxu0 0.0
        %2174 = vmatprep.subr.mxu0 0.0
        %2175 = vmatpush2.msra.mxu0 0.0
        %2176 = vmatprep.subr.mxu0 0.0
        %2177 = vmatpush2.msra.mxu0 0.0
        %2178 = vmatprep.subr.mxu0 0.0
        %2179 = vmatpush2.msra.mxu0 0.0
        %2180 = vmatprep.mubr.f32.mxu0 0.0
        %2181 = vmatmul.mubr.f32.gmra.mxu0 %v2114
        %v2182 = vpop.f32.mrf.mxu0
        %v2183 = vadd.f32 %v855, %v2182
        %v2184 = vpop.f32.mrf.mxu0
        %2185 = vdwg.mxu0
        %v2187 = vrot.slane %v2183, 4
        %v2189 = vadd.f32 %v835, %v2187
        %v2190 = vxor.u32 %v2189, 2147483648
        %v2191 = vmul.f32 %v2190, 1.442695
        %v2192 = vpow.pop %v2191
        %v2193 = vadd.f32 %v2192, 1.0
        %v2194 = vrcp.pop %v2193
        %v2195 = vmul.f32 1.0, %v2194
        %2196 = vrot.lane.b32.xlu0 %v2187, 64
        %v2197 = vpop.permute.xlu0 %2196
        %v2199 = vmul.f32 %v2195, %v2197
        %2201 = vrot.lane.b32.xlu0 %v2199, 64
        %v2202 = vpop.permute.xlu0 %2201
        %v2204 = vadd.f32 %v835, %v2202
        %v2205 = vtanh.pop %v2204
        %v2206 = vsub.f32 1.0, %v2195
        %2208 = vrot.lane.b32.xlu0 %v2205, 96
        %v2209 = vpop.permute.xlu0 %2208
        %v2211 = vmul.f32 %v2206, %v2209
        %v2212 = vrot.slane %v2003, 6
        %v2214 = vmul.f32 %v2195, %v2212
        %v2215 = vadd.f32 %v2211, %v2214
        %2217 = vrot.lane.b32.xlu0 %v2215, 96
        %v2218 = vpop.permute.xlu0 %2217
        %v2221 = vrot.slane %v2110, 4
        %v2223 = vsel %vm856, %v2218, %v2221
        %v2225 = vrot.slane %v2223, 4
        %v2226 = vsel %vm965, %v2225, 0
        %2228 = vmatprep.subr.mxu0 0.0
        %2229 = vmatpush1.msra.mxu0 0.0
        %2230 = vmatprep.subr.mxu0 0.0
        %2231 = vmatpush1.msra.mxu0 0.0
        %2232 = vmatprep.subr.mxu0 0.0
        %2233 = vmatpush1.msra.mxu0 0.0
        %2234 = vmatprep.subr.mxu0 0.0
        %2235 = vmatpush1.msra.mxu0 0.0
        %2236 = vmatprep.subr.mxu0 0.0
        %2237 = vmatpush1.msra.mxu0 0.0
        %2238 = vmatprep.subr.mxu0 0.0
        %2239 = vmatpush1.msra.mxu0 0.0
        %2240 = vmatprep.subr.mxu0 0.0
        %2241 = vmatpush1.msra.mxu0 0.0
        %2242 = vmatprep.subr.mxu0 0.0
        %2243 = vmatpush1.msra.mxu0 0.0
        %2244 = vmatprep.subr.mxu0 0.0
        %2245 = vmatpush1.msra.mxu0 %v850
        %2246 = vmatprep.subr.mxu0 0.0
        %2247 = vmatpush1.msra.mxu0 %v849
        %2248 = vmatprep.subr.mxu0 0.0
        %2249 = vmatpush1.msra.mxu0 %v848
        %2250 = vmatprep.subr.mxu0 0.0
        %2251 = vmatpush1.msra.mxu0 %v847
        %2252 = vmatprep.subr.mxu0 0.0
        %2253 = vmatpush1.msra.mxu0 %v846
        %2254 = vmatprep.subr.mxu0 0.0
        %2255 = vmatpush1.msra.mxu0 %v845
        %2256 = vmatprep.subr.mxu0 0.0
        %2257 = vmatpush1.msra.mxu0 %v844
        %2258 = vmatprep.subr.mxu0 0.0
        %2259 = vmatpush1.msra.mxu0 %v843
        %2260 = vmatprep.subr.mxu0 0.0
        %2261 = vmatpush2.msra.mxu0 0.0
        %2262 = vmatprep.subr.mxu0 0.0
        %2263 = vmatpush2.msra.mxu0 0.0
        %2264 = vmatprep.subr.mxu0 0.0
        %2265 = vmatpush2.msra.mxu0 0.0
        %2266 = vmatprep.subr.mxu0 0.0
        %2267 = vmatpush2.msra.mxu0 0.0
        %2268 = vmatprep.subr.mxu0 0.0
        %2269 = vmatpush2.msra.mxu0 0.0
        %2270 = vmatprep.subr.mxu0 0.0
        %2271 = vmatpush2.msra.mxu0 0.0
        %2272 = vmatprep.subr.mxu0 0.0
        %2273 = vmatpush2.msra.mxu0 0.0
        %2274 = vmatprep.subr.mxu0 0.0
        %2275 = vmatpush2.msra.mxu0 0.0
        %2276 = vmatprep.subr.mxu0 0.0
        %2277 = vmatpush2.msra.mxu0 0.0
        %2278 = vmatprep.subr.mxu0 0.0
        %2279 = vmatpush2.msra.mxu0 0.0
        %2280 = vmatprep.subr.mxu0 0.0
        %2281 = vmatpush2.msra.mxu0 0.0
        %2282 = vmatprep.subr.mxu0 0.0
        %2283 = vmatpush2.msra.mxu0 0.0
        %2284 = vmatprep.subr.mxu0 0.0
        %2285 = vmatpush2.msra.mxu0 0.0
        %2286 = vmatprep.subr.mxu0 0.0
        %2287 = vmatpush2.msra.mxu0 0.0
        %2288 = vmatprep.subr.mxu0 0.0
        %2289 = vmatpush2.msra.mxu0 0.0
        %2290 = vmatprep.subr.mxu0 0.0
        %2291 = vmatpush2.msra.mxu0 0.0
        %2292 = vmatprep.mubr.f32.mxu0 0.0
        %2293 = vmatmul.mubr.f32.gmra.mxu0 %v2226
        %v2294 = vpop.f32.mrf.mxu0
        %v2295 = vadd.f32 %v964, %v2294
        %v2296 = vpop.f32.mrf.mxu0
        %2297 = vdwg.mxu0
        %v2298 = vxor.u32 %v2295, 2147483648
        %v2299 = vmul.f32 %v2298, 1.442695
        %v2300 = vpow.pop %v2299
        %v2301 = vadd.f32 %v2300, 1.0
        %v2302 = vrcp.pop %v2301
        %v2303 = vmul.f32 1.0, %v2302
        %2305 = vrot.lane.b32.xlu0 %v2295, 32
        %v2306 = vpop.permute.xlu0 %2305
        %v2308 = vmul.f32 %v2303, %v2306
        %2310 = vrot.lane.b32.xlu0 %v2308, 64
        %v2311 = vpop.permute.xlu0 %2310
        %v2313 = vadd.f32 %v2295, %v2311
        %v2314 = vtanh.pop %v2313
        %v2315 = vsub.f32 1.0, %v2303
        %2317 = vrot.lane.b32.xlu0 %v2314, 96
        %v2318 = vpop.permute.xlu0 %2317
        %v2320 = vmul.f32 %v2315, %v2318
        %v2321 = vmul.f32 %v2303, %v2110
        %v2322 = vadd.f32 %v2320, %v2321
        %v2323 = vrot.slane %v2215, 4
        %2324 = vrot.lane.b32.xlu0 %v2323, 96
        %v2325 = vpop.permute.xlu0 %2324
        %v2326 = vsel %vm856, %v2325, 0
        %2328 = vmatprep.subr.mxu0 0.0
        %2329 = vmatpush1.msra.mxu0 0.0
        %2330 = vmatprep.subr.mxu0 0.0
        %2331 = vmatpush1.msra.mxu0 0.0
        %2332 = vmatprep.subr.mxu0 0.0
        %2333 = vmatpush1.msra.mxu0 0.0
        %2334 = vmatprep.subr.mxu0 0.0
        %2335 = vmatpush1.msra.mxu0 0.0
        %2336 = vmatprep.subr.mxu0 0.0
        %2337 = vmatpush1.msra.mxu0 0.0
        %2338 = vmatprep.subr.mxu0 0.0
        %2339 = vmatpush1.msra.mxu0 0.0
        %2340 = vmatprep.subr.mxu0 0.0
        %2341 = vmatpush1.msra.mxu0 0.0
        %2342 = vmatprep.subr.mxu0 0.0
        %2343 = vmatpush1.msra.mxu0 0.0
        %2344 = vmatprep.subr.mxu0 0.0
        %2345 = vmatpush1.msra.mxu0 0.0
        %2346 = vmatprep.subr.mxu0 0.0
        %2347 = vmatpush1.msra.mxu0 0.0
        %2348 = vmatprep.subr.mxu0 0.0
        %2349 = vmatpush1.msra.mxu0 0.0
        %2350 = vmatprep.subr.mxu0 0.0
        %2351 = vmatpush1.msra.mxu0 0.0
        %2352 = vmatprep.subr.mxu0 0.0
        %2353 = vmatpush1.msra.mxu0 %v841
        %2354 = vmatprep.subr.mxu0 0.0
        %2355 = vmatpush1.msra.mxu0 %v840
        %2356 = vmatprep.subr.mxu0 0.0
        %2357 = vmatpush1.msra.mxu0 %v839
        %2358 = vmatprep.subr.mxu0 0.0
        %2359 = vmatpush1.msra.mxu0 %v838
        %2360 = vmatprep.subr.mxu0 0.0
        %2361 = vmatpush2.msra.mxu0 0.0
        %2362 = vmatprep.subr.mxu0 0.0
        %2363 = vmatpush2.msra.mxu0 0.0
        %2364 = vmatprep.subr.mxu0 0.0
        %2365 = vmatpush2.msra.mxu0 0.0
        %2366 = vmatprep.subr.mxu0 0.0
        %2367 = vmatpush2.msra.mxu0 0.0
        %2368 = vmatprep.subr.mxu0 0.0
        %2369 = vmatpush2.msra.mxu0 0.0
        %2370 = vmatprep.subr.mxu0 0.0
        %2371 = vmatpush2.msra.mxu0 0.0
        %2372 = vmatprep.subr.mxu0 0.0
        %2373 = vmatpush2.msra.mxu0 0.0
        %2374 = vmatprep.subr.mxu0 0.0
        %2375 = vmatpush2.msra.mxu0 0.0
        %2376 = vmatprep.subr.mxu0 0.0
        %2377 = vmatpush2.msra.mxu0 0.0
        %2378 = vmatprep.subr.mxu0 0.0
        %2379 = vmatpush2.msra.mxu0 0.0
        %2380 = vmatprep.subr.mxu0 0.0
        %2381 = vmatpush2.msra.mxu0 0.0
        %2382 = vmatprep.subr.mxu0 0.0
        %2383 = vmatpush2.msra.mxu0 0.0
        %2384 = vmatprep.subr.mxu0 0.0
        %2385 = vmatpush2.msra.mxu0 0.0
        %2386 = vmatprep.subr.mxu0 0.0
        %2387 = vmatpush2.msra.mxu0 0.0
        %2388 = vmatprep.subr.mxu0 0.0
        %2389 = vmatpush2.msra.mxu0 0.0
        %2390 = vmatprep.subr.mxu0 0.0
        %2391 = vmatpush2.msra.mxu0 0.0
        %2392 = vmatprep.mubr.f32.mxu0 0.0
        %2393 = vmatmul.mubr.f32.gmra.mxu0 %v2326
        %v2394 = vpop.f32.mrf.mxu0
        %v2395 = vadd.f32 %v855, %v2394
        %v2396 = vpop.f32.mrf.mxu0
        %2397 = vdwg.mxu0
        %v2399 = vrot.slane %v2395, 2
        %v2401 = vadd.f32 %v835, %v2399
        %v2402 = vxor.u32 %v2401, 2147483648
        %v2403 = vmul.f32 %v2402, 1.442695
        %v2404 = vpow.pop %v2403
        %v2405 = vadd.f32 %v2404, 1.0
        %v2406 = vrcp.pop %v2405
        %v2407 = vmul.f32 1.0, %v2406
        %2408 = vrot.lane.b32.xlu0 %v2399, 64
        %v2409 = vpop.permute.xlu0 %2408
        %v2411 = vmul.f32 %v2407, %v2409
        %2413 = vrot.lane.b32.xlu0 %v2411, 64
        %v2414 = vpop.permute.xlu0 %2413
        %v2416 = vadd.f32 %v835, %v2414
        %v2417 = vtanh.pop %v2416
        %v2418 = vsub.f32 1.0, %v2407
        %2420 = vrot.lane.b32.xlu0 %v2417, 96
        %v2421 = vpop.permute.xlu0 %2420
        %v2423 = vmul.f32 %v2418, %v2421
        %v2424 = vrot.slane %v2215, 6
        %v2426 = vmul.f32 %v2407, %v2424
        %v2427 = vadd.f32 %v2423, %v2426
        %2429 = vrot.lane.b32.xlu0 %v2427, 96
        %v2430 = vpop.permute.xlu0 %2429
        %v2433 = vrot.slane %v2322, 2
        %v2435 = vsel %vm856, %v2430, %v2433
        %v2437 = vrot.slane %v2435, 6
        %v2438 = vsel %vm965, %v2437, 0
        %2440 = vmatprep.subr.mxu0 0.0
        %2441 = vmatpush1.msra.mxu0 0.0
        %2442 = vmatprep.subr.mxu0 0.0
        %2443 = vmatpush1.msra.mxu0 0.0
        %2444 = vmatprep.subr.mxu0 0.0
        %2445 = vmatpush1.msra.mxu0 0.0
        %2446 = vmatprep.subr.mxu0 0.0
        %2447 = vmatpush1.msra.mxu0 0.0
        %2448 = vmatprep.subr.mxu0 0.0
        %2449 = vmatpush1.msra.mxu0 0.0
        %2450 = vmatprep.subr.mxu0 0.0
        %2451 = vmatpush1.msra.mxu0 0.0
        %2452 = vmatprep.subr.mxu0 0.0
        %2453 = vmatpush1.msra.mxu0 0.0
        %2454 = vmatprep.subr.mxu0 0.0
        %2455 = vmatpush1.msra.mxu0 0.0
        %2456 = vmatprep.subr.mxu0 0.0
        %2457 = vmatpush1.msra.mxu0 %v850
        %2458 = vmatprep.subr.mxu0 0.0
        %2459 = vmatpush1.msra.mxu0 %v849
        %2460 = vmatprep.subr.mxu0 0.0
        %2461 = vmatpush1.msra.mxu0 %v848
        %2462 = vmatprep.subr.mxu0 0.0
        %2463 = vmatpush1.msra.mxu0 %v847
        %2464 = vmatprep.subr.mxu0 0.0
        %2465 = vmatpush1.msra.mxu0 %v846
        %2466 = vmatprep.subr.mxu0 0.0
        %2467 = vmatpush1.msra.mxu0 %v845
        %2468 = vmatprep.subr.mxu0 0.0
        %2469 = vmatpush1.msra.mxu0 %v844
        %2470 = vmatprep.subr.mxu0 0.0
        %2471 = vmatpush1.msra.mxu0 %v843
        %2472 = vmatprep.subr.mxu0 0.0
        %2473 = vmatpush2.msra.mxu0 0.0
        %2474 = vmatprep.subr.mxu0 0.0
        %2475 = vmatpush2.msra.mxu0 0.0
        %2476 = vmatprep.subr.mxu0 0.0
        %2477 = vmatpush2.msra.mxu0 0.0
        %2478 = vmatprep.subr.mxu0 0.0
        %2479 = vmatpush2.msra.mxu0 0.0
        %2480 = vmatprep.subr.mxu0 0.0
        %2481 = vmatpush2.msra.mxu0 0.0
        %2482 = vmatprep.subr.mxu0 0.0
        %2483 = vmatpush2.msra.mxu0 0.0
        %2484 = vmatprep.subr.mxu0 0.0
        %2485 = vmatpush2.msra.mxu0 0.0
        %2486 = vmatprep.subr.mxu0 0.0
        %2487 = vmatpush2.msra.mxu0 0.0
        %2488 = vmatprep.subr.mxu0 0.0
        %2489 = vmatpush2.msra.mxu0 0.0
        %2490 = vmatprep.subr.mxu0 0.0
        %2491 = vmatpush2.msra.mxu0 0.0
        %2492 = vmatprep.subr.mxu0 0.0
        %2493 = vmatpush2.msra.mxu0 0.0
        %2494 = vmatprep.subr.mxu0 0.0
        %2495 = vmatpush2.msra.mxu0 0.0
        %2496 = vmatprep.subr.mxu0 0.0
        %2497 = vmatpush2.msra.mxu0 0.0
        %2498 = vmatprep.subr.mxu0 0.0
        %2499 = vmatpush2.msra.mxu0 0.0
        %2500 = vmatprep.subr.mxu0 0.0
        %2501 = vmatpush2.msra.mxu0 0.0
        %2502 = vmatprep.subr.mxu0 0.0
        %2503 = vmatpush2.msra.mxu0 0.0
        %2504 = vmatprep.mubr.f32.mxu0 0.0
        %2505 = vmatmul.mubr.f32.gmra.mxu0 %v2438
        %v2506 = vpop.f32.mrf.mxu0
        %v2507 = vadd.f32 %v964, %v2506
        %v2508 = vpop.f32.mrf.mxu0
        %2509 = vdwg.mxu0
        %v2510 = vxor.u32 %v2507, 2147483648
        %v2511 = vmul.f32 %v2510, 1.442695
        %v2512 = vpow.pop %v2511
        %v2513 = vadd.f32 %v2512, 1.0
        %v2514 = vrcp.pop %v2513
        %v2515 = vmul.f32 1.0, %v2514
        %2517 = vrot.lane.b32.xlu0 %v2507, 32
        %v2518 = vpop.permute.xlu0 %2517
        %v2520 = vmul.f32 %v2515, %v2518
        %2522 = vrot.lane.b32.xlu0 %v2520, 64
        %v2523 = vpop.permute.xlu0 %2522
        %v2525 = vadd.f32 %v2507, %v2523
        %v2526 = vtanh.pop %v2525
        %v2527 = vsub.f32 1.0, %v2515
        %2529 = vrot.lane.b32.xlu0 %v2526, 96
        %v2530 = vpop.permute.xlu0 %2529
        %v2532 = vmul.f32 %v2527, %v2530
        %v2533 = vmul.f32 %v2515, %v2322
        %v2534 = vadd.f32 %v2532, %v2533
        %v2535 = vrot.slane %v1272, 6
        %v2537 = vrot.slane %v1484, 4
        %v2540 = vrot.slane %v1696, 2
        %v2542 = vrot.slane %v2110, 6
        %v2544 = vrot.slane %v2322, 4
        %v2547 = vrot.slane %v2534, 2
        %vm2549 = vcmask 1041408
        %v2550 = vsel %vm2549, %v1063, %v2535
        %vm2551 = vcmask 1043456
        %v2552 = vsel %vm2551, %v2550, %v2537
        %vm2553 = vcmask 1045504
        %v2554 = vsel %vm2553, %v2552, %v2540
        %v2555 = vsel %vm2549, %v1901, %v2542
        %v2556 = vsel %vm2551, %v2555, %v2544
        %v2557 = vsel %vm2553, %v2556, %v2547
        %v2558 = vld [vmem:[#allocation6 + $0x70] sm:$0xff]
        %v2559 = vld [vmem:[#allocation6 + $0x78] sm:$0xff]
        %v2560 = vld [vmem:[#allocation6 + $0x80] sm:$0xff]
        %v2561 = vld [vmem:[#allocation6 + $0x88] sm:$0xff]
        %v2562 = vld [vmem:[#allocation6 + $0x90] sm:$0x1]
        %v2563 = vlaneseq
        %v2564 = vshrl.u32 %v2563, 7
        %v2565 = vsub.s32 0, %v2564
        %v2566 = vrot.slane %v2562, %v2565
        %2569 = vrot.lane.b32.xlu0 %v2554, 96
        %v2570 = vpop.permute.xlu0 %2569
        %2571 = vrot.lane.b32.xlu0 %v2557, 96
        %v2572 = vpop.permute.xlu0 %2571
        %v2573 = vsel %vm856, %v2570, 0
        %v2575 = vsel %vm856, %v2572, 0
        %2577 = vmatprep.subr.mxu0 0.0
        %2578 = vmatpush1.msra.mxu0 0.0
        %2579 = vmatprep.subr.mxu0 0.0
        %2580 = vmatpush1.msra.mxu0 0.0
        %2581 = vmatprep.subr.mxu0 0.0
        %2582 = vmatpush1.msra.mxu0 0.0
        %2583 = vmatprep.subr.mxu0 0.0
        %2584 = vmatpush1.msra.mxu0 0.0
        %2585 = vmatprep.subr.mxu0 0.0
        %2586 = vmatpush1.msra.mxu0 0.0
        %2587 = vmatprep.subr.mxu0 0.0
        %2588 = vmatpush1.msra.mxu0 0.0
        %2589 = vmatprep.subr.mxu0 0.0
        %2590 = vmatpush1.msra.mxu0 0.0
        %2591 = vmatprep.subr.mxu0 0.0
        %2592 = vmatpush1.msra.mxu0 0.0
        %2593 = vmatprep.subr.mxu0 0.0
        %2594 = vmatpush1.msra.mxu0 0.0
        %2595 = vmatprep.subr.mxu0 0.0
        %2596 = vmatpush1.msra.mxu0 0.0
        %2597 = vmatprep.subr.mxu0 0.0
        %2598 = vmatpush1.msra.mxu0 0.0
        %2599 = vmatprep.subr.mxu0 0.0
        %2600 = vmatpush1.msra.mxu0 0.0
        %2601 = vmatprep.subr.mxu0 0.0
        %2602 = vmatpush1.msra.mxu0 %v2561
        %2603 = vmatprep.subr.mxu0 0.0
        %2604 = vmatpush1.msra.mxu0 %v2560
        %2605 = vmatprep.subr.mxu0 0.0
        %2606 = vmatpush1.msra.mxu0 %v2559
        %2607 = vmatprep.subr.mxu0 0.0
        %2608 = vmatpush1.msra.mxu0 %v2558
        %2609 = vmatprep.subr.mxu0 0.0
        %2610 = vmatpush2.msra.mxu0 0.0
        %2611 = vmatprep.subr.mxu0 0.0
        %2612 = vmatpush2.msra.mxu0 0.0
        %2613 = vmatprep.subr.mxu0 0.0
        %2614 = vmatpush2.msra.mxu0 0.0
        %2615 = vmatprep.subr.mxu0 0.0
        %2616 = vmatpush2.msra.mxu0 0.0
        %2617 = vmatprep.subr.mxu0 0.0
        %2618 = vmatpush2.msra.mxu0 0.0
        %2619 = vmatprep.subr.mxu0 0.0
        %2620 = vmatpush2.msra.mxu0 0.0
        %2621 = vmatprep.subr.mxu0 0.0
        %2622 = vmatpush2.msra.mxu0 0.0
        %2623 = vmatprep.subr.mxu0 0.0
        %2624 = vmatpush2.msra.mxu0 0.0
        %2625 = vmatprep.subr.mxu0 0.0
        %2626 = vmatpush2.msra.mxu0 0.0
        %2627 = vmatprep.subr.mxu0 0.0
        %2628 = vmatpush2.msra.mxu0 0.0
        %2629 = vmatprep.subr.mxu0 0.0
        %2630 = vmatpush2.msra.mxu0 0.0
        %2631 = vmatprep.subr.mxu0 0.0
        %2632 = vmatpush2.msra.mxu0 0.0
        %2633 = vmatprep.subr.mxu0 0.0
        %2634 = vmatpush2.msra.mxu0 0.0
        %2635 = vmatprep.subr.mxu0 0.0
        %2636 = vmatpush2.msra.mxu0 0.0
        %2637 = vmatprep.subr.mxu0 0.0
        %2638 = vmatpush2.msra.mxu0 0.0
        %2639 = vmatprep.subr.mxu0 0.0
        %2640 = vmatpush2.msra.mxu0 0.0
        %2641 = vmatprep.mubr.f32.mxu0 0.0
        %2642 = vmatmul.mubr.f32.gmra.mxu0 %v2573
        %v2643 = vpop.f32.mrf.mxu0
        %v2644 = vadd.f32 %v2566, %v2643
        %v2645 = vpop.f32.mrf.mxu0
        %2646 = vmatprep.mubr.f32.mxu0 0.0
        %2647 = vmatmul.mubr.f32.gmra.mxu0 %v2575
        %v2648 = vpop.f32.mrf.mxu0
        %v2649 = vadd.f32 %v2566, %v2648
        %v2650 = vpop.f32.mrf.mxu0
        %2651 = vdwg.mxu0
        %v2652 = vtanh.pop %v2644
        %v2653 = vtanh.pop %v2649
        %v2654 = vld [vmem:[#allocation6 + $0x98] sm:$0xff]
        %v2655 = vld [vmem:[#allocation6 + $0xa0] sm:$0xff]
        %v2656 = vld [vmem:[#allocation6 + $0xa8] sm:$0xff]
        %v2657 = vld [vmem:[#allocation6 + $0xb0] sm:$0xff]
        %v2658 = vld [vmem:[#allocation6 + $0xb8] sm:$0xff]
        %v2659 = vld [vmem:[#allocation6 + $0xc0] sm:$0xff]
        %v2660 = vld [vmem:[#allocation6 + $0xc8] sm:$0xff]
        %v2661 = vld [vmem:[#allocation6 + $0xd0] sm:$0xff]
        %v2662 = vld [vmem:[#allocation6 + $0xd8] sm:$0xff]
        %v2663 = vld [vmem:[#allocation6 + $0xe0] sm:$0xff]
        %v2664 = vld [vmem:[#allocation6 + $0xe8] sm:$0xff]
        %v2665 = vld [vmem:[#allocation6 + $0xf0] sm:$0xff]
        %v2666 = vld [vmem:[#allocation6 + $0xf8] sm:$0xff]
        %v2667 = vld [vmem:[#allocation6 + $0x100] sm:$0xff]
        %v2668 = vld [vmem:[#allocation6 + $0x108] sm:$0xff]
        %v2669 = vld [vmem:[#allocation6 + $0x110] sm:$0xff]
        %v2670 = vld [vmem:[#allocation6 + $0x118] sm:$0x1]
        %v2671 = vlaneseq
        %v2672 = vshrl.u32 %v2671, 7
        %v2673 = vsub.s32 0, %v2672
        %v2674 = vrot.slane %v2670, %v2673
        %2675 = vmatprep.subr.mxu0 0.0
        %2676 = vmatpush1.msra.mxu0 %v2669
        %2677 = vmatprep.subr.mxu0 0.0
        %2678 = vmatpush1.msra.mxu0 %v2668
        %2679 = vmatprep.subr.mxu0 0.0
        %2680 = vmatpush1.msra.mxu0 %v2667
        %2681 = vmatprep.subr.mxu0 0.0
        %2682 = vmatpush1.msra.mxu0 %v2666
        %2683 = vmatprep.subr.mxu0 0.0
        %2684 = vmatpush1.msra.mxu0 %v2665
        %2685 = vmatprep.subr.mxu0 0.0
        %2686 = vmatpush1.msra.mxu0 %v2664
        %2687 = vmatprep.subr.mxu0 0.0
        %2688 = vmatpush1.msra.mxu0 %v2663
        %2689 = vmatprep.subr.mxu0 0.0
        %2690 = vmatpush1.msra.mxu0 %v2662
        %2691 = vmatprep.subr.mxu0 0.0
        %2692 = vmatpush1.msra.mxu0 %v2661
        %2693 = vmatprep.subr.mxu0 0.0
        %2694 = vmatpush1.msra.mxu0 %v2660
        %2695 = vmatprep.subr.mxu0 0.0
        %2696 = vmatpush1.msra.mxu0 %v2659
        %2697 = vmatprep.subr.mxu0 0.0
        %2698 = vmatpush1.msra.mxu0 %v2658
        %2699 = vmatprep.subr.mxu0 0.0
        %2700 = vmatpush1.msra.mxu0 %v2657
        %2701 = vmatprep.subr.mxu0 0.0
        %2702 = vmatpush1.msra.mxu0 %v2656
        %2703 = vmatprep.subr.mxu0 0.0
        %2704 = vmatpush1.msra.mxu0 %v2655
        %2705 = vmatprep.subr.mxu0 0.0
        %2706 = vmatpush1.msra.mxu0 %v2654
        %2707 = vmatprep.subr.mxu0 0.0
        %2708 = vmatpush2.msra.mxu0 0.0
        %2709 = vmatprep.subr.mxu0 0.0
        %2710 = vmatpush2.msra.mxu0 0.0
        %2711 = vmatprep.subr.mxu0 0.0
        %2712 = vmatpush2.msra.mxu0 0.0
        %2713 = vmatprep.subr.mxu0 0.0
        %2714 = vmatpush2.msra.mxu0 0.0
        %2715 = vmatprep.subr.mxu0 0.0
        %2716 = vmatpush2.msra.mxu0 0.0
        %2717 = vmatprep.subr.mxu0 0.0
        %2718 = vmatpush2.msra.mxu0 0.0
        %2719 = vmatprep.subr.mxu0 0.0
        %2720 = vmatpush2.msra.mxu0 0.0
        %2721 = vmatprep.subr.mxu0 0.0
        %2722 = vmatpush2.msra.mxu0 0.0
        %2723 = vmatprep.subr.mxu0 0.0
        %2724 = vmatpush2.msra.mxu0 0.0
        %2725 = vmatprep.subr.mxu0 0.0
        %2726 = vmatpush2.msra.mxu0 0.0
        %2727 = vmatprep.subr.mxu0 0.0
        %2728 = vmatpush2.msra.mxu0 0.0
        %2729 = vmatprep.subr.mxu0 0.0
        %2730 = vmatpush2.msra.mxu0 0.0
        %2731 = vmatprep.subr.mxu0 0.0
        %2732 = vmatpush2.msra.mxu0 0.0
        %2733 = vmatprep.subr.mxu0 0.0
        %2734 = vmatpush2.msra.mxu0 0.0
        %2735 = vmatprep.subr.mxu0 0.0
        %2736 = vmatpush2.msra.mxu0 0.0
        %2737 = vmatprep.subr.mxu0 0.0
        %2738 = vmatpush2.msra.mxu0 0.0
        %2739 = vmatprep.mubr.f32.mxu0 0.0
        %2740 = vmatmul.mubr.f32.gmra.mxu0 %v2652
        %v2741 = vpop.f32.mrf.mxu0
        %v2742 = vadd.f32 %v2674, %v2741
        %v2743 = vpop.f32.mrf.mxu0
        %2744 = vmatprep.mubr.f32.mxu0 0.0
        %2745 = vmatmul.mubr.f32.gmra.mxu0 %v2653
        %v2746 = vpop.f32.mrf.mxu0
        %v2747 = vadd.f32 %v2674, %v2746
        %v2748 = vpop.f32.mrf.mxu0
        %2749 = vdwg.mxu0
        %v2750 = vtanh.pop %v2742
        %v2751 = vtanh.pop %v2747
        %v2752 = vmul.f32 %v2750, 1.442695
        %v2753 = vpow.pop %v2752
        %v2754 = vmul.f32 %v2751, 1.442695
        %v2755 = vpow.pop %v2754
        %2757 = vset.pattern.permute.xlu0 0
        %2758 = vperm.xlu0 %2757, %v2753
        %v2759 = vpop.permute.xlu0 %2758
        %2762 = vset.pattern.permute.xlu0 0
        %2763 = vperm.xlu0 %2762, %v2755
        %v2764 = vpop.permute.xlu0 %2763
        %v2766 = vld [vmem:[#allocation6 + $0x120] sm:$0x3]
        %v2767 = vmul.f32 %v2554, %v2759
        %v2768 = vmul.f32 %v2557, %v2764
        %2771 = vrot.lane.b32.xlu0 %v2767, 96
        %v2772 = vpop.permute.xlu0 %2771
        %2773 = vrot.lane.b32.xlu0 %v2768, 96
        %v2774 = vpop.permute.xlu0 %2773
        %vm2777 = vcmask 130048
        %v2779 = vsel %vm2777, %v2766, 0
        %2781 = vmatprep.subr.mxu0 0.0
        %2782 = vmatpush1.msra.mxu0 0.0
        %2783 = vmatprep.subr.mxu0 0.0
        %2784 = vmatpush1.msra.mxu0 0.0
        %2785 = vmatprep.subr.mxu0 0.0
        %2786 = vmatpush1.msra.mxu0 0.0
        %2787 = vmatprep.subr.mxu0 0.0
        %2788 = vmatpush1.msra.mxu0 0.0
        %2789 = vmatprep.subr.mxu0 0.0
        %2790 = vmatpush1.msra.mxu0 0.0
        %2791 = vmatprep.subr.mxu0 0.0
        %2792 = vmatpush1.msra.mxu0 0.0
        %2793 = vmatprep.subr.mxu0 0.0
        %2794 = vmatpush1.msra.mxu0 0.0
        %2795 = vmatprep.subr.mxu0 0.0
        %2796 = vmatpush1.msra.mxu0 0.0
        %2797 = vmatprep.subr.mxu0 0.0
        %2798 = vmatpush1.msra.mxu0 0.0
        %2799 = vmatprep.subr.mxu0 0.0
        %2800 = vmatpush1.msra.mxu0 0.0
        %2801 = vmatprep.subr.mxu0 0.0
        %2802 = vmatpush1.msra.mxu0 0.0
        %2803 = vmatprep.subr.mxu0 0.0
        %2804 = vmatpush1.msra.mxu0 0.0
        %2805 = vmatprep.subr.mxu0 0.0
        %2806 = vmatpush1.msra.mxu0 0.0
        %2807 = vmatprep.subr.mxu0 0.0
        %2808 = vmatpush1.msra.mxu0 0.0
        %2809 = vmatprep.subr.mxu0 0.0
        %2810 = vmatpush1.msra.mxu0 %v2774
        %2811 = vmatprep.subr.mxu0 0.0
        %2812 = vmatpush1.msra.mxu0 %v2772
        %2813 = vmatprep.subr.mxu0 0.0
        %2814 = vmatpush2.msra.mxu0 0.0
        %2815 = vmatprep.subr.mxu0 0.0
        %2816 = vmatpush2.msra.mxu0 0.0
        %2817 = vmatprep.subr.mxu0 0.0
        %2818 = vmatpush2.msra.mxu0 0.0
        %2819 = vmatprep.subr.mxu0 0.0
        %2820 = vmatpush2.msra.mxu0 0.0
        %2821 = vmatprep.subr.mxu0 0.0
        %2822 = vmatpush2.msra.mxu0 0.0
        %2823 = vmatprep.subr.mxu0 0.0
        %2824 = vmatpush2.msra.mxu0 0.0
        %2825 = vmatprep.subr.mxu0 0.0
        %2826 = vmatpush2.msra.mxu0 0.0
        %2827 = vmatprep.subr.mxu0 0.0
        %2828 = vmatpush2.msra.mxu0 0.0
        %2829 = vmatprep.subr.mxu0 0.0
        %2830 = vmatpush2.msra.mxu0 0.0
        %2831 = vmatprep.subr.mxu0 0.0
        %2832 = vmatpush2.msra.mxu0 0.0
        %2833 = vmatprep.subr.mxu0 0.0
        %2834 = vmatpush2.msra.mxu0 0.0
        %2835 = vmatprep.subr.mxu0 0.0
        %2836 = vmatpush2.msra.mxu0 0.0
        %2837 = vmatprep.subr.mxu0 0.0
        %2838 = vmatpush2.msra.mxu0 0.0
        %2839 = vmatprep.subr.mxu0 0.0
        %2840 = vmatpush2.msra.mxu0 0.0
        %2841 = vmatprep.subr.mxu0 0.0
        %2842 = vmatpush2.msra.mxu0 0.0
        %2843 = vmatprep.subr.mxu0 0.0
        %2844 = vmatpush2.msra.mxu0 0.0
        %2845 = vmatprep.mubr.f32.mxu0 0.0
        %2846 = vmatmul.mubr.f32.gmra.mxu0 %v2779
        %v2847 = vpop.f32.mrf.mxu0
        %v2848 = vadd.f32 0.0, %v2847
        %v2849 = vpop.f32.mrf.mxu0
        %2850 = vdwg.mxu0
        %2851 = vmatprep.subr.mxu0 0.0
        %2852 = vmatpush1.msra.mxu0 0.0
        %2853 = vmatprep.subr.mxu0 0.0
        %2854 = vmatpush1.msra.mxu0 0.0
        %2855 = vmatprep.subr.mxu0 0.0
        %2856 = vmatpush1.msra.mxu0 0.0
        %2857 = vmatprep.subr.mxu0 0.0
        %2858 = vmatpush1.msra.mxu0 0.0
        %2859 = vmatprep.subr.mxu0 0.0
        %2860 = vmatpush1.msra.mxu0 0.0
        %2861 = vmatprep.subr.mxu0 0.0
        %2862 = vmatpush1.msra.mxu0 0.0
        %2863 = vmatprep.subr.mxu0 0.0
        %2864 = vmatpush1.msra.mxu0 0.0
        %2865 = vmatprep.subr.mxu0 0.0
        %2866 = vmatpush1.msra.mxu0 0.0
        %2867 = vmatprep.subr.mxu0 0.0
        %2868 = vmatpush1.msra.mxu0 0.0
        %2869 = vmatprep.subr.mxu0 0.0
        %2870 = vmatpush1.msra.mxu0 0.0
        %2871 = vmatprep.subr.mxu0 0.0
        %2872 = vmatpush1.msra.mxu0 0.0
        %2873 = vmatprep.subr.mxu0 0.0
        %2874 = vmatpush1.msra.mxu0 0.0
        %2875 = vmatprep.subr.mxu0 0.0
        %2876 = vmatpush1.msra.mxu0 0.0
        %2877 = vmatprep.subr.mxu0 0.0
        %2878 = vmatpush1.msra.mxu0 0.0
        %2879 = vmatprep.subr.mxu0 0.0
        %2880 = vmatpush1.msra.mxu0 %v2764
        %2881 = vmatprep.subr.mxu0 0.0
        %2882 = vmatpush1.msra.mxu0 %v2759
        %2883 = vmatprep.subr.mxu0 0.0
        %2884 = vmatpush2.msra.mxu0 0.0
        %2885 = vmatprep.subr.mxu0 0.0
        %2886 = vmatpush2.msra.mxu0 0.0
        %2887 = vmatprep.subr.mxu0 0.0
        %2888 = vmatpush2.msra.mxu0 0.0
        %2889 = vmatprep.subr.mxu0 0.0
        %2890 = vmatpush2.msra.mxu0 0.0
        %2891 = vmatprep.subr.mxu0 0.0
        %2892 = vmatpush2.msra.mxu0 0.0
        %2893 = vmatprep.subr.mxu0 0.0
        %2894 = vmatpush2.msra.mxu0 0.0
        %2895 = vmatprep.subr.mxu0 0.0
        %2896 = vmatpush2.msra.mxu0 0.0
        %2897 = vmatprep.subr.mxu0 0.0
        %2898 = vmatpush2.msra.mxu0 0.0
        %2899 = vmatprep.subr.mxu0 0.0
        %2900 = vmatpush2.msra.mxu0 0.0
        %2901 = vmatprep.subr.mxu0 0.0
        %2902 = vmatpush2.msra.mxu0 0.0
        %2903 = vmatprep.subr.mxu0 0.0
        %2904 = vmatpush2.msra.mxu0 0.0
        %2905 = vmatprep.subr.mxu0 0.0
        %2906 = vmatpush2.msra.mxu0 0.0
        %2907 = vmatprep.subr.mxu0 0.0
        %2908 = vmatpush2.msra.mxu0 0.0
        %2909 = vmatprep.subr.mxu0 0.0
        %2910 = vmatpush2.msra.mxu0 0.0
        %2911 = vmatprep.subr.mxu0 0.0
        %2912 = vmatpush2.msra.mxu0 0.0
        %2913 = vmatprep.subr.mxu0 0.0
        %2914 = vmatpush2.msra.mxu0 0.0
        %2915 = vmatprep.mubr.f32.mxu0 0.0
        %2916 = vmatmul.mubr.f32.gmra.mxu0 %v2779
        %v2917 = vpop.f32.mrf.mxu0
        %v2918 = vadd.f32 0.0, %v2917
        %v2919 = vpop.f32.mrf.mxu0
        %2920 = vdwg.mxu0
        %v2921 = vrcp.pop %v2918
        %v2922 = vmul.f32 %v2848, %v2921
        %v2923 = vld [vmem:[#allocation6 + $0x128] sm:$0xff]
        %v2924 = vld [vmem:[#allocation6 + $0x130] sm:$0xff]
        %v2925 = vld [vmem:[#allocation6 + $0x138] sm:$0xff]
        %v2926 = vld [vmem:[#allocation6 + $0x140] sm:$0xff]
        %v2927 = vld [vmem:[#allocation6 + $0x148] sm:$0x1]
        %v2928 = vlaneseq
        %v2929 = vshrl.u32 %v2928, 7
        %v2930 = vsub.s32 0, %v2929
        %v2931 = vrot.slane %v2927, %v2930
        %v2933 = vsel %vm856, %v2922, 0
        %2935 = vmatprep.subr.mxu0 0.0
        %2936 = vmatpush1.msra.mxu0 0.0
        %2937 = vmatprep.subr.mxu0 0.0
        %2938 = vmatpush1.msra.mxu0 0.0
        %2939 = vmatprep.subr.mxu0 0.0
        %2940 = vmatpush1.msra.mxu0 0.0
        %2941 = vmatprep.subr.mxu0 0.0
        %2942 = vmatpush1.msra.mxu0 0.0
        %2943 = vmatprep.subr.mxu0 0.0
        %2944 = vmatpush1.msra.mxu0 0.0
        %2945 = vmatprep.subr.mxu0 0.0
        %2946 = vmatpush1.msra.mxu0 0.0
        %2947 = vmatprep.subr.mxu0 0.0
        %2948 = vmatpush1.msra.mxu0 0.0
        %2949 = vmatprep.subr.mxu0 0.0
        %2950 = vmatpush1.msra.mxu0 0.0
        %2951 = vmatprep.subr.mxu0 0.0
        %2952 = vmatpush1.msra.mxu0 0.0
        %2953 = vmatprep.subr.mxu0 0.0
        %2954 = vmatpush1.msra.mxu0 0.0
        %2955 = vmatprep.subr.mxu0 0.0
        %2956 = vmatpush1.msra.mxu0 0.0
        %2957 = vmatprep.subr.mxu0 0.0
        %2958 = vmatpush1.msra.mxu0 0.0
        %2959 = vmatprep.subr.mxu0 0.0
        %2960 = vmatpush1.msra.mxu0 %v2926
        %2961 = vmatprep.subr.mxu0 0.0
        %2962 = vmatpush1.msra.mxu0 %v2925
        %2963 = vmatprep.subr.mxu0 0.0
        %2964 = vmatpush1.msra.mxu0 %v2924
        %2965 = vmatprep.subr.mxu0 0.0
        %2966 = vmatpush1.msra.mxu0 %v2923
        %2967 = vmatprep.subr.mxu0 0.0
        %2968 = vmatpush2.msra.mxu0 0.0
        %2969 = vmatprep.subr.mxu0 0.0
        %2970 = vmatpush2.msra.mxu0 0.0
        %2971 = vmatprep.subr.mxu0 0.0
        %2972 = vmatpush2.msra.mxu0 0.0
        %2973 = vmatprep.subr.mxu0 0.0
        %2974 = vmatpush2.msra.mxu0 0.0
        %2975 = vmatprep.subr.mxu0 0.0
        %2976 = vmatpush2.msra.mxu0 0.0
        %2977 = vmatprep.subr.mxu0 0.0
        %2978 = vmatpush2.msra.mxu0 0.0
        %2979 = vmatprep.subr.mxu0 0.0
        %2980 = vmatpush2.msra.mxu0 0.0
        %2981 = vmatprep.subr.mxu0 0.0
        %2982 = vmatpush2.msra.mxu0 0.0
        %2983 = vmatprep.subr.mxu0 0.0
        %2984 = vmatpush2.msra.mxu0 0.0
        %2985 = vmatprep.subr.mxu0 0.0
        %2986 = vmatpush2.msra.mxu0 0.0
        %2987 = vmatprep.subr.mxu0 0.0
        %2988 = vmatpush2.msra.mxu0 0.0
        %2989 = vmatprep.subr.mxu0 0.0
        %2990 = vmatpush2.msra.mxu0 0.0
        %2991 = vmatprep.subr.mxu0 0.0
        %2992 = vmatpush2.msra.mxu0 0.0
        %2993 = vmatprep.subr.mxu0 0.0
        %2994 = vmatpush2.msra.mxu0 0.0
        %2995 = vmatprep.subr.mxu0 0.0
        %2996 = vmatpush2.msra.mxu0 0.0
        %2997 = vmatprep.subr.mxu0 0.0
        %2998 = vmatpush2.msra.mxu0 0.0
        %2999 = vmatprep.mubr.f32.mxu0 0.0
        %3000 = vmatmul.mubr.f32.gmra.mxu0 %v2933
        %v3001 = vpop.f32.mrf.mxu0
        %v3002 = vadd.f32 %v2931, %v3001
        %v3003 = vpop.f32.mrf.mxu0
        %3004 = vdwg.mxu0
        %3005 = vst [vmem:[%s217] sm:$0x3] %v3002
        %p3006 = scmp.lt.s32.totalorder %s18, 1
        %s3007 = scalar_select %p3006, %s18, 1
        %s3008 = smul.addr %s3007, 2
        %s3009 = scalar_lea.vmem %s3, %s3008
        // Predicated region
        $region45: #{attnsense_forward.1} parent=31 // pred_check
          %p3010 = pneg %p104
        $region46: #{attnsense_forward.1} parent=31 // pred_check_branch
          %3012 = sbr.rel (%p3010) target = $region48
        $region47: #{attnsense_forward.1} parent=31 // pred_region
          _
        $region48: #{attnsense_forward.1} parent=31 // pred_fallthru
          _
      $region32: #{attnsense_forward.1} parent=5 // pred_fallthru
        _
      %p3013 = scmp.le.s32.totalorder 2, %s13
      // Predicated region
      $region49: #{attnsense_forward.1} parent=5 // pred_check
        %p3014 = pneg %p3013
      $region50: #{attnsense_forward.1} parent=5 // pred_check_branch
        %3016 = sbr.rel (%p3014) target = $region52
      $region51: #{attnsense_forward.1} parent=5 // pred_region
        %s3017 = ssub.s32 %s13, 2
        // Predicated region
        $region53: #{attnsense_forward.1} parent=51 // pred_check
          %p3018 = pneg %p110
        $region54: #{attnsense_forward.1} parent=51 // pred_check_branch
          %3020 = sbr.rel (%p3018) target = $region56
        $region55: #{attnsense_forward.1} parent=51 // pred_region
          %p3021 = scmp.lt.s32.totalorder %s19, 1
          %s3022 = scalar_select %p3021, %s19, 1
          %s3023 = smul.addr %s3022, 2
          %s3024 = scalar_lea.vmem %s3, %s3023
        $region56: #{attnsense_forward.1} parent=51 // pred_fallthru
          _
      $region52: #{attnsense_forward.1} parent=5 // pred_fallthru
        _
    $region6: #{attnsense_forward.1} parent=1 // loop_footer
      %s17 = sadd.s32 1, %s13
    $region7: #{attnsense_forward.1} parent=1 // loop_footer_branch
      %12 = sbr.rel target = $region3
    $region8: #{attnsense_forward.1} parent=1 // loop_exit
      _
    %3025 = vsyncpa [#allocation3], 1
    %s3026 = scalar_lea.sflag [#allocation3], 1
    %3027 = vsyncpa %s3026, 1
    %3028 = vsyncpa [#allocation5], 1

</llo_original>
